<compile_context>
chip_gen: v7x
topology: tpu7x:2x2x1
jax: 0.10.0
libtpu: 0.0.40
codegen_flags: <defaults>
</compile_context>

<pallas_src>
import math
from functools import partial

import jax
import jax.numpy as jnp
from jax import lax
from jax.experimental import pallas as pl
from jax.experimental.pallas import tpu as pltpu

EPS = 1e-6  # LayerNorm eps (added to std, not variance, as in the reference)


def _layernorm(x, a, b):
    # Reference LayerNorm: mean over last dim, torch.std (unbiased, ddof=1),
    # a * (x - mean) / (std + eps) + b.   a, b broadcast as [1, D].
    d = x.shape[-1]
    mean = jnp.mean(x, axis=-1, keepdims=True)
    var = jnp.sum((x - mean) ** 2, axis=-1, keepdims=True) / (d - 1)
    return a * (x - mean) / (jnp.sqrt(var) + EPS) + b


def _mm(a, b, compute_dtype):
    # MXU matmul with f32 accumulation; optionally cast operands to bf16.
    if compute_dtype is not None:
        a = a.astype(compute_dtype)
        b = b.astype(compute_dtype)
    return jnp.dot(a, b, preferred_element_type=jnp.float32)


def _qkt(q, k, compute_dtype):
    # Contract the last dims directly (q @ k^T without materializing k^T).
    if compute_dtype is not None:
        q = q.astype(compute_dtype)
        k = k.astype(compute_dtype)
    return lax.dot_general(q, k, (((1,), (1,)), ((), ())),
                           preferred_element_type=jnp.float32)


def encoder_kernel(x_ref, mask_ref,
                   ln1a_ref, ln1b_ref, wqkv_ref, bqkv_ref, wo_ref, bo_ref,
                   ln2a_ref, ln2b_ref, w1_ref, b1_ref, w2_ref, b2_ref,
                   fa_ref, fb_ref,
                   o_ref,
                   x_sc, qkv_sc, attn_sc, maskb_sc,
                   *, num_heads, q_tile, compute_dtype, approx_softmax):
    layer = pl.program_id(1)
    n_layers = pl.num_programs(1)

    bt, seq, d_model = x_ref.shape          # static block shape
    dk = d_model // num_heads
    n_tiles = seq // q_tile

    # ---- once per batch block: load x, build additive mask bias ----
    @pl.when(layer == 0)
    def _():
        for b in range(bt):
            x_sc[b * seq:(b + 1) * seq, :] = x_ref[b]
        maskb_sc[...] = jnp.where(mask_ref[...] == 0.0,
                                  jnp.float32(-1e9), jnp.float32(0.0))

    def softmax_rows(s):
        s = s - jnp.max(s, axis=-1, keepdims=True)
        p = jnp.exp(s)
        denom = jnp.sum(p, axis=-1, keepdims=True)
        if approx_softmax:
            # EUP reciprocal (not bit-exact vs the PyTorch reference).
            return p * pl.reciprocal(denom, approx=True)
        return p / denom

    def head_attn(qh, kh, vh, maskb):
        s = _qkt(qh, kh, compute_dtype) + maskb          # [q_tile, seq]
        p = softmax_rows(s)
        return _mm(p, vh, compute_dtype)                 # [q_tile, dk]

    # Static loop over the bt sequences sharing this grid step's weight DMAs.
    for b in range(bt):
        row0 = b * seq
        maskb = maskb_sc[b]                               # (1, seq) bias

        # ---- sublayer 0 / pass 1: pre-norm + fused QKV projection ----
        # (K/V for the whole sequence computed once per layer, kept in scratch)
        def qkv_body(t, carry):
            r = pl.multiple_of(t * q_tile, q_tile)
            xt = x_sc[pl.ds(row0 + r, q_tile), :]
            xnt = _layernorm(xt, ln1a_ref[0], ln1b_ref[0])
            qkv_sc[pl.ds(r, q_tile), :] = (
                _mm(xnt, wqkv_ref[0], compute_dtype) + bqkv_ref[0])
            return carry
        lax.fori_loop(0, n_tiles, qkv_body, 0)

        # ---- sublayer 0 / pass 2: per-query-tile attention + residual ----
        def attn_body(t, carry):
            r = pl.multiple_of(t * q_tile, q_tile)
            if dk % 128 == 0:
                # Lane-aligned dynamic head slices: a fori_loop bounds live
                # ranges to a single head's [q_tile, seq] block.
                def head_body(h, hc):
                    c = pl.multiple_of(h * dk, dk)
                    attn_sc[:, pl.ds(c, dk)] = head_attn(
                        qkv_sc[pl.ds(r, q_tile), pl.ds(c, dk)],
                        qkv_sc[:, pl.ds(d_model + c, dk)],
                        qkv_sc[:, pl.ds(2 * d_model + c, dk)],
                        maskb)
                    return hc
                lax.fori_loop(0, num_heads, head_body, 0)
            else:
                # dk < 128: dynamic lane-dim offsets are not reliably lowered,
                # so unroll statically.  Each head is ref-load -> compute ->
                # ref-store, so only one head's block is live at a time.
                # TODO(synk): process 128//dk heads per iteration (lane-dense
                # attn_sc stores) via a batched per-head-group contraction.
                for h in range(num_heads):
                    c = h * dk
                    attn_sc[:, pl.ds(c, dk)] = head_attn(
                        qkv_sc[pl.ds(r, q_tile), pl.ds(c, dk)],
                        qkv_sc[:, pl.ds(d_model + c, dk)],
                        qkv_sc[:, pl.ds(2 * d_model + c, dk)],
                        maskb)
            attn = _mm(attn_sc[...], wo_ref[0], compute_dtype) + bo_ref[0]
            x_sc[pl.ds(row0 + r, q_tile), :] = (
                x_sc[pl.ds(row0 + r, q_tile), :] + attn)   # dropout == identity
            return carry
        lax.fori_loop(0, n_tiles, attn_body, 0)

        # ---- sublayer 1: per-row-tile FFN + residual (+ fused final norm) ----
        def ffn_body(t, carry):
            r = pl.multiple_of(t * q_tile, q_tile)
            x1 = x_sc[pl.ds(row0 + r, q_tile), :]
            xn2 = _layernorm(x1, ln2a_ref[0], ln2b_ref[0])
            hid = jnp.maximum(_mm(xn2, w1_ref[0], compute_dtype) + b1_ref[0], 0.0)
            x2 = x1 + _mm(hid, w2_ref[0], compute_dtype) + b2_ref[0]
            x_sc[pl.ds(row0 + r, q_tile), :] = x2          # carry to next layer

            # Final LayerNorm fused into the last layer; the output block index
            # is constant over the layer axis so only this write hits HBM.
            @pl.when(layer == n_layers - 1)
            def _():
                o_ref[b, pl.ds(r, q_tile), :] = _layernorm(
                    x2, fa_ref[...], fb_ref[...])
            return carry
        lax.fori_loop(0, n_tiles, ffn_body, 0)


def _largest_divisor_leq(n, target):
    t = max(1, min(target, n))
    while n % t:
        t -= 1
    return t


def encoder_forward(x, mask, stacked, final_a, final_b, num_heads, *,
                    q_tile=256, batch_tile=4, compute_dtype=None,
                    approx_softmax=False, weight_buffers=None,
                    vmem_limit_bytes=48 * 1024 * 1024):
    """Encoder.forward: N encoder layers + final LayerNorm in one pallas_call.

    q_tile       : rows per in-kernel tile (bounds [tile,S] / [tile,d_ff] temps).
    batch_tile   : sequences per grid step (weight-DMA reuse; helps v5e/v6e).
    compute_dtype: None (exact f32) or jnp.bfloat16 for MXU/DMA speed.
    weight_buffers: e.g. 3 to deepen buffering of the big weight streams (v6e).
    vmem_limit_bytes: 48 MiB is v7x-safe; raise to ~96-112 MiB on 128-MiB chips.
    """
    B, S, D = x.shape
    n_layers = stacked["wqkv"].shape[0]
    d_ff = stacked["w1"].shape[-1]
    assert D % num_heads == 0, "d_model must be divisible by num_heads"
    assert mask.shape == (B, 1, S)

    tq = _largest_divisor_leq(S, q_tile)
    bt = _largest_divisor_leq(B, batch_tile)

    def xmap(b, l):   # activations / mask / output: per batch block, layer-resident
        return (b, 0, 0)

    def lmap(b, l):   # stacked per-layer weights: streamed along the layer axis
        return (l, 0, 0)

    def cmap(b, l):   # final-norm constants
        return (0, 0)

    def wspec(shape):
        if weight_buffers is None:
            return pl.BlockSpec(shape, lmap)
        return pl.BlockSpec(shape, lmap, pipeline_mode=pl.Buffered(weight_buffers))

    in_specs = [
        pl.BlockSpec((bt, S, D), xmap),          # x
        pl.BlockSpec((bt, 1, S), xmap),          # mask
        pl.BlockSpec((1, 1, D), lmap),           # ln1_a
        pl.BlockSpec((1, 1, D), lmap),           # ln1_b
        wspec((1, D, 3 * D)),                    # wqkv (fused q|k|v, scale folded)
        pl.BlockSpec((1, 1, 3 * D), lmap),       # bqkv
        wspec((1, D, D)),                        # wo
        pl.BlockSpec((1, 1, D), lmap),           # bo
        pl.BlockSpec((1, 1, D), lmap),           # ln2_a
        pl.BlockSpec((1, 1, D), lmap),           # ln2_b
        wspec((1, D, d_ff)),                     # w1
        pl.BlockSpec((1, 1, d_ff), lmap),        # b1
        wspec((1, d_ff, D)),                     # w2
        pl.BlockSpec((1, 1, D), lmap),           # b2
        pl.BlockSpec((1, D), cmap),              # final norm a
        pl.BlockSpec((1, D), cmap),              # final norm b
    ]

    grid_spec = pltpu.PrefetchScalarGridSpec(
        num_scalar_prefetch=0,
        grid=(B // bt, n_layers),                # layer axis last (carried state)
        in_specs=in_specs,
        out_specs=pl.BlockSpec((bt, S, D), xmap),
        scratch_shapes=[
            pltpu.VMEM((bt * S, D), jnp.float32),   # running x (layer-resident)
            pltpu.VMEM((S, 3 * D), jnp.float32),    # per-sequence fused QKV
            pltpu.VMEM((tq, D), jnp.float32),       # per-tile head-output slab
            pltpu.VMEM((bt, 1, S), jnp.float32),    # cached additive mask bias
        ],
    )

    kernel = partial(encoder_kernel, num_heads=num_heads, q_tile=tq,
                     compute_dtype=compute_dtype, approx_softmax=approx_softmax)

    # TODO(synk): for small-batch inference on v7x (2 TCs), split the row-tile
    # work across cores via core_map; with batch as the only "parallel" axis a
    # single sequence uses one TensorCore.
    return pl.pallas_call(
        kernel,
        out_shape=jax.ShapeDtypeStruct((B, S, D), jnp.float32),
        grid_spec=grid_spec,
        compiler_params=pltpu.CompilerParams(
            dimension_semantics=("parallel", "arbitrary"),
            vmem_limit_bytes=vmem_limit_bytes,
        ),
    )(x, mask,
      stacked["ln1_a"], stacked["ln1_b"],
      stacked["wqkv"], stacked["bqkv"],
      stacked["wo"], stacked["bo"],
      stacked["ln2_a"], stacked["ln2_b"],
      stacked["w1"], stacked["b1"],
      stacked["w2"], stacked["b2"],
      final_a, final_b)


def init_stacked_params(key, n_layers, d_model, d_ff, num_heads,
                        weight_dtype=jnp.float32):
    """Per-layer params stacked on a leading N axis.  Q/K/V are fused into one
    [D, 3D] weight, and the 1/sqrt(dk) attention scale is folded into the Q
    block (and its bias) so the kernel never multiplies by it.  Set
    weight_dtype=jnp.bfloat16 together with compute_dtype=jnp.bfloat16 to halve
    weight DMA / VMEM (keeps f32 accumulation)."""
    dk = d_model // num_heads
    q_scale = 1.0 / math.sqrt(dk)

    def w(k, shape):
        return (0.02 * jax.random.normal(k, shape)).astype(jnp.float32)

    layer_keys = jax.random.split(key, n_layers)
    layers = []
    for lk in layer_keys:
        ks = jax.random.split(lk, 6)
        wq = w(ks[0], (d_model, d_model)) * q_scale          # scale folded here
        wk = w(ks[1], (d_model, d_model))
        wv = w(ks[2], (d_model, d_model))
        bq = jnp.zeros((1, d_model), jnp.float32) * q_scale  # (zero, but scaled)
        layers.append({
            "ln1_a": jnp.ones((1, d_model), jnp.float32),
            "ln1_b": jnp.zeros((1, d_model), jnp.float32),
            "wqkv": jnp.concatenate([wq, wk, wv], axis=1),           # [D, 3D]
            "bqkv": jnp.concatenate(
                [bq, jnp.zeros((1, 2 * d_model), jnp.float32)], axis=1),
            "wo": w(ks[3], (d_model, d_model)),
            "bo": jnp.zeros((1, d_model), jnp.float32),
            "ln2_a": jnp.ones((1, d_model), jnp.float32),
            "ln2_b": jnp.zeros((1, d_model), jnp.float32),
            "w1": w(ks[4], (d_model, d_ff)),
            "b1": jnp.zeros((1, d_ff), jnp.float32),
            "w2": w(ks[5], (d_ff, d_model)),
            "b2": jnp.zeros((1, d_model), jnp.float32),
        })
    big = {"wqkv", "wo", "w1", "w2"}
    stacked = {}
    for name in layers[0]:
        arr = jnp.stack([lyr[name] for lyr in layers], axis=0)
        stacked[name] = arr.astype(weight_dtype) if name in big else arr
    return stacked


def encoder_reference(x, mask, stacked, final_a, final_b, num_heads):
    """Pure-JAX reference with identical eval-mode math (dropout = identity)."""
    B, S, D = x.shape
    dk = D // num_heads
    n_layers = stacked["wqkv"].shape[0]
    maskb = jnp.where(mask == 0.0, jnp.float32(-1e9), jnp.float32(0.0))[:, :, None, :]
    with jax.default_matmul_precision("float32"):
        for l in range(n_layers):
            p = {name: arr[l].astype(jnp.float32) for name, arr in stacked.items()}
            xn = _layernorm(x, p["ln1_a"], p["ln1_b"])
            qkv = xn @ p["wqkv"] + p["bqkv"]
            q, k, v = qkv[..., :D], qkv[..., D:2 * D], qkv[..., 2 * D:]
            qh = q.reshape(B, S, num_heads, dk).transpose(0, 2, 1, 3)
            kh = k.reshape(B, S, num_heads, dk).transpose(0, 2, 1, 3)
            vh = v.reshape(B, S, num_heads, dk).transpose(0, 2, 1, 3)
            s = jnp.einsum("bhqd,bhkd->bhqk", qh, kh) + maskb
            attn = jnp.einsum("bhqk,bhkd->bhqd", jax.nn.softmax(s, axis=-1), vh)
            attn = attn.transpose(0, 2, 1, 3).reshape(B, S, D)
            x = x + (attn @ p["wo"] + p["bo"])
            xn2 = _layernorm(x, p["ln2_a"], p["ln2_b"])
            hid = jnp.maximum(xn2 @ p["w1"] + p["b1"], 0.0)
            x = x + (hid @ p["w2"] + p["b2"])
        return _layernorm(x, final_a, final_b)


if __name__ == "__main__":
    B, S, D, H, D_FF, N_LAYERS = 2, 8, 32, 4, 64, 2

    key = jax.random.PRNGKey(0)
    kx, kp = jax.random.split(key)

    x = jax.random.normal(kx, (B, S, D), dtype=jnp.float32)
    # mask: [B, 1, S]; batch 0 fully visible, batch 1 has the last 2 positions padded
    mask = jnp.ones((B, 1, S), jnp.float32)
    mask = mask.at[1, 0, S - 2:].set(0.0)

    stacked = init_stacked_params(kp, N_LAYERS, D, D_FF, num_heads=H)
    final_a = jnp.ones((1, D), jnp.float32)
    final_b = jnp.zeros((1, D), jnp.float32)

    out = encoder_forward(x, mask, stacked, final_a, final_b, num_heads=H)
    jax.block_until_ready(out)

    ref = encoder_reference(x, mask, stacked, final_a, final_b, num_heads=H)
    assert out.shape == (B, S, D)
    assert bool(jnp.all(jnp.isfinite(out)))
    assert bool(jnp.allclose(out, ref, rtol=1e-2, atol=1e-2)), (
        "max |diff| = %e" % float(jnp.max(jnp.abs(out - ref))))
    print("KERNEL_OK")
</pallas_src>

<mosaic_0001>
module attributes {stable_mosaic.version = 11 : i64} {
  func.func @encoder_kernel(%arg0: i32, %arg1: i32, %arg2: memref<2x8x32xf32, #tpu.memory_space<vmem>>, %arg3: memref<2x1x8xf32, #tpu.memory_space<vmem>>, %arg4: memref<1x1x32xf32, #tpu.memory_space<vmem>>, %arg5: memref<1x1x32xf32, #tpu.memory_space<vmem>>, %arg6: memref<1x32x96xf32, #tpu.memory_space<vmem>>, %arg7: memref<1x1x96xf32, #tpu.memory_space<vmem>>, %arg8: memref<1x32x32xf32, #tpu.memory_space<vmem>>, %arg9: memref<1x1x32xf32, #tpu.memory_space<vmem>>, %arg10: memref<1x1x32xf32, #tpu.memory_space<vmem>>, %arg11: memref<1x1x32xf32, #tpu.memory_space<vmem>>, %arg12: memref<1x32x64xf32, #tpu.memory_space<vmem>>, %arg13: memref<1x1x64xf32, #tpu.memory_space<vmem>>, %arg14: memref<1x64x32xf32, #tpu.memory_space<vmem>>, %arg15: memref<1x1x32xf32, #tpu.memory_space<vmem>>, %arg16: memref<1x32xf32, #tpu.memory_space<vmem>>, %arg17: memref<1x32xf32, #tpu.memory_space<vmem>>, %arg18: memref<2x8x32xf32, #tpu.memory_space<vmem>>, %arg19: memref<16x32xf32, #tpu.memory_space<vmem>>, %arg20: memref<8x96xf32, #tpu.memory_space<vmem>>, %arg21: memref<8x32xf32, #tpu.memory_space<vmem>>, %arg22: memref<2x1x8xf32, #tpu.memory_space<vmem>>) attributes {dimension_semantics = [#tpu.dimension_semantics<parallel>, #tpu.dimension_semantics<arbitrary>], iteration_bounds = array<i64: 1, 2>, scalar_prefetch = 0 : i64, scratch_operands = 4 : i64, tpu.core_type = #tpu.core_type<tc>, window_params = [{transform_indices = @transform_0, window_bounds = array<i64: 2, 8, 32>}, {transform_indices = @transform_1, window_bounds = array<i64: 2, 1, 8>}, {transform_indices = @transform_2, window_bounds = array<i64: 1, 1, 32>}, {transform_indices = @transform_3, window_bounds = array<i64: 1, 1, 32>}, {transform_indices = @transform_4, window_bounds = array<i64: 1, 32, 96>}, {transform_indices = @transform_5, window_bounds = array<i64: 1, 1, 96>}, {transform_indices = @transform_6, window_bounds = array<i64: 1, 32, 32>}, {transform_indices = @transform_7, window_bounds = array<i64: 1, 1, 32>}, {transform_indices = @transform_8, window_bounds = array<i64: 1, 1, 32>}, {transform_indices = @transform_9, window_bounds = array<i64: 1, 1, 32>}, {transform_indices = @transform_10, window_bounds = array<i64: 1, 32, 64>}, {transform_indices = @transform_11, window_bounds = array<i64: 1, 1, 64>}, {transform_indices = @transform_12, window_bounds = array<i64: 1, 64, 32>}, {transform_indices = @transform_13, window_bounds = array<i64: 1, 1, 32>}, {pipeline_mode = #tpu.pipeline_mode<synchronous>, transform_indices = @transform_14, window_bounds = array<i64: 1, 32>}, {pipeline_mode = #tpu.pipeline_mode<synchronous>, transform_indices = @transform_15, window_bounds = array<i64: 1, 32>}, {transform_indices = @transform_16, window_bounds = array<i64: 2, 8, 32>}]} {
    %c0_i32 = arith.constant 0 : i32
    %0 = arith.cmpi eq, %arg1, %c0_i32 : i32
    %1 = arith.extui %0 : i1 to i32
    %c0_i32_0 = arith.constant 0 : i32
    %2 = arith.cmpi ne, %1, %c0_i32_0 : i32
    scf.if %2 {
      %c0_229 = arith.constant 0 : index
      %c0_230 = arith.constant 0 : index
      %c0_231 = arith.constant 0 : index
      %373 = vector.load %arg2[%c0_229, %c0_230, %c0_231] : memref<2x8x32xf32, #tpu.memory_space<vmem>>, vector<1x8x32xf32>
      %374 = vector.shape_cast %373 : vector<1x8x32xf32> to vector<8x32xf32>
      %c0_232 = arith.constant 0 : index
      %c0_233 = arith.constant 0 : index
      %375 = vector.load %arg19[%c0_232, %c0_233] : memref<16x32xf32, #tpu.memory_space<vmem>>, vector<8x32xf32>
      tpu.vector_store %arg19[%c0_232, %c0_233], %374 {strides = array<i32>} : memref<16x32xf32, #tpu.memory_space<vmem>>, vector<8x32xf32>,
      %c1_234 = arith.constant 1 : index
      %c0_235 = arith.constant 0 : index
      %c0_236 = arith.constant 0 : index
      %376 = vector.load %arg2[%c1_234, %c0_235, %c0_236] : memref<2x8x32xf32, #tpu.memory_space<vmem>>, vector<1x8x32xf32>
      %377 = vector.shape_cast %376 : vector<1x8x32xf32> to vector<8x32xf32>
      %c8_237 = arith.constant 8 : index
      %c0_238 = arith.constant 0 : index
      %378 = vector.load %arg19[%c8_237, %c0_238] : memref<16x32xf32, #tpu.memory_space<vmem>>, vector<8x32xf32>
      tpu.vector_store %arg19[%c8_237, %c0_238], %377 {strides = array<i32>} : memref<16x32xf32, #tpu.memory_space<vmem>>, vector<8x32xf32>,
      %c0_239 = arith.constant 0 : index
      %c0_240 = arith.constant 0 : index
      %c0_241 = arith.constant 0 : index
      %379 = vector.load %arg3[%c0_239, %c0_240, %c0_241] : memref<2x1x8xf32, #tpu.memory_space<vmem>>, vector<2x1x8xf32>
      %cst_242 = arith.constant 0.000000e+00 : f32
      %380 = vector.broadcast %cst_242 : f32 to vector<2x1x8xf32>
      %381 = arith.cmpf oeq, %379, %380 : vector<2x1x8xf32>
      %cst_243 = arith.constant -1.000000e+09 : f32
      %cst_244 = arith.constant 0.000000e+00 : f32
      %382 = vector.broadcast %cst_243 : f32 to vector<2x1x8xf32>
      %383 = vector.broadcast %cst_244 : f32 to vector<2x1x8xf32>
      %384 = arith.select %381, %382, %383 : vector<2x1x8xi1>, vector<2x1x8xf32>
      %c0_245 = arith.constant 0 : index
      %c0_246 = arith.constant 0 : index
      %c0_247 = arith.constant 0 : index
      %385 = vector.load %arg22[%c0_245, %c0_246, %c0_247] : memref<2x1x8xf32, #tpu.memory_space<vmem>>, vector<2x1x8xf32>
      tpu.vector_store %arg22[%c0_245, %c0_246, %c0_247], %384 {strides = array<i32>} : memref<2x1x8xf32, #tpu.memory_space<vmem>>, vector<2x1x8xf32>,
    } else {
    }
    %c0 = arith.constant 0 : index
    %c0_1 = arith.constant 0 : index
    %c0_2 = arith.constant 0 : index
    %3 = vector.load %arg22[%c0, %c0_1, %c0_2] : memref<2x1x8xf32, #tpu.memory_space<vmem>>, vector<1x1x8xf32>
    %4 = vector.shape_cast %3 : vector<1x1x8xf32> to vector<1x8xf32>
    %c0_i32_3 = arith.constant 0 : i32
    %c8_i32 = arith.constant 8 : i32
    %5 = arith.muli %c0_i32_3, %c8_i32 : i32
    %6 = tpu.assume_multiple %5, 8 : i32
    %c0_i32_4 = arith.constant 0 : i32
    %7 = arith.addi %c0_i32_4, %6 : i32
    %8 = arith.index_cast %7 : i32 to index
    %c0_5 = arith.constant 0 : index
    %9 = vector.load %arg19[%8, %c0_5] : memref<16x32xf32, #tpu.memory_space<vmem>>, vector<8x32xf32>
    %c0_6 = arith.constant 0 : index
    %c0_7 = arith.constant 0 : index
    %c0_8 = arith.constant 0 : index
    %10 = vector.load %arg4[%c0_6, %c0_7, %c0_8] : memref<1x1x32xf32, #tpu.memory_space<vmem>>, vector<1x1x32xf32>
    %11 = vector.shape_cast %10 : vector<1x1x32xf32> to vector<1x32xf32>
    %c0_9 = arith.constant 0 : index
    %c0_10 = arith.constant 0 : index
    %c0_11 = arith.constant 0 : index
    %12 = vector.load %arg5[%c0_9, %c0_10, %c0_11] : memref<1x1x32xf32, #tpu.memory_space<vmem>>, vector<1x1x32xf32>
    %13 = vector.shape_cast %12 : vector<1x1x32xf32> to vector<1x32xf32>
    %cst = arith.constant dense<0.000000e+00> : vector<8xf32>
    %14 = vector.multi_reduction <add>, %9, %cst [1] : vector<8x32xf32> to vector<8xf32>
    %15 = vector.shape_cast %14 : vector<8xf32> to vector<8x1xf32>
    %cst_12 = arith.constant 3.200000e+01 : f32
    %16 = vector.broadcast %cst_12 : f32 to vector<8x1xf32>
    %17 = arith.divf %15, %16 : vector<8x1xf32>
    %18 = vector.broadcast %17 : vector<8x1xf32> to vector<8x32xf32>
    %19 = arith.subf %9, %18 : vector<8x32xf32>
    %20 = arith.mulf %19, %19 : vector<8x32xf32>
    %cst_13 = arith.constant dense<0.000000e+00> : vector<8xf32>
    %21 = vector.multi_reduction <add>, %20, %cst_13 [1] : vector<8x32xf32> to vector<8xf32>
    %22 = vector.shape_cast %21 : vector<8xf32> to vector<8x1xf32>
    %cst_14 = arith.constant 3.100000e+01 : f32
    %23 = vector.broadcast %cst_14 : f32 to vector<8x1xf32>
    %24 = arith.divf %22, %23 : vector<8x1xf32>
    %25 = vector.broadcast %17 : vector<8x1xf32> to vector<8x32xf32>
    %26 = arith.subf %9, %25 : vector<8x32xf32>
    %27 = vector.broadcast %11 : vector<1x32xf32> to vector<8x32xf32>
    %28 = arith.mulf %27, %26 : vector<8x32xf32>
    %29 = math.sqrt %24 : vector<8x1xf32>
    %cst_15 = arith.constant 9.99999997E-7 : f32
    %30 = vector.broadcast %cst_15 : f32 to vector<8x1xf32>
    %31 = arith.addf %29, %30 : vector<8x1xf32>
    %32 = vector.broadcast %31 : vector<8x1xf32> to vector<8x32xf32>
    %33 = arith.divf %28, %32 : vector<8x32xf32>
    %34 = vector.broadcast %13 : vector<1x32xf32> to vector<8x32xf32>
    %35 = arith.addf %33, %34 : vector<8x32xf32>
    %c0_16 = arith.constant 0 : index
    %c0_17 = arith.constant 0 : index
    %c0_18 = arith.constant 0 : index
    %36 = vector.load %arg6[%c0_16, %c0_17, %c0_18] : memref<1x32x96xf32, #tpu.memory_space<vmem>>, vector<1x32x96xf32>
    %37 = vector.shape_cast %36 : vector<1x32x96xf32> to vector<32x96xf32>
    %cst_19 = arith.constant dense<0.000000e+00> : vector<8x96xf32>
    %38 = tpu.matmul %35, %37, %cst_19 {dimension_numbers = #tpu.dot_dimension_numbers<[1], [0], [0], [1], [0, 0, 1, 1], [], []>} : vector<8x32xf32>, vector<32x96xf32>, vector<8x96xf32> -> vector<8x96xf32>
    %c0_20 = arith.constant 0 : index
    %c0_21 = arith.constant 0 : index
    %c0_22 = arith.constant 0 : index
    %39 = vector.load %arg7[%c0_20, %c0_21, %c0_22] : memref<1x1x96xf32, #tpu.memory_space<vmem>>, vector<1x1x96xf32>
    %40 = vector.shape_cast %39 : vector<1x1x96xf32> to vector<1x96xf32>
    %41 = vector.broadcast %40 : vector<1x96xf32> to vector<8x96xf32>
    %42 = arith.addf %38, %41 : vector<8x96xf32>
    %43 = arith.index_cast %6 : i32 to index
    %c0_23 = arith.constant 0 : index
    %44 = vector.load %arg20[%43, %c0_23] : memref<8x96xf32, #tpu.memory_space<vmem>>, vector<8x96xf32>
    tpu.vector_store %arg20[%43, %c0_23], %42 {strides = array<i32>} : memref<8x96xf32, #tpu.memory_space<vmem>>, vector<8x96xf32>,
    %c1_i32 = arith.constant 1 : i32
    %c0_i32_24 = arith.constant 0 : i32
    %c8_i32_25 = arith.constant 8 : i32
    %45 = arith.muli %c0_i32_24, %c8_i32_25 : i32
    %46 = tpu.assume_multiple %45, 8 : i32
    %47 = arith.index_cast %46 : i32 to index
    %c0_26 = arith.constant 0 : index
    %48 = vector.load %arg20[%47, %c0_26] : memref<8x96xf32, #tpu.memory_space<vmem>>, vector<8x8xf32>
    %c0_27 = arith.constant 0 : index
    %c32 = arith.constant 32 : index
    %49 = vector.load %arg20[%c0_27, %c32] : memref<8x96xf32, #tpu.memory_space<vmem>>, vector<8x8xf32>
    %c0_28 = arith.constant 0 : index
    %c64 = arith.constant 64 : index
    %50 = vector.load %arg20[%c0_28, %c64] : memref<8x96xf32, #tpu.memory_space<vmem>>, vector<8x8xf32>
    %cst_29 = arith.constant dense<0.000000e+00> : vector<8x8xf32>
    %51 = tpu.matmul %48, %49, %cst_29 {dimension_numbers = #tpu.dot_dimension_numbers<[1], [1], [0], [0], [0, 0, 1, 0], [], []>} : vector<8x8xf32>, vector<8x8xf32>, vector<8x8xf32> -> vector<8x8xf32>
    %52 = vector.broadcast %4 : vector<1x8xf32> to vector<8x8xf32>
    %53 = arith.addf %51, %52 : vector<8x8xf32>
    %cst_30 = arith.constant dense<0xFF800000> : vector<8xf32>
    %54 = vector.multi_reduction <maximumf>, %53, %cst_30 [1] : vector<8x8xf32> to vector<8xf32>
    %55 = vector.shape_cast %54 : vector<8xf32> to vector<8x1xf32>
    %56 = vector.broadcast %55 : vector<8x1xf32> to vector<8x8xf32>
    %57 = arith.subf %53, %56 : vector<8x8xf32>
    %58 = math.exp %57 : vector<8x8xf32>
    %cst_31 = arith.constant dense<0.000000e+00> : vector<8xf32>
    %59 = vector.multi_reduction <add>, %58, %cst_31 [1] : vector<8x8xf32> to vector<8xf32>
    %60 = vector.shape_cast %59 : vector<8xf32> to vector<8x1xf32>
    %61 = vector.broadcast %60 : vector<8x1xf32> to vector<8x8xf32>
    %62 = arith.divf %58, %61 : vector<8x8xf32>
    %cst_32 = arith.constant dense<0.000000e+00> : vector<8x8xf32>
    %63 = tpu.matmul %62, %50, %cst_32 {dimension_numbers = #tpu.dot_dimension_numbers<[1], [0], [0], [1], [0, 0, 1, 1], [], []>} : vector<8x8xf32>, vector<8x8xf32>, vector<8x8xf32> -> vector<8x8xf32>
    %c0_33 = arith.constant 0 : index
    %c0_34 = arith.constant 0 : index
    %64 = vector.load %arg21[%c0_33, %c0_34] : memref<8x32xf32, #tpu.memory_space<vmem>>, vector<8x8xf32>
    tpu.vector_store %arg21[%c0_33, %c0_34], %63 {strides = array<i32>} : memref<8x32xf32, #tpu.memory_space<vmem>>, vector<8x8xf32>,
    %65 = arith.index_cast %46 : i32 to index
    %c8 = arith.constant 8 : index
    %66 = vector.load %arg20[%65, %c8] : memref<8x96xf32, #tpu.memory_space<vmem>>, vector<8x8xf32>
    %c0_35 = arith.constant 0 : index
    %c40 = arith.constant 40 : index
    %67 = vector.load %arg20[%c0_35, %c40] : memref<8x96xf32, #tpu.memory_space<vmem>>, vector<8x8xf32>
    %c0_36 = arith.constant 0 : index
    %c72 = arith.constant 72 : index
    %68 = vector.load %arg20[%c0_36, %c72] : memref<8x96xf32, #tpu.memory_space<vmem>>, vector<8x8xf32>
    %cst_37 = arith.constant dense<0.000000e+00> : vector<8x8xf32>
    %69 = tpu.matmul %66, %67, %cst_37 {dimension_numbers = #tpu.dot_dimension_numbers<[1], [1], [0], [0], [0, 0, 1, 0], [], []>} : vector<8x8xf32>, vector<8x8xf32>, vector<8x8xf32> -> vector<8x8xf32>
    %70 = vector.broadcast %4 : vector<1x8xf32> to vector<8x8xf32>
    %71 = arith.addf %69, %70 : vector<8x8xf32>
    %cst_38 = arith.constant dense<0xFF800000> : vector<8xf32>
    %72 = vector.multi_reduction <maximumf>, %71, %cst_38 [1] : vector<8x8xf32> to vector<8xf32>
    %73 = vector.shape_cast %72 : vector<8xf32> to vector<8x1xf32>
    %74 = vector.broadcast %73 : vector<8x1xf32> to vector<8x8xf32>
    %75 = arith.subf %71, %74 : vector<8x8xf32>
    %76 = math.exp %75 : vector<8x8xf32>
    %cst_39 = arith.constant dense<0.000000e+00> : vector<8xf32>
    %77 = vector.multi_reduction <add>, %76, %cst_39 [1] : vector<8x8xf32> to vector<8xf32>
    %78 = vector.shape_cast %77 : vector<8xf32> to vector<8x1xf32>
    %79 = vector.broadcast %78 : vector<8x1xf32> to vector<8x8xf32>
    %80 = arith.divf %76, %79 : vector<8x8xf32>
    %cst_40 = arith.constant dense<0.000000e+00> : vector<8x8xf32>
    %81 = tpu.matmul %80, %68, %cst_40 {dimension_numbers = #tpu.dot_dimension_numbers<[1], [0], [0], [1], [0, 0, 1, 1], [], []>} : vector<8x8xf32>, vector<8x8xf32>, vector<8x8xf32> -> vector<8x8xf32>
    %c0_41 = arith.constant 0 : index
    %c8_42 = arith.constant 8 : index
    %82 = vector.load %arg21[%c0_41, %c8_42] : memref<8x32xf32, #tpu.memory_space<vmem>>, vector<8x8xf32>
    tpu.vector_store %arg21[%c0_41, %c8_42], %81 {strides = array<i32>} : memref<8x32xf32, #tpu.memory_space<vmem>>, vector<8x8xf32>,
    %83 = arith.index_cast %46 : i32 to index
    %c16 = arith.constant 16 : index
    %84 = vector.load %arg20[%83, %c16] : memref<8x96xf32, #tpu.memory_space<vmem>>, vector<8x8xf32>
    %c0_43 = arith.constant 0 : index
    %c48 = arith.constant 48 : index
    %85 = vector.load %arg20[%c0_43, %c48] : memref<8x96xf32, #tpu.memory_space<vmem>>, vector<8x8xf32>
    %c0_44 = arith.constant 0 : index
    %c80 = arith.constant 80 : index
    %86 = vector.load %arg20[%c0_44, %c80] : memref<8x96xf32, #tpu.memory_space<vmem>>, vector<8x8xf32>
    %cst_45 = arith.constant dense<0.000000e+00> : vector<8x8xf32>
    %87 = tpu.matmul %84, %85, %cst_45 {dimension_numbers = #tpu.dot_dimension_numbers<[1], [1], [0], [0], [0, 0, 1, 0], [], []>} : vector<8x8xf32>, vector<8x8xf32>, vector<8x8xf32> -> vector<8x8xf32>
    %88 = vector.broadcast %4 : vector<1x8xf32> to vector<8x8xf32>
    %89 = arith.addf %87, %88 : vector<8x8xf32>
    %cst_46 = arith.constant dense<0xFF800000> : vector<8xf32>
    %90 = vector.multi_reduction <maximumf>, %89, %cst_46 [1] : vector<8x8xf32> to vector<8xf32>
    %91 = vector.shape_cast %90 : vector<8xf32> to vector<8x1xf32>
    %92 = vector.broadcast %91 : vector<8x1xf32> to vector<8x8xf32>
    %93 = arith.subf %89, %92 : vector<8x8xf32>
    %94 = math.exp %93 : vector<8x8xf32>
    %cst_47 = arith.constant dense<0.000000e+00> : vector<8xf32>
    %95 = vector.multi_reduction <add>, %94, %cst_47 [1] : vector<8x8xf32> to vector<8xf32>
    %96 = vector.shape_cast %95 : vector<8xf32> to vector<8x1xf32>
    %97 = vector.broadcast %96 : vector<8x1xf32> to vector<8x8xf32>
    %98 = arith.divf %94, %97 : vector<8x8xf32>
    %cst_48 = arith.constant dense<0.000000e+00> : vector<8x8xf32>
    %99 = tpu.matmul %98, %86, %cst_48 {dimension_numbers = #tpu.dot_dimension_numbers<[1], [0], [0], [1], [0, 0, 1, 1], [], []>} : vector<8x8xf32>, vector<8x8xf32>, vector<8x8xf32> -> vector<8x8xf32>
    %c0_49 = arith.constant 0 : index
    %c16_50 = arith.constant 16 : index
    %100 = vector.load %arg21[%c0_49, %c16_50] : memref<8x32xf32, #tpu.memory_space<vmem>>, vector<8x8xf32>
    tpu.vector_store %arg21[%c0_49, %c16_50], %99 {strides = array<i32>} : memref<8x32xf32, #tpu.memory_space<vmem>>, vector<8x8xf32>,
    %101 = arith.index_cast %46 : i32 to index
    %c24 = arith.constant 24 : index
    %102 = vector.load %arg20[%101, %c24] : memref<8x96xf32, #tpu.memory_space<vmem>>, vector<8x8xf32>
    %c0_51 = arith.constant 0 : index
    %c56 = arith.constant 56 : index
    %103 = vector.load %arg20[%c0_51, %c56] : memref<8x96xf32, #tpu.memory_space<vmem>>, vector<8x8xf32>
    %c0_52 = arith.constant 0 : index
    %c88 = arith.constant 88 : index
    %104 = vector.load %arg20[%c0_52, %c88] : memref<8x96xf32, #tpu.memory_space<vmem>>, vector<8x8xf32>
    %cst_53 = arith.constant dense<0.000000e+00> : vector<8x8xf32>
    %105 = tpu.matmul %102, %103, %cst_53 {dimension_numbers = #tpu.dot_dimension_numbers<[1], [1], [0], [0], [0, 0, 1, 0], [], []>} : vector<8x8xf32>, vector<8x8xf32>, vector<8x8xf32> -> vector<8x8xf32>
    %106 = vector.broadcast %4 : vector<1x8xf32> to vector<8x8xf32>
    %107 = arith.addf %105, %106 : vector<8x8xf32>
    %cst_54 = arith.constant dense<0xFF800000> : vector<8xf32>
    %108 = vector.multi_reduction <maximumf>, %107, %cst_54 [1] : vector<8x8xf32> to vector<8xf32>
    %109 = vector.shape_cast %108 : vector<8xf32> to vector<8x1xf32>
    %110 = vector.broadcast %109 : vector<8x1xf32> to vector<8x8xf32>
    %111 = arith.subf %107, %110 : vector<8x8xf32>
    %112 = math.exp %111 : vector<8x8xf32>
    %cst_55 = arith.constant dense<0.000000e+00> : vector<8xf32>
    %113 = vector.multi_reduction <add>, %112, %cst_55 [1] : vector<8x8xf32> to vector<8xf32>
    %114 = vector.shape_cast %113 : vector<8xf32> to vector<8x1xf32>
    %115 = vector.broadcast %114 : vector<8x1xf32> to vector<8x8xf32>
    %116 = arith.divf %112, %115 : vector<8x8xf32>
    %cst_56 = arith.constant dense<0.000000e+00> : vector<8x8xf32>
    %117 = tpu.matmul %116, %104, %cst_56 {dimension_numbers = #tpu.dot_dimension_numbers<[1], [0], [0], [1], [0, 0, 1, 1], [], []>} : vector<8x8xf32>, vector<8x8xf32>, vector<8x8xf32> -> vector<8x8xf32>
    %c0_57 = arith.constant 0 : index
    %c24_58 = arith.constant 24 : index
    %118 = vector.load %arg21[%c0_57, %c24_58] : memref<8x32xf32, #tpu.memory_space<vmem>>, vector<8x8xf32>
    tpu.vector_store %arg21[%c0_57, %c24_58], %117 {strides = array<i32>} : memref<8x32xf32, #tpu.memory_space<vmem>>, vector<8x8xf32>,
    %c0_59 = arith.constant 0 : index
    %c0_60 = arith.constant 0 : index
    %119 = vector.load %arg21[%c0_59, %c0_60] : memref<8x32xf32, #tpu.memory_space<vmem>>, vector<8x32xf32>
    %c0_61 = arith.constant 0 : index
    %c0_62 = arith.constant 0 : index
    %c0_63 = arith.constant 0 : index
    %120 = vector.load %arg8[%c0_61, %c0_62, %c0_63] : memref<1x32x32xf32, #tpu.memory_space<vmem>>, vector<1x32x32xf32>
    %121 = vector.shape_cast %120 : vector<1x32x32xf32> to vector<32x32xf32>
    %cst_64 = arith.constant dense<0.000000e+00> : vector<8x32xf32>
    %122 = tpu.matmul %119, %121, %cst_64 {dimension_numbers = #tpu.dot_dimension_numbers<[1], [0], [0], [1], [0, 0, 1, 1], [], []>} : vector<8x32xf32>, vector<32x32xf32>, vector<8x32xf32> -> vector<8x32xf32>
    %c0_65 = arith.constant 0 : index
    %c0_66 = arith.constant 0 : index
    %c0_67 = arith.constant 0 : index
    %123 = vector.load %arg9[%c0_65, %c0_66, %c0_67] : memref<1x1x32xf32, #tpu.memory_space<vmem>>, vector<1x1x32xf32>
    %124 = vector.shape_cast %123 : vector<1x1x32xf32> to vector<1x32xf32>
    %125 = vector.broadcast %124 : vector<1x32xf32> to vector<8x32xf32>
    %126 = arith.addf %122, %125 : vector<8x32xf32>
    %c0_i32_68 = arith.constant 0 : i32
    %127 = arith.addi %c0_i32_68, %46 : i32
    %128 = arith.index_cast %127 : i32 to index
    %c0_69 = arith.constant 0 : index
    %129 = vector.load %arg19[%128, %c0_69] : memref<16x32xf32, #tpu.memory_space<vmem>>, vector<8x32xf32>
    %130 = arith.addf %129, %126 : vector<8x32xf32>
    %c0_i32_70 = arith.constant 0 : i32
    %131 = arith.addi %c0_i32_70, %46 : i32
    %132 = arith.index_cast %131 : i32 to index
    %c0_71 = arith.constant 0 : index
    %133 = vector.load %arg19[%132, %c0_71] : memref<16x32xf32, #tpu.memory_space<vmem>>, vector<8x32xf32>
    tpu.vector_store %arg19[%132, %c0_71], %130 {strides = array<i32>} : memref<16x32xf32, #tpu.memory_space<vmem>>, vector<8x32xf32>,
    %c1_i32_72 = arith.constant 1 : i32
    %c0_i32_73 = arith.constant 0 : i32
    %c8_i32_74 = arith.constant 8 : i32
    %134 = arith.muli %c0_i32_73, %c8_i32_74 : i32
    %135 = tpu.assume_multiple %134, 8 : i32
    %c0_i32_75 = arith.constant 0 : i32
    %136 = arith.addi %c0_i32_75, %135 : i32
    %137 = arith.index_cast %136 : i32 to index
    %c0_76 = arith.constant 0 : index
    %138 = vector.load %arg19[%137, %c0_76] : memref<16x32xf32, #tpu.memory_space<vmem>>, vector<8x32xf32>
    %c0_77 = arith.constant 0 : index
    %c0_78 = arith.constant 0 : index
    %c0_79 = arith.constant 0 : index
    %139 = vector.load %arg10[%c0_77, %c0_78, %c0_79] : memref<1x1x32xf32, #tpu.memory_space<vmem>>, vector<1x1x32xf32>
    %140 = vector.shape_cast %139 : vector<1x1x32xf32> to vector<1x32xf32>
    %c0_80 = arith.constant 0 : index
    %c0_81 = arith.constant 0 : index
    %c0_82 = arith.constant 0 : index
    %141 = vector.load %arg11[%c0_80, %c0_81, %c0_82] : memref<1x1x32xf32, #tpu.memory_space<vmem>>, vector<1x1x32xf32>
    %142 = vector.shape_cast %141 : vector<1x1x32xf32> to vector<1x32xf32>
    %cst_83 = arith.constant dense<0.000000e+00> : vector<8xf32>
    %143 = vector.multi_reduction <add>, %138, %cst_83 [1] : vector<8x32xf32> to vector<8xf32>
    %144 = vector.shape_cast %143 : vector<8xf32> to vector<8x1xf32>
    %cst_84 = arith.constant 3.200000e+01 : f32
    %145 = vector.broadcast %cst_84 : f32 to vector<8x1xf32>
    %146 = arith.divf %144, %145 : vector<8x1xf32>
    %147 = vector.broadcast %146 : vector<8x1xf32> to vector<8x32xf32>
    %148 = arith.subf %138, %147 : vector<8x32xf32>
    %149 = arith.mulf %148, %148 : vector<8x32xf32>
    %cst_85 = arith.constant dense<0.000000e+00> : vector<8xf32>
    %150 = vector.multi_reduction <add>, %149, %cst_85 [1] : vector<8x32xf32> to vector<8xf32>
    %151 = vector.shape_cast %150 : vector<8xf32> to vector<8x1xf32>
    %cst_86 = arith.constant 3.100000e+01 : f32
    %152 = vector.broadcast %cst_86 : f32 to vector<8x1xf32>
    %153 = arith.divf %151, %152 : vector<8x1xf32>
    %154 = vector.broadcast %146 : vector<8x1xf32> to vector<8x32xf32>
    %155 = arith.subf %138, %154 : vector<8x32xf32>
    %156 = vector.broadcast %140 : vector<1x32xf32> to vector<8x32xf32>
    %157 = arith.mulf %156, %155 : vector<8x32xf32>
    %158 = math.sqrt %153 : vector<8x1xf32>
    %cst_87 = arith.constant 9.99999997E-7 : f32
    %159 = vector.broadcast %cst_87 : f32 to vector<8x1xf32>
    %160 = arith.addf %158, %159 : vector<8x1xf32>
    %161 = vector.broadcast %160 : vector<8x1xf32> to vector<8x32xf32>
    %162 = arith.divf %157, %161 : vector<8x32xf32>
    %163 = vector.broadcast %142 : vector<1x32xf32> to vector<8x32xf32>
    %164 = arith.addf %162, %163 : vector<8x32xf32>
    %c0_88 = arith.constant 0 : index
    %c0_89 = arith.constant 0 : index
    %c0_90 = arith.constant 0 : index
    %165 = vector.load %arg12[%c0_88, %c0_89, %c0_90] : memref<1x32x64xf32, #tpu.memory_space<vmem>>, vector<1x32x64xf32>
    %166 = vector.shape_cast %165 : vector<1x32x64xf32> to vector<32x64xf32>
    %cst_91 = arith.constant dense<0.000000e+00> : vector<8x64xf32>
    %167 = tpu.matmul %164, %166, %cst_91 {dimension_numbers = #tpu.dot_dimension_numbers<[1], [0], [0], [1], [0, 0, 1, 1], [], []>} : vector<8x32xf32>, vector<32x64xf32>, vector<8x64xf32> -> vector<8x64xf32>
    %c0_92 = arith.constant 0 : index
    %c0_93 = arith.constant 0 : index
    %c0_94 = arith.constant 0 : index
    %168 = vector.load %arg13[%c0_92, %c0_93, %c0_94] : memref<1x1x64xf32, #tpu.memory_space<vmem>>, vector<1x1x64xf32>
    %169 = vector.shape_cast %168 : vector<1x1x64xf32> to vector<1x64xf32>
    %170 = vector.broadcast %169 : vector<1x64xf32> to vector<8x64xf32>
    %171 = arith.addf %167, %170 : vector<8x64xf32>
    %cst_95 = arith.constant 0.000000e+00 : f32
    %172 = vector.broadcast %cst_95 : f32 to vector<8x64xf32>
    %173 = arith.maximumf %171, %172 : vector<8x64xf32>
    %c0_96 = arith.constant 0 : index
    %c0_97 = arith.constant 0 : index
    %c0_98 = arith.constant 0 : index
    %174 = vector.load %arg14[%c0_96, %c0_97, %c0_98] : memref<1x64x32xf32, #tpu.memory_space<vmem>>, vector<1x64x32xf32>
    %175 = vector.shape_cast %174 : vector<1x64x32xf32> to vector<64x32xf32>
    %cst_99 = arith.constant dense<0.000000e+00> : vector<8x32xf32>
    %176 = tpu.matmul %173, %175, %cst_99 {dimension_numbers = #tpu.dot_dimension_numbers<[1], [0], [0], [1], [0, 0, 1, 1], [], []>} : vector<8x64xf32>, vector<64x32xf32>, vector<8x32xf32> -> vector<8x32xf32>
    %177 = arith.addf %138, %176 : vector<8x32xf32>
    %c0_100 = arith.constant 0 : index
    %c0_101 = arith.constant 0 : index
    %c0_102 = arith.constant 0 : index
    %178 = vector.load %arg15[%c0_100, %c0_101, %c0_102] : memref<1x1x32xf32, #tpu.memory_space<vmem>>, vector<1x1x32xf32>
    %179 = vector.shape_cast %178 : vector<1x1x32xf32> to vector<1x32xf32>
    %180 = vector.broadcast %179 : vector<1x32xf32> to vector<8x32xf32>
    %181 = arith.addf %177, %180 : vector<8x32xf32>
    %c0_i32_103 = arith.constant 0 : i32
    %182 = arith.addi %c0_i32_103, %135 : i32
    %183 = arith.index_cast %182 : i32 to index
    %c0_104 = arith.constant 0 : index
    %184 = vector.load %arg19[%183, %c0_104] : memref<16x32xf32, #tpu.memory_space<vmem>>, vector<8x32xf32>
    tpu.vector_store %arg19[%183, %c0_104], %181 {strides = array<i32>} : memref<16x32xf32, #tpu.memory_space<vmem>>, vector<8x32xf32>,
    %c1_i32_105 = arith.constant 1 : i32
    %185 = arith.cmpi eq, %arg1, %c1_i32_105 : i32
    %186 = arith.extui %185 : i1 to i32
    %c0_i32_106 = arith.constant 0 : i32
    %187 = arith.cmpi ne, %186, %c0_i32_106 : i32
    scf.if %187 {
      %c0_229 = arith.constant 0 : index
      %c0_230 = arith.constant 0 : index
      %373 = vector.load %arg16[%c0_229, %c0_230] : memref<1x32xf32, #tpu.memory_space<vmem>>, vector<1x32xf32>
      %c0_231 = arith.constant 0 : index
      %c0_232 = arith.constant 0 : index
      %374 = vector.load %arg17[%c0_231, %c0_232] : memref<1x32xf32, #tpu.memory_space<vmem>>, vector<1x32xf32>
      %cst_233 = arith.constant dense<0.000000e+00> : vector<8xf32>
      %375 = vector.multi_reduction <add>, %181, %cst_233 [1] : vector<8x32xf32> to vector<8xf32>
      %376 = vector.shape_cast %375 : vector<8xf32> to vector<8x1xf32>
      %cst_234 = arith.constant 3.200000e+01 : f32
      %377 = vector.broadcast %cst_234 : f32 to vector<8x1xf32>
      %378 = arith.divf %376, %377 : vector<8x1xf32>
      %379 = vector.broadcast %378 : vector<8x1xf32> to vector<8x32xf32>
      %380 = arith.subf %181, %379 : vector<8x32xf32>
      %381 = arith.mulf %380, %380 : vector<8x32xf32>
      %cst_235 = arith.constant dense<0.000000e+00> : vector<8xf32>
      %382 = vector.multi_reduction <add>, %381, %cst_235 [1] : vector<8x32xf32> to vector<8xf32>
      %383 = vector.shape_cast %382 : vector<8xf32> to vector<8x1xf32>
      %cst_236 = arith.constant 3.100000e+01 : f32
      %384 = vector.broadcast %cst_236 : f32 to vector<8x1xf32>
      %385 = arith.divf %383, %384 : vector<8x1xf32>
      %386 = vector.broadcast %378 : vector<8x1xf32> to vector<8x32xf32>
      %387 = arith.subf %181, %386 : vector<8x32xf32>
      %388 = vector.broadcast %373 : vector<1x32xf32> to vector<8x32xf32>
      %389 = arith.mulf %388, %387 : vector<8x32xf32>
      %390 = math.sqrt %385 : vector<8x1xf32>
      %cst_237 = arith.constant 9.99999997E-7 : f32
      %391 = vector.broadcast %cst_237 : f32 to vector<8x1xf32>
      %392 = arith.addf %390, %391 : vector<8x1xf32>
      %393 = vector.broadcast %392 : vector<8x1xf32> to vector<8x32xf32>
      %394 = arith.divf %389, %393 : vector<8x32xf32>
      %395 = vector.broadcast %374 : vector<1x32xf32> to vector<8x32xf32>
      %396 = arith.addf %394, %395 : vector<8x32xf32>
      %c0_238 = arith.constant 0 : index
      %397 = arith.index_cast %135 : i32 to index
      %c0_239 = arith.constant 0 : index
      %398 = vector.load %arg18[%c0_238, %397, %c0_239] : memref<2x8x32xf32, #tpu.memory_space<vmem>>, vector<1x8x32xf32>
      %399 = vector.shape_cast %398 : vector<1x8x32xf32> to vector<8x32xf32>
      %400 = vector.shape_cast %396 : vector<8x32xf32> to vector<1x8x32xf32>
      tpu.vector_store %arg18[%c0_238, %397, %c0_239], %400 {strides = array<i32>} : memref<2x8x32xf32, #tpu.memory_space<vmem>>, vector<1x8x32xf32>,
    } else {
    }
    %c1_i32_107 = arith.constant 1 : i32
    %c1 = arith.constant 1 : index
    %c0_108 = arith.constant 0 : index
    %c0_109 = arith.constant 0 : index
    %188 = vector.load %arg22[%c1, %c0_108, %c0_109] : memref<2x1x8xf32, #tpu.memory_space<vmem>>, vector<1x1x8xf32>
    %189 = vector.shape_cast %188 : vector<1x1x8xf32> to vector<1x8xf32>
    %c0_i32_110 = arith.constant 0 : i32
    %c8_i32_111 = arith.constant 8 : i32
    %190 = arith.muli %c0_i32_110, %c8_i32_111 : i32
    %191 = tpu.assume_multiple %190, 8 : i32
    %c8_i32_112 = arith.constant 8 : i32
    %192 = arith.addi %c8_i32_112, %191 : i32
    %193 = arith.index_cast %192 : i32 to index
    %c0_113 = arith.constant 0 : index
    %194 = vector.load %arg19[%193, %c0_113] : memref<16x32xf32, #tpu.memory_space<vmem>>, vector<8x32xf32>
    %c0_114 = arith.constant 0 : index
    %c0_115 = arith.constant 0 : index
    %c0_116 = arith.constant 0 : index
    %195 = vector.load %arg4[%c0_114, %c0_115, %c0_116] : memref<1x1x32xf32, #tpu.memory_space<vmem>>, vector<1x1x32xf32>
    %196 = vector.shape_cast %195 : vector<1x1x32xf32> to vector<1x32xf32>
    %c0_117 = arith.constant 0 : index
    %c0_118 = arith.constant 0 : index
    %c0_119 = arith.constant 0 : index
    %197 = vector.load %arg5[%c0_117, %c0_118, %c0_119] : memref<1x1x32xf32, #tpu.memory_space<vmem>>, vector<1x1x32xf32>
    %198 = vector.shape_cast %197 : vector<1x1x32xf32> to vector<1x32xf32>
    %cst_120 = arith.constant dense<0.000000e+00> : vector<8xf32>
    %199 = vector.multi_reduction <add>, %194, %cst_120 [1] : vector<8x32xf32> to vector<8xf32>
    %200 = vector.shape_cast %199 : vector<8xf32> to vector<8x1xf32>
    %cst_121 = arith.constant 3.200000e+01 : f32
    %201 = vector.broadcast %cst_121 : f32 to vector<8x1xf32>
    %202 = arith.divf %200, %201 : vector<8x1xf32>
    %203 = vector.broadcast %202 : vector<8x1xf32> to vector<8x32xf32>
    %204 = arith.subf %194, %203 : vector<8x32xf32>
    %205 = arith.mulf %204, %204 : vector<8x32xf32>
    %cst_122 = arith.constant dense<0.000000e+00> : vector<8xf32>
    %206 = vector.multi_reduction <add>, %205, %cst_122 [1] : vector<8x32xf32> to vector<8xf32>
    %207 = vector.shape_cast %206 : vector<8xf32> to vector<8x1xf32>
    %cst_123 = arith.constant 3.100000e+01 : f32
    %208 = vector.broadcast %cst_123 : f32 to vector<8x1xf32>
    %209 = arith.divf %207, %208 : vector<8x1xf32>
    %210 = vector.broadcast %202 : vector<8x1xf32> to vector<8x32xf32>
    %211 = arith.subf %194, %210 : vector<8x32xf32>
    %212 = vector.broadcast %196 : vector<1x32xf32> to vector<8x32xf32>
    %213 = arith.mulf %212, %211 : vector<8x32xf32>
    %214 = math.sqrt %209 : vector<8x1xf32>
    %cst_124 = arith.constant 9.99999997E-7 : f32
    %215 = vector.broadcast %cst_124 : f32 to vector<8x1xf32>
    %216 = arith.addf %214, %215 : vector<8x1xf32>
    %217 = vector.broadcast %216 : vector<8x1xf32> to vector<8x32xf32>
    %218 = arith.divf %213, %217 : vector<8x32xf32>
    %219 = vector.broadcast %198 : vector<1x32xf32> to vector<8x32xf32>
    %220 = arith.addf %218, %219 : vector<8x32xf32>
    %c0_125 = arith.constant 0 : index
    %c0_126 = arith.constant 0 : index
    %c0_127 = arith.constant 0 : index
    %221 = vector.load %arg6[%c0_125, %c0_126, %c0_127] : memref<1x32x96xf32, #tpu.memory_space<vmem>>, vector<1x32x96xf32>
    %222 = vector.shape_cast %221 : vector<1x32x96xf32> to vector<32x96xf32>
    %cst_128 = arith.constant dense<0.000000e+00> : vector<8x96xf32>
    %223 = tpu.matmul %220, %222, %cst_128 {dimension_numbers = #tpu.dot_dimension_numbers<[1], [0], [0], [1], [0, 0, 1, 1], [], []>} : vector<8x32xf32>, vector<32x96xf32>, vector<8x96xf32> -> vector<8x96xf32>
    %c0_129 = arith.constant 0 : index
    %c0_130 = arith.constant 0 : index
    %c0_131 = arith.constant 0 : index
    %224 = vector.load %arg7[%c0_129, %c0_130, %c0_131] : memref<1x1x96xf32, #tpu.memory_space<vmem>>, vector<1x1x96xf32>
    %225 = vector.shape_cast %224 : vector<1x1x96xf32> to vector<1x96xf32>
    %226 = vector.broadcast %225 : vector<1x96xf32> to vector<8x96xf32>
    %227 = arith.addf %223, %226 : vector<8x96xf32>
    %228 = arith.index_cast %191 : i32 to index
    %c0_132 = arith.constant 0 : index
    %229 = vector.load %arg20[%228, %c0_132] : memref<8x96xf32, #tpu.memory_space<vmem>>, vector<8x96xf32>
    tpu.vector_store %arg20[%228, %c0_132], %227 {strides = array<i32>} : memref<8x96xf32, #tpu.memory_space<vmem>>, vector<8x96xf32>,
    %c1_i32_133 = arith.constant 1 : i32
    %c0_i32_134 = arith.constant 0 : i32
    %c8_i32_135 = arith.constant 8 : i32
    %230 = arith.muli %c0_i32_134, %c8_i32_135 : i32
    %231 = tpu.assume_multiple %230, 8 : i32
    %232 = arith.index_cast %231 : i32 to index
    %c0_136 = arith.constant 0 : index
    %233 = vector.load %arg20[%232, %c0_136] : memref<8x96xf32, #tpu.memory_space<vmem>>, vector<8x8xf32>
    %c0_137 = arith.constant 0 : index
    %c32_138 = arith.constant 32 : index
    %234 = vector.load %arg20[%c0_137, %c32_138] : memref<8x96xf32, #tpu.memory_space<vmem>>, vector<8x8xf32>
    %c0_139 = arith.constant 0 : index
    %c64_140 = arith.constant 64 : index
    %235 = vector.load %arg20[%c0_139, %c64_140] : memref<8x96xf32, #tpu.memory_space<vmem>>, vector<8x8xf32>
    %cst_141 = arith.constant dense<0.000000e+00> : vector<8x8xf32>
    %236 = tpu.matmul %233, %234, %cst_141 {dimension_numbers = #tpu.dot_dimension_numbers<[1], [1], [0], [0], [0, 0, 1, 0], [], []>} : vector<8x8xf32>, vector<8x8xf32>, vector<8x8xf32> -> vector<8x8xf32>
    %237 = vector.broadcast %189 : vector<1x8xf32> to vector<8x8xf32>
    %238 = arith.addf %236, %237 : vector<8x8xf32>
    %cst_142 = arith.constant dense<0xFF800000> : vector<8xf32>
    %239 = vector.multi_reduction <maximumf>, %238, %cst_142 [1] : vector<8x8xf32> to vector<8xf32>
    %240 = vector.shape_cast %239 : vector<8xf32> to vector<8x1xf32>
    %241 = vector.broadcast %240 : vector<8x1xf32> to vector<8x8xf32>
    %242 = arith.subf %238, %241 : vector<8x8xf32>
    %243 = math.exp %242 : vector<8x8xf32>
    %cst_143 = arith.constant dense<0.000000e+00> : vector<8xf32>
    %244 = vector.multi_reduction <add>, %243, %cst_143 [1] : vector<8x8xf32> to vector<8xf32>
    %245 = vector.shape_cast %244 : vector<8xf32> to vector<8x1xf32>
    %246 = vector.broadcast %245 : vector<8x1xf32> to vector<8x8xf32>
    %247 = arith.divf %243, %246 : vector<8x8xf32>
    %cst_144 = arith.constant dense<0.000000e+00> : vector<8x8xf32>
    %248 = tpu.matmul %247, %235, %cst_144 {dimension_numbers = #tpu.dot_dimension_numbers<[1], [0], [0], [1], [0, 0, 1, 1], [], []>} : vector<8x8xf32>, vector<8x8xf32>, vector<8x8xf32> -> vector<8x8xf32>
    %c0_145 = arith.constant 0 : index
    %c0_146 = arith.constant 0 : index
    %249 = vector.load %arg21[%c0_145, %c0_146] : memref<8x32xf32, #tpu.memory_space<vmem>>, vector<8x8xf32>
    tpu.vector_store %arg21[%c0_145, %c0_146], %248 {strides = array<i32>} : memref<8x32xf32, #tpu.memory_space<vmem>>, vector<8x8xf32>,
    %250 = arith.index_cast %231 : i32 to index
    %c8_147 = arith.constant 8 : index
    %251 = vector.load %arg20[%250, %c8_147] : memref<8x96xf32, #tpu.memory_space<vmem>>, vector<8x8xf32>
    %c0_148 = arith.constant 0 : index
    %c40_149 = arith.constant 40 : index
    %252 = vector.load %arg20[%c0_148, %c40_149] : memref<8x96xf32, #tpu.memory_space<vmem>>, vector<8x8xf32>
    %c0_150 = arith.constant 0 : index
    %c72_151 = arith.constant 72 : index
    %253 = vector.load %arg20[%c0_150, %c72_151] : memref<8x96xf32, #tpu.memory_space<vmem>>, vector<8x8xf32>
    %cst_152 = arith.constant dense<0.000000e+00> : vector<8x8xf32>
    %254 = tpu.matmul %251, %252, %cst_152 {dimension_numbers = #tpu.dot_dimension_numbers<[1], [1], [0], [0], [0, 0, 1, 0], [], []>} : vector<8x8xf32>, vector<8x8xf32>, vector<8x8xf32> -> vector<8x8xf32>
    %255 = vector.broadcast %189 : vector<1x8xf32> to vector<8x8xf32>
    %256 = arith.addf %254, %255 : vector<8x8xf32>
    %cst_153 = arith.constant dense<0xFF800000> : vector<8xf32>
    %257 = vector.multi_reduction <maximumf>, %256, %cst_153 [1] : vector<8x8xf32> to vector<8xf32>
    %258 = vector.shape_cast %257 : vector<8xf32> to vector<8x1xf32>
    %259 = vector.broadcast %258 : vector<8x1xf32> to vector<8x8xf32>
    %260 = arith.subf %256, %259 : vector<8x8xf32>
    %261 = math.exp %260 : vector<8x8xf32>
    %cst_154 = arith.constant dense<0.000000e+00> : vector<8xf32>
    %262 = vector.multi_reduction <add>, %261, %cst_154 [1] : vector<8x8xf32> to vector<8xf32>
    %263 = vector.shape_cast %262 : vector<8xf32> to vector<8x1xf32>
    %264 = vector.broadcast %263 : vector<8x1xf32> to vector<8x8xf32>
    %265 = arith.divf %261, %264 : vector<8x8xf32>
    %cst_155 = arith.constant dense<0.000000e+00> : vector<8x8xf32>
    %266 = tpu.matmul %265, %253, %cst_155 {dimension_numbers = #tpu.dot_dimension_numbers<[1], [0], [0], [1], [0, 0, 1, 1], [], []>} : vector<8x8xf32>, vector<8x8xf32>, vector<8x8xf32> -> vector<8x8xf32>
    %c0_156 = arith.constant 0 : index
    %c8_157 = arith.constant 8 : index
    %267 = vector.load %arg21[%c0_156, %c8_157] : memref<8x32xf32, #tpu.memory_space<vmem>>, vector<8x8xf32>
    tpu.vector_store %arg21[%c0_156, %c8_157], %266 {strides = array<i32>} : memref<8x32xf32, #tpu.memory_space<vmem>>, vector<8x8xf32>,
    %268 = arith.index_cast %231 : i32 to index
    %c16_158 = arith.constant 16 : index
    %269 = vector.load %arg20[%268, %c16_158] : memref<8x96xf32, #tpu.memory_space<vmem>>, vector<8x8xf32>
    %c0_159 = arith.constant 0 : index
    %c48_160 = arith.constant 48 : index
    %270 = vector.load %arg20[%c0_159, %c48_160] : memref<8x96xf32, #tpu.memory_space<vmem>>, vector<8x8xf32>
    %c0_161 = arith.constant 0 : index
    %c80_162 = arith.constant 80 : index
    %271 = vector.load %arg20[%c0_161, %c80_162] : memref<8x96xf32, #tpu.memory_space<vmem>>, vector<8x8xf32>
    %cst_163 = arith.constant dense<0.000000e+00> : vector<8x8xf32>
    %272 = tpu.matmul %269, %270, %cst_163 {dimension_numbers = #tpu.dot_dimension_numbers<[1], [1], [0], [0], [0, 0, 1, 0], [], []>} : vector<8x8xf32>, vector<8x8xf32>, vector<8x8xf32> -> vector<8x8xf32>
    %273 = vector.broadcast %189 : vector<1x8xf32> to vector<8x8xf32>
    %274 = arith.addf %272, %273 : vector<8x8xf32>
    %cst_164 = arith.constant dense<0xFF800000> : vector<8xf32>
    %275 = vector.multi_reduction <maximumf>, %274, %cst_164 [1] : vector<8x8xf32> to vector<8xf32>
    %276 = vector.shape_cast %275 : vector<8xf32> to vector<8x1xf32>
    %277 = vector.broadcast %276 : vector<8x1xf32> to vector<8x8xf32>
    %278 = arith.subf %274, %277 : vector<8x8xf32>
    %279 = math.exp %278 : vector<8x8xf32>
    %cst_165 = arith.constant dense<0.000000e+00> : vector<8xf32>
    %280 = vector.multi_reduction <add>, %279, %cst_165 [1] : vector<8x8xf32> to vector<8xf32>
    %281 = vector.shape_cast %280 : vector<8xf32> to vector<8x1xf32>
    %282 = vector.broadcast %281 : vector<8x1xf32> to vector<8x8xf32>
    %283 = arith.divf %279, %282 : vector<8x8xf32>
    %cst_166 = arith.constant dense<0.000000e+00> : vector<8x8xf32>
    %284 = tpu.matmul %283, %271, %cst_166 {dimension_numbers = #tpu.dot_dimension_numbers<[1], [0], [0], [1], [0, 0, 1, 1], [], []>} : vector<8x8xf32>, vector<8x8xf32>, vector<8x8xf32> -> vector<8x8xf32>
    %c0_167 = arith.constant 0 : index
    %c16_168 = arith.constant 16 : index
    %285 = vector.load %arg21[%c0_167, %c16_168] : memref<8x32xf32, #tpu.memory_space<vmem>>, vector<8x8xf32>
    tpu.vector_store %arg21[%c0_167, %c16_168], %284 {strides = array<i32>} : memref<8x32xf32, #tpu.memory_space<vmem>>, vector<8x8xf32>,
    %286 = arith.index_cast %231 : i32 to index
    %c24_169 = arith.constant 24 : index
    %287 = vector.load %arg20[%286, %c24_169] : memref<8x96xf32, #tpu.memory_space<vmem>>, vector<8x8xf32>
    %c0_170 = arith.constant 0 : index
    %c56_171 = arith.constant 56 : index
    %288 = vector.load %arg20[%c0_170, %c56_171] : memref<8x96xf32, #tpu.memory_space<vmem>>, vector<8x8xf32>
    %c0_172 = arith.constant 0 : index
    %c88_173 = arith.constant 88 : index
    %289 = vector.load %arg20[%c0_172, %c88_173] : memref<8x96xf32, #tpu.memory_space<vmem>>, vector<8x8xf32>
    %cst_174 = arith.constant dense<0.000000e+00> : vector<8x8xf32>
    %290 = tpu.matmul %287, %288, %cst_174 {dimension_numbers = #tpu.dot_dimension_numbers<[1], [1], [0], [0], [0, 0, 1, 0], [], []>} : vector<8x8xf32>, vector<8x8xf32>, vector<8x8xf32> -> vector<8x8xf32>
    %291 = vector.broadcast %189 : vector<1x8xf32> to vector<8x8xf32>
    %292 = arith.addf %290, %291 : vector<8x8xf32>
    %cst_175 = arith.constant dense<0xFF800000> : vector<8xf32>
    %293 = vector.multi_reduction <maximumf>, %292, %cst_175 [1] : vector<8x8xf32> to vector<8xf32>
    %294 = vector.shape_cast %293 : vector<8xf32> to vector<8x1xf32>
    %295 = vector.broadcast %294 : vector<8x1xf32> to vector<8x8xf32>
    %296 = arith.subf %292, %295 : vector<8x8xf32>
    %297 = math.exp %296 : vector<8x8xf32>
    %cst_176 = arith.constant dense<0.000000e+00> : vector<8xf32>
    %298 = vector.multi_reduction <add>, %297, %cst_176 [1] : vector<8x8xf32> to vector<8xf32>
    %299 = vector.shape_cast %298 : vector<8xf32> to vector<8x1xf32>
    %300 = vector.broadcast %299 : vector<8x1xf32> to vector<8x8xf32>
    %301 = arith.divf %297, %300 : vector<8x8xf32>
    %cst_177 = arith.constant dense<0.000000e+00> : vector<8x8xf32>
    %302 = tpu.matmul %301, %289, %cst_177 {dimension_numbers = #tpu.dot_dimension_numbers<[1], [0], [0], [1], [0, 0, 1, 1], [], []>} : vector<8x8xf32>, vector<8x8xf32>, vector<8x8xf32> -> vector<8x8xf32>
    %c0_178 = arith.constant 0 : index
    %c24_179 = arith.constant 24 : index
    %303 = vector.load %arg21[%c0_178, %c24_179] : memref<8x32xf32, #tpu.memory_space<vmem>>, vector<8x8xf32>
    tpu.vector_store %arg21[%c0_178, %c24_179], %302 {strides = array<i32>} : memref<8x32xf32, #tpu.memory_space<vmem>>, vector<8x8xf32>,
    %c0_180 = arith.constant 0 : index
    %c0_181 = arith.constant 0 : index
    %304 = vector.load %arg21[%c0_180, %c0_181] : memref<8x32xf32, #tpu.memory_space<vmem>>, vector<8x32xf32>
    %c0_182 = arith.constant 0 : index
    %c0_183 = arith.constant 0 : index
    %c0_184 = arith.constant 0 : index
    %305 = vector.load %arg8[%c0_182, %c0_183, %c0_184] : memref<1x32x32xf32, #tpu.memory_space<vmem>>, vector<1x32x32xf32>
    %306 = vector.shape_cast %305 : vector<1x32x32xf32> to vector<32x32xf32>
    %cst_185 = arith.constant dense<0.000000e+00> : vector<8x32xf32>
    %307 = tpu.matmul %304, %306, %cst_185 {dimension_numbers = #tpu.dot_dimension_numbers<[1], [0], [0], [1], [0, 0, 1, 1], [], []>} : vector<8x32xf32>, vector<32x32xf32>, vector<8x32xf32> -> vector<8x32xf32>
    %c0_186 = arith.constant 0 : index
    %c0_187 = arith.constant 0 : index
    %c0_188 = arith.constant 0 : index
    %308 = vector.load %arg9[%c0_186, %c0_187, %c0_188] : memref<1x1x32xf32, #tpu.memory_space<vmem>>, vector<1x1x32xf32>
    %309 = vector.shape_cast %308 : vector<1x1x32xf32> to vector<1x32xf32>
    %310 = vector.broadcast %309 : vector<1x32xf32> to vector<8x32xf32>
    %311 = arith.addf %307, %310 : vector<8x32xf32>
    %c8_i32_189 = arith.constant 8 : i32
    %312 = arith.addi %c8_i32_189, %231 : i32
    %313 = arith.index_cast %312 : i32 to index
    %c0_190 = arith.constant 0 : index
    %314 = vector.load %arg19[%313, %c0_190] : memref<16x32xf32, #tpu.memory_space<vmem>>, vector<8x32xf32>
    %315 = arith.addf %314, %311 : vector<8x32xf32>
    %c8_i32_191 = arith.constant 8 : i32
    %316 = arith.addi %c8_i32_191, %231 : i32
    %317 = arith.index_cast %316 : i32 to index
    %c0_192 = arith.constant 0 : index
    %318 = vector.load %arg19[%317, %c0_192] : memref<16x32xf32, #tpu.memory_space<vmem>>, vector<8x32xf32>
    tpu.vector_store %arg19[%317, %c0_192], %315 {strides = array<i32>} : memref<16x32xf32, #tpu.memory_space<vmem>>, vector<8x32xf32>,
    %c1_i32_193 = arith.constant 1 : i32
    %c0_i32_194 = arith.constant 0 : i32
    %c8_i32_195 = arith.constant 8 : i32
    %319 = arith.muli %c0_i32_194, %c8_i32_195 : i32
    %320 = tpu.assume_multiple %319, 8 : i32
    %c8_i32_196 = arith.constant 8 : i32
    %321 = arith.addi %c8_i32_196, %320 : i32
    %322 = arith.index_cast %321 : i32 to index
    %c0_197 = arith.constant 0 : index
    %323 = vector.load %arg19[%322, %c0_197] : memref<16x32xf32, #tpu.memory_space<vmem>>, vector<8x32xf32>
    %c0_198 = arith.constant 0 : index
    %c0_199 = arith.constant 0 : index
    %c0_200 = arith.constant 0 : index
    %324 = vector.load %arg10[%c0_198, %c0_199, %c0_200] : memref<1x1x32xf32, #tpu.memory_space<vmem>>, vector<1x1x32xf32>
    %325 = vector.shape_cast %324 : vector<1x1x32xf32> to vector<1x32xf32>
    %c0_201 = arith.constant 0 : index
    %c0_202 = arith.constant 0 : index
    %c0_203 = arith.constant 0 : index
    %326 = vector.load %arg11[%c0_201, %c0_202, %c0_203] : memref<1x1x32xf32, #tpu.memory_space<vmem>>, vector<1x1x32xf32>
    %327 = vector.shape_cast %326 : vector<1x1x32xf32> to vector<1x32xf32>
    %cst_204 = arith.constant dense<0.000000e+00> : vector<8xf32>
    %328 = vector.multi_reduction <add>, %323, %cst_204 [1] : vector<8x32xf32> to vector<8xf32>
    %329 = vector.shape_cast %328 : vector<8xf32> to vector<8x1xf32>
    %cst_205 = arith.constant 3.200000e+01 : f32
    %330 = vector.broadcast %cst_205 : f32 to vector<8x1xf32>
    %331 = arith.divf %329, %330 : vector<8x1xf32>
    %332 = vector.broadcast %331 : vector<8x1xf32> to vector<8x32xf32>
    %333 = arith.subf %323, %332 : vector<8x32xf32>
    %334 = arith.mulf %333, %333 : vector<8x32xf32>
    %cst_206 = arith.constant dense<0.000000e+00> : vector<8xf32>
    %335 = vector.multi_reduction <add>, %334, %cst_206 [1] : vector<8x32xf32> to vector<8xf32>
    %336 = vector.shape_cast %335 : vector<8xf32> to vector<8x1xf32>
    %cst_207 = arith.constant 3.100000e+01 : f32
    %337 = vector.broadcast %cst_207 : f32 to vector<8x1xf32>
    %338 = arith.divf %336, %337 : vector<8x1xf32>
    %339 = vector.broadcast %331 : vector<8x1xf32> to vector<8x32xf32>
    %340 = arith.subf %323, %339 : vector<8x32xf32>
    %341 = vector.broadcast %325 : vector<1x32xf32> to vector<8x32xf32>
    %342 = arith.mulf %341, %340 : vector<8x32xf32>
    %343 = math.sqrt %338 : vector<8x1xf32>
    %cst_208 = arith.constant 9.99999997E-7 : f32
    %344 = vector.broadcast %cst_208 : f32 to vector<8x1xf32>
    %345 = arith.addf %343, %344 : vector<8x1xf32>
    %346 = vector.broadcast %345 : vector<8x1xf32> to vector<8x32xf32>
    %347 = arith.divf %342, %346 : vector<8x32xf32>
    %348 = vector.broadcast %327 : vector<1x32xf32> to vector<8x32xf32>
    %349 = arith.addf %347, %348 : vector<8x32xf32>
    %c0_209 = arith.constant 0 : index
    %c0_210 = arith.constant 0 : index
    %c0_211 = arith.constant 0 : index
    %350 = vector.load %arg12[%c0_209, %c0_210, %c0_211] : memref<1x32x64xf32, #tpu.memory_space<vmem>>, vector<1x32x64xf32>
    %351 = vector.shape_cast %350 : vector<1x32x64xf32> to vector<32x64xf32>
    %cst_212 = arith.constant dense<0.000000e+00> : vector<8x64xf32>
    %352 = tpu.matmul %349, %351, %cst_212 {dimension_numbers = #tpu.dot_dimension_numbers<[1], [0], [0], [1], [0, 0, 1, 1], [], []>} : vector<8x32xf32>, vector<32x64xf32>, vector<8x64xf32> -> vector<8x64xf32>
    %c0_213 = arith.constant 0 : index
    %c0_214 = arith.constant 0 : index
    %c0_215 = arith.constant 0 : index
    %353 = vector.load %arg13[%c0_213, %c0_214, %c0_215] : memref<1x1x64xf32, #tpu.memory_space<vmem>>, vector<1x1x64xf32>
    %354 = vector.shape_cast %353 : vector<1x1x64xf32> to vector<1x64xf32>
    %355 = vector.broadcast %354 : vector<1x64xf32> to vector<8x64xf32>
    %356 = arith.addf %352, %355 : vector<8x64xf32>
    %cst_216 = arith.constant 0.000000e+00 : f32
    %357 = vector.broadcast %cst_216 : f32 to vector<8x64xf32>
    %358 = arith.maximumf %356, %357 : vector<8x64xf32>
    %c0_217 = arith.constant 0 : index
    %c0_218 = arith.constant 0 : index
    %c0_219 = arith.constant 0 : index
    %359 = vector.load %arg14[%c0_217, %c0_218, %c0_219] : memref<1x64x32xf32, #tpu.memory_space<vmem>>, vector<1x64x32xf32>
    %360 = vector.shape_cast %359 : vector<1x64x32xf32> to vector<64x32xf32>
    %cst_220 = arith.constant dense<0.000000e+00> : vector<8x32xf32>
    %361 = tpu.matmul %358, %360, %cst_220 {dimension_numbers = #tpu.dot_dimension_numbers<[1], [0], [0], [1], [0, 0, 1, 1], [], []>} : vector<8x64xf32>, vector<64x32xf32>, vector<8x32xf32> -> vector<8x32xf32>
    %362 = arith.addf %323, %361 : vector<8x32xf32>
    %c0_221 = arith.constant 0 : index
    %c0_222 = arith.constant 0 : index
    %c0_223 = arith.constant 0 : index
    %363 = vector.load %arg15[%c0_221, %c0_222, %c0_223] : memref<1x1x32xf32, #tpu.memory_space<vmem>>, vector<1x1x32xf32>
    %364 = vector.shape_cast %363 : vector<1x1x32xf32> to vector<1x32xf32>
    %365 = vector.broadcast %364 : vector<1x32xf32> to vector<8x32xf32>
    %366 = arith.addf %362, %365 : vector<8x32xf32>
    %c8_i32_224 = arith.constant 8 : i32
    %367 = arith.addi %c8_i32_224, %320 : i32
    %368 = arith.index_cast %367 : i32 to index
    %c0_225 = arith.constant 0 : index
    %369 = vector.load %arg19[%368, %c0_225] : memref<16x32xf32, #tpu.memory_space<vmem>>, vector<8x32xf32>
    tpu.vector_store %arg19[%368, %c0_225], %366 {strides = array<i32>} : memref<16x32xf32, #tpu.memory_space<vmem>>, vector<8x32xf32>,
    %c1_i32_226 = arith.constant 1 : i32
    %370 = arith.cmpi eq, %arg1, %c1_i32_226 : i32
    %371 = arith.extui %370 : i1 to i32
    %c0_i32_227 = arith.constant 0 : i32
    %372 = arith.cmpi ne, %371, %c0_i32_227 : i32
    scf.if %372 {
      %c0_229 = arith.constant 0 : index
      %c0_230 = arith.constant 0 : index
      %373 = vector.load %arg16[%c0_229, %c0_230] : memref<1x32xf32, #tpu.memory_space<vmem>>, vector<1x32xf32>
      %c0_231 = arith.constant 0 : index
      %c0_232 = arith.constant 0 : index
      %374 = vector.load %arg17[%c0_231, %c0_232] : memref<1x32xf32, #tpu.memory_space<vmem>>, vector<1x32xf32>
      %cst_233 = arith.constant dense<0.000000e+00> : vector<8xf32>
      %375 = vector.multi_reduction <add>, %366, %cst_233 [1] : vector<8x32xf32> to vector<8xf32>
      %376 = vector.shape_cast %375 : vector<8xf32> to vector<8x1xf32>
      %cst_234 = arith.constant 3.200000e+01 : f32
      %377 = vector.broadcast %cst_234 : f32 to vector<8x1xf32>
      %378 = arith.divf %376, %377 : vector<8x1xf32>
      %379 = vector.broadcast %378 : vector<8x1xf32> to vector<8x32xf32>
      %380 = arith.subf %366, %379 : vector<8x32xf32>
      %381 = arith.mulf %380, %380 : vector<8x32xf32>
      %cst_235 = arith.constant dense<0.000000e+00> : vector<8xf32>
      %382 = vector.multi_reduction <add>, %381, %cst_235 [1] : vector<8x32xf32> to vector<8xf32>
      %383 = vector.shape_cast %382 : vector<8xf32> to vector<8x1xf32>
      %cst_236 = arith.constant 3.100000e+01 : f32
      %384 = vector.broadcast %cst_236 : f32 to vector<8x1xf32>
      %385 = arith.divf %383, %384 : vector<8x1xf32>
      %386 = vector.broadcast %378 : vector<8x1xf32> to vector<8x32xf32>
      %387 = arith.subf %366, %386 : vector<8x32xf32>
      %388 = vector.broadcast %373 : vector<1x32xf32> to vector<8x32xf32>
      %389 = arith.mulf %388, %387 : vector<8x32xf32>
      %390 = math.sqrt %385 : vector<8x1xf32>
      %cst_237 = arith.constant 9.99999997E-7 : f32
      %391 = vector.broadcast %cst_237 : f32 to vector<8x1xf32>
      %392 = arith.addf %390, %391 : vector<8x1xf32>
      %393 = vector.broadcast %392 : vector<8x1xf32> to vector<8x32xf32>
      %394 = arith.divf %389, %393 : vector<8x32xf32>
      %395 = vector.broadcast %374 : vector<1x32xf32> to vector<8x32xf32>
      %396 = arith.addf %394, %395 : vector<8x32xf32>
      %c1_238 = arith.constant 1 : index
      %397 = arith.index_cast %320 : i32 to index
      %c0_239 = arith.constant 0 : index
      %398 = vector.load %arg18[%c1_238, %397, %c0_239] : memref<2x8x32xf32, #tpu.memory_space<vmem>>, vector<1x8x32xf32>
      %399 = vector.shape_cast %398 : vector<1x8x32xf32> to vector<8x32xf32>
      %400 = vector.shape_cast %396 : vector<8x32xf32> to vector<1x8x32xf32>
      tpu.vector_store %arg18[%c1_238, %397, %c0_239], %400 {strides = array<i32>} : memref<2x8x32xf32, #tpu.memory_space<vmem>>, vector<1x8x32xf32>,
    } else {
    }
    %c1_i32_228 = arith.constant 1 : i32
    return
  }
  func.func @transform_0(%arg0: i32, %arg1: i32) -> (i32, i32, i32) {
    %c0_i32 = arith.constant 0 : i32
    %c0_i32_0 = arith.constant 0 : i32
    %c0_i32_1 = arith.constant 0 : i32
    return %arg0, %c0_i32, %c0_i32_0 : i32, i32, i32
  }
  func.func @transform_1(%arg0: i32, %arg1: i32) -> (i32, i32, i32) {
    %c0_i32 = arith.constant 0 : i32
    %c0_i32_0 = arith.constant 0 : i32
    %c0_i32_1 = arith.constant 0 : i32
    return %arg0, %c0_i32, %c0_i32_0 : i32, i32, i32
  }
  func.func @transform_2(%arg0: i32, %arg1: i32) -> (i32, i32, i32) {
    %c0_i32 = arith.constant 0 : i32
    %c0_i32_0 = arith.constant 0 : i32
    %c0_i32_1 = arith.constant 0 : i32
    return %arg1, %c0_i32, %c0_i32_0 : i32, i32, i32
  }
  func.func @transform_3(%arg0: i32, %arg1: i32) -> (i32, i32, i32) {
    %c0_i32 = arith.constant 0 : i32
    %c0_i32_0 = arith.constant 0 : i32
    %c0_i32_1 = arith.constant 0 : i32
    return %arg1, %c0_i32, %c0_i32_0 : i32, i32, i32
  }
  func.func @transform_4(%arg0: i32, %arg1: i32) -> (i32, i32, i32) {
    %c0_i32 = arith.constant 0 : i32
    %c0_i32_0 = arith.constant 0 : i32
    %c0_i32_1 = arith.constant 0 : i32
    return %arg1, %c0_i32, %c0_i32_0 : i32, i32, i32
  }
  func.func @transform_5(%arg0: i32, %arg1: i32) -> (i32, i32, i32) {
    %c0_i32 = arith.constant 0 : i32
    %c0_i32_0 = arith.constant 0 : i32
    %c0_i32_1 = arith.constant 0 : i32
    return %arg1, %c0_i32, %c0_i32_0 : i32, i32, i32
  }
  func.func @transform_6(%arg0: i32, %arg1: i32) -> (i32, i32, i32) {
    %c0_i32 = arith.constant 0 : i32
    %c0_i32_0 = arith.constant 0 : i32
    %c0_i32_1 = arith.constant 0 : i32
    return %arg1, %c0_i32, %c0_i32_0 : i32, i32, i32
  }
  func.func @transform_7(%arg0: i32, %arg1: i32) -> (i32, i32, i32) {
    %c0_i32 = arith.constant 0 : i32
    %c0_i32_0 = arith.constant 0 : i32
    %c0_i32_1 = arith.constant 0 : i32
    return %arg1, %c0_i32, %c0_i32_0 : i32, i32, i32
  }
  func.func @transform_8(%arg0: i32, %arg1: i32) -> (i32, i32, i32) {
    %c0_i32 = arith.constant 0 : i32
    %c0_i32_0 = arith.constant 0 : i32
    %c0_i32_1 = arith.constant 0 : i32
    return %arg1, %c0_i32, %c0_i32_0 : i32, i32, i32
  }
  func.func @transform_9(%arg0: i32, %arg1: i32) -> (i32, i32, i32) {
    %c0_i32 = arith.constant 0 : i32
    %c0_i32_0 = arith.constant 0 : i32
    %c0_i32_1 = arith.constant 0 : i32
    return %arg1, %c0_i32, %c0_i32_0 : i32, i32, i32
  }
  func.func @transform_10(%arg0: i32, %arg1: i32) -> (i32, i32, i32) {
    %c0_i32 = arith.constant 0 : i32
    %c0_i32_0 = arith.constant 0 : i32
    %c0_i32_1 = arith.constant 0 : i32
    return %arg1, %c0_i32, %c0_i32_0 : i32, i32, i32
  }
  func.func @transform_11(%arg0: i32, %arg1: i32) -> (i32, i32, i32) {
    %c0_i32 = arith.constant 0 : i32
    %c0_i32_0 = arith.constant 0 : i32
    %c0_i32_1 = arith.constant 0 : i32
    return %arg1, %c0_i32, %c0_i32_0 : i32, i32, i32
  }
  func.func @transform_12(%arg0: i32, %arg1: i32) -> (i32, i32, i32) {
    %c0_i32 = arith.constant 0 : i32
    %c0_i32_0 = arith.constant 0 : i32
    %c0_i32_1 = arith.constant 0 : i32
    return %arg1, %c0_i32, %c0_i32_0 : i32, i32, i32
  }
  func.func @transform_13(%arg0: i32, %arg1: i32) -> (i32, i32, i32) {
    %c0_i32 = arith.constant 0 : i32
    %c0_i32_0 = arith.constant 0 : i32
    %c0_i32_1 = arith.constant 0 : i32
    return %arg1, %c0_i32, %c0_i32_0 : i32, i32, i32
  }
  func.func @transform_14(%arg0: i32, %arg1: i32) -> (i32, i32) {
    %c0_i32 = arith.constant 0 : i32
    %c0_i32_0 = arith.constant 0 : i32
    %c0_i32_1 = arith.constant 0 : i32
    return %c0_i32, %c0_i32_0 : i32, i32
  }
  func.func @transform_15(%arg0: i32, %arg1: i32) -> (i32, i32) {
    %c0_i32 = arith.constant 0 : i32
    %c0_i32_0 = arith.constant 0 : i32
    %c0_i32_1 = arith.constant 0 : i32
    return %c0_i32, %c0_i32_0 : i32, i32
  }
  func.func @transform_16(%arg0: i32, %arg1: i32) -> (i32, i32, i32) {
    %c0_i32 = arith.constant 0 : i32
    %c0_i32_0 = arith.constant 0 : i32
    %c0_i32_1 = arith.constant 0 : i32
    return %arg0, %c0_i32, %c0_i32_0 : i32, i32, i32
  }
}

</mosaic_0001>

<llo_original>
// kernel: tpu_custom_call.1
$region0: #{tpu_custom_call.1}
  #allocation0 [shape = 'u32[]', space=smem, size = 0x4, offset = 0x4, fixed_abs, tag = 'smem constant byte address 0x4 - core index']
  #allocation1 [shape = 'u32[144,128]{1,0:T(1,128)}', space=vmem, size = 0x12000, scoped, tag = 'internal scratch']
  #allocation2 [shape = 'f32[16,32]{1,0:T(8,128)}', space=vmem, size = 0x2000, scoped, tag = 'scratch operand']
  #allocation3 [shape = 'f32[8,96]{1,0:T(8,128)}', space=vmem, size = 0x1000, scoped, tag = 'scratch operand']
  #allocation4 [shape = 'f32[8,32]{1,0:T(8,128)}', space=vmem, size = 0x1000, scoped, tag = 'scratch operand']
  #allocation5 [shape = 'f32[2,1,8]{2,1,0:T(1,128)}', space=vmem, size = 0x400, scoped, tag = 'scratch operand']
  %s0 = inlined_call_operand.hbm [shape: f32[2,8,32], index: 0, kind: input, shape index: {}]
  %s1 = inlined_call_operand.vmem [shape: f32[2,1,8], index: 1, kind: input, shape index: {}]
  %s2 = inlined_call_operand.vmem [shape: f32[2,1,32], index: 2, kind: input, shape index: {}]
  %s3 = inlined_call_operand.vmem [shape: f32[2,1,32], index: 3, kind: input, shape index: {}]
  %s4 = inlined_call_operand.vmem [shape: f32[2,32,96], index: 4, kind: input, shape index: {}]
  %s5 = inlined_call_operand.vmem [shape: f32[2,1,96], index: 5, kind: input, shape index: {}]
  %s6 = inlined_call_operand.vmem [shape: f32[2,32,32], index: 6, kind: input, shape index: {}]
  %s7 = inlined_call_operand.vmem [shape: f32[2,1,32], index: 7, kind: input, shape index: {}]
  %s8 = inlined_call_operand.vmem [shape: f32[2,1,32], index: 8, kind: input, shape index: {}]
  %s9 = inlined_call_operand.vmem [shape: f32[2,1,32], index: 9, kind: input, shape index: {}]
  %s10 = inlined_call_operand.vmem [shape: f32[2,32,64], index: 10, kind: input, shape index: {}]
  %s11 = inlined_call_operand.vmem [shape: f32[2,1,64], index: 11, kind: input, shape index: {}]
  %s12 = inlined_call_operand.vmem [shape: f32[2,64,32], index: 12, kind: input, shape index: {}]
  %s13 = inlined_call_operand.vmem [shape: f32[2,1,32], index: 13, kind: input, shape index: {}]
  %s14 = inlined_call_operand.vmem [shape: f32[1,32], index: 14, kind: input, shape index: {}]
  %s15 = inlined_call_operand.vmem [shape: f32[1,32], index: 15, kind: input, shape index: {}]
  %s16 = inlined_call_operand.hbm [shape: f32[2,8,32], index: 16, kind: output, shape index: {}]
  %s17 = sld [smem:[#allocation0]]
  $region113: #{tpu_custom_call.1} parent=0
    _
  %s19 = ssub.s32 1, %s17
  %s20 = scalar_select 0, %s19, %s17
  $region1: #{tpu_custom_call.1} parent=0
    #allocation6 [shape = 'u8[8192]{0}', space=vmem, size = 0x2000, scoped, tag = 'input window, operand 0, single buffered']
    #allocation7 [shape = 's32[2]{0}', space=sflag, size = 0x8, scoped, tag = 'scoped memory for tpu_custom_call.1']
    #allocation8 [shape = 's32[2]{0}', space=sflag, size = 0x8, scoped, tag = 'scoped memory for tpu_custom_call.1']
    #allocation9 [shape = 'u8[8192]{0}', space=vmem, size = 0x2000, scoped, tag = 'output window, operand 0, single buffered']
    %21 = vsyncpa [#allocation7], 0
    %22 = vsyncpa [#allocation8], 0
    loop: start=0, step=1, limit=4
    $region2: #{tpu_custom_call.1} parent=1 // loop_pre_header
      _
    $region3: #{tpu_custom_call.1} parent=1 // loop_header
      %s24 = sphi 0, %s28
      %p25 = scmp.ge.s32.totalorder %s24, 4
      %s31 = sphi 0, %s43
      %s32 = sphi 0, %s39
      %s33 = sphi 0, %s31
      %s34 = sphi 0, %s32
      %s35 = sphi 0, %s33
      %s36 = sphi 0, %s34
      %s46 = sphi 0, %s48
      %s49 = sphi 0, %s46
      %s50 = sphi 0, %s49
      %s66 = sphi 0, %s50
      %s72 = sphi 0, %s74
      %s75 = sphi 0, %s72
      %s76 = sphi 0, %s75
      %s92 = sphi 0, %s76
      %s98 = sphi 0, %s100
      %s101 = sphi 0, %s98
      %s102 = sphi 0, %s101
      %s118 = sphi 0, %s102
      %s124 = sphi 0, %s126
      %s127 = sphi 0, %s124
      %s128 = sphi 0, %s127
      %s144 = sphi 0, %s128
      %s150 = sphi 0, %s152
      %s153 = sphi 0, %s150
      %s154 = sphi 0, %s153
      %s170 = sphi 0, %s154
      %s176 = sphi 0, %s178
      %s179 = sphi 0, %s176
      %s180 = sphi 0, %s179
      %s196 = sphi 0, %s180
      %s202 = sphi 0, %s204
      %s205 = sphi 0, %s202
      %s206 = sphi 0, %s205
      %s222 = sphi 0, %s206
      %s228 = sphi 0, %s230
      %s231 = sphi 0, %s228
      %s232 = sphi 0, %s231
      %s248 = sphi 0, %s232
      %s254 = sphi 0, %s256
      %s257 = sphi 0, %s254
      %s258 = sphi 0, %s257
      %s274 = sphi 0, %s258
      %s280 = sphi 0, %s282
      %s283 = sphi 0, %s280
      %s284 = sphi 0, %s283
      %s300 = sphi 0, %s284
      %s306 = sphi 0, %s308
      %s309 = sphi 0, %s306
      %s310 = sphi 0, %s309
      %s326 = sphi 0, %s310
      %s332 = sphi 0, %s334
      %s335 = sphi 0, %s332
      %s336 = sphi 0, %s335
      %s352 = sphi 0, %s336
      %s358 = sphi 0, %s360
      %s361 = sphi 0, %s358
      %s362 = sphi 0, %s361
      %s378 = sphi 0, %s362
      %s384 = sphi 0, %s386
      %s387 = sphi 0, %s384
      %s388 = sphi 0, %s387
      %s404 = sphi 0, %s388
      %s408 = sphi 0, %s408
      %s410 = sphi 0, %s408
      %s411 = sphi 0, %s410
      %s425 = sphi 0, %s411
      %s429 = sphi 0, %s429
      %s431 = sphi 0, %s429
      %s432 = sphi 0, %s431
      %s446 = sphi 0, %s432
      %s452 = sphi 0, %s454
      %s455 = sphi 0, %s452
      %s456 = sphi 0, %s455
      %s472 = sphi 0, %s456
    $region4: #{tpu_custom_call.1} parent=1 // loop_header_branch
      %27 = sbr.rel (%p25) target = $region8
    $region5: #{tpu_custom_call.1} parent=1 // loop_body
      %s29 = ssub.s32 %s24, 1
      %s30 = ssub.s32 %s24, 2
      %s37 = sadd.s32 1, %s32
      %p38 = scmp.ge.s32.totalorder %s37, 2
      %s39 = scalar_select %p38, 0, %s37
      %s40 = sadd.s32 1, %s31
      %s41 = scalar_select %p38, %s40, %s31
      %p42 = scmp.ge.s32.totalorder %s41, 1
      %s43 = scalar_select %p42, 0, %s41
      %s44 = ssub.s32 %s31, %s43
      %p45 = scmp.eq.s32.totalorder %s44, 0
      %s47 = sadd.s32 %s46, 1
      %s48 = scalar_select %p45, %s46, %s47
      %p51 = pneg %p45
      %p52 = scmp.eq.s32.totalorder %s24, 1
      %p53 = por %p51, %p52
      %p54 = scmp.ne.s32.totalorder %s46, %s49
      %p55 = scmp.eq.s32.totalorder %s24, 0
      %p56 = por %p54, %p55
      %p57 = scmp.ne.s32.totalorder %s46, %s49
      %p58 = scmp.eq.s32.totalorder %s29, 1
      %p59 = por %p57, %p58
      %p60 = scmp.ne.s32.totalorder %s49, %s50
      %p61 = scmp.eq.s32.totalorder %s29, 0
      %p62 = por %p60, %p61
      %p63 = scmp.ne.s32.totalorder %s49, %s50
      %p64 = scmp.eq.s32.totalorder %s30, 1
      %p65 = por %p63, %p64
      %p67 = scmp.ne.s32.totalorder %s50, %s66
      %p68 = scmp.eq.s32.totalorder %s30, 0
      %p69 = por %p67, %p68
      %s70 = ssub.s32 %s31, %s43
      %p71 = scmp.eq.s32.totalorder %s70, 0
      %s73 = sadd.s32 %s72, 1
      %s74 = scalar_select %p71, %s72, %s73
      %p77 = pneg %p71
      %p78 = scmp.eq.s32.totalorder %s24, 1
      %p79 = por %p77, %p78
      %p80 = scmp.ne.s32.totalorder %s72, %s75
      %p81 = scmp.eq.s32.totalorder %s24, 0
      %p82 = por %p80, %p81
      %p83 = scmp.ne.s32.totalorder %s72, %s75
      %p84 = scmp.eq.s32.totalorder %s29, 1
      %p85 = por %p83, %p84
      %p86 = scmp.ne.s32.totalorder %s75, %s76
      %p87 = scmp.eq.s32.totalorder %s29, 0
      %p88 = por %p86, %p87
      %p89 = scmp.ne.s32.totalorder %s75, %s76
      %p90 = scmp.eq.s32.totalorder %s30, 1
      %p91 = por %p89, %p90
      %p93 = scmp.ne.s32.totalorder %s76, %s92
      %p94 = scmp.eq.s32.totalorder %s30, 0
      %p95 = por %p93, %p94
      %s96 = ssub.s32 %s32, %s39
      %p97 = scmp.eq.s32.totalorder %s96, 0
      %s99 = sadd.s32 %s98, 1
      %s100 = scalar_select %p97, %s98, %s99
      %p103 = pneg %p97
      %p104 = scmp.eq.s32.totalorder %s24, 1
      %p105 = por %p103, %p104
      %p106 = scmp.ne.s32.totalorder %s98, %s101
      %p107 = scmp.eq.s32.totalorder %s24, 0
      %p108 = por %p106, %p107
      %p109 = scmp.ne.s32.totalorder %s98, %s101
      %p110 = scmp.eq.s32.totalorder %s29, 1
      %p111 = por %p109, %p110
      %p112 = scmp.ne.s32.totalorder %s101, %s102
      %p113 = scmp.eq.s32.totalorder %s29, 0
      %p114 = por %p112, %p113
      %p115 = scmp.ne.s32.totalorder %s101, %s102
      %p116 = scmp.eq.s32.totalorder %s30, 1
      %p117 = por %p115, %p116
      %p119 = scmp.ne.s32.totalorder %s102, %s118
      %p120 = scmp.eq.s32.totalorder %s30, 0
      %p121 = por %p119, %p120
      %s122 = ssub.s32 %s32, %s39
      %p123 = scmp.eq.s32.totalorder %s122, 0
      %s125 = sadd.s32 %s124, 1
      %s126 = scalar_select %p123, %s124, %s125
      %p129 = pneg %p123
      %p130 = scmp.eq.s32.totalorder %s24, 1
      %p131 = por %p129, %p130
      %p132 = scmp.ne.s32.totalorder %s124, %s127
      %p133 = scmp.eq.s32.totalorder %s24, 0
      %p134 = por %p132, %p133
      %p135 = scmp.ne.s32.totalorder %s124, %s127
      %p136 = scmp.eq.s32.totalorder %s29, 1
      %p137 = por %p135, %p136
      %p138 = scmp.ne.s32.totalorder %s127, %s128
      %p139 = scmp.eq.s32.totalorder %s29, 0
      %p140 = por %p138, %p139
      %p141 = scmp.ne.s32.totalorder %s127, %s128
      %p142 = scmp.eq.s32.totalorder %s30, 1
      %p143 = por %p141, %p142
      %p145 = scmp.ne.s32.totalorder %s128, %s144
      %p146 = scmp.eq.s32.totalorder %s30, 0
      %p147 = por %p145, %p146
      %s148 = ssub.s32 %s32, %s39
      %p149 = scmp.eq.s32.totalorder %s148, 0
      %s151 = sadd.s32 %s150, 1
      %s152 = scalar_select %p149, %s150, %s151
      %p155 = pneg %p149
      %p156 = scmp.eq.s32.totalorder %s24, 1
      %p157 = por %p155, %p156
      %p158 = scmp.ne.s32.totalorder %s150, %s153
      %p159 = scmp.eq.s32.totalorder %s24, 0
      %p160 = por %p158, %p159
      %p161 = scmp.ne.s32.totalorder %s150, %s153
      %p162 = scmp.eq.s32.totalorder %s29, 1
      %p163 = por %p161, %p162
      %p164 = scmp.ne.s32.totalorder %s153, %s154
      %p165 = scmp.eq.s32.totalorder %s29, 0
      %p166 = por %p164, %p165
      %p167 = scmp.ne.s32.totalorder %s153, %s154
      %p168 = scmp.eq.s32.totalorder %s30, 1
      %p169 = por %p167, %p168
      %p171 = scmp.ne.s32.totalorder %s154, %s170
      %p172 = scmp.eq.s32.totalorder %s30, 0
      %p173 = por %p171, %p172
      %s174 = ssub.s32 %s32, %s39
      %p175 = scmp.eq.s32.totalorder %s174, 0
      %s177 = sadd.s32 %s176, 1
      %s178 = scalar_select %p175, %s176, %s177
      %p181 = pneg %p175
      %p182 = scmp.eq.s32.totalorder %s24, 1
      %p183 = por %p181, %p182
      %p184 = scmp.ne.s32.totalorder %s176, %s179
      %p185 = scmp.eq.s32.totalorder %s24, 0
      %p186 = por %p184, %p185
      %p187 = scmp.ne.s32.totalorder %s176, %s179
      %p188 = scmp.eq.s32.totalorder %s29, 1
      %p189 = por %p187, %p188
      %p190 = scmp.ne.s32.totalorder %s179, %s180
      %p191 = scmp.eq.s32.totalorder %s29, 0
      %p192 = por %p190, %p191
      %p193 = scmp.ne.s32.totalorder %s179, %s180
      %p194 = scmp.eq.s32.totalorder %s30, 1
      %p195 = por %p193, %p194
      %p197 = scmp.ne.s32.totalorder %s180, %s196
      %p198 = scmp.eq.s32.totalorder %s30, 0
      %p199 = por %p197, %p198
      %s200 = ssub.s32 %s32, %s39
      %p201 = scmp.eq.s32.totalorder %s200, 0
      %s203 = sadd.s32 %s202, 1
      %s204 = scalar_select %p201, %s202, %s203
      %p207 = pneg %p201
      %p208 = scmp.eq.s32.totalorder %s24, 1
      %p209 = por %p207, %p208
      %p210 = scmp.ne.s32.totalorder %s202, %s205
      %p211 = scmp.eq.s32.totalorder %s24, 0
      %p212 = por %p210, %p211
      %p213 = scmp.ne.s32.totalorder %s202, %s205
      %p214 = scmp.eq.s32.totalorder %s29, 1
      %p215 = por %p213, %p214
      %p216 = scmp.ne.s32.totalorder %s205, %s206
      %p217 = scmp.eq.s32.totalorder %s29, 0
      %p218 = por %p216, %p217
      %p219 = scmp.ne.s32.totalorder %s205, %s206
      %p220 = scmp.eq.s32.totalorder %s30, 1
      %p221 = por %p219, %p220
      %p223 = scmp.ne.s32.totalorder %s206, %s222
      %p224 = scmp.eq.s32.totalorder %s30, 0
      %p225 = por %p223, %p224
      %s226 = ssub.s32 %s32, %s39
      %p227 = scmp.eq.s32.totalorder %s226, 0
      %s229 = sadd.s32 %s228, 1
      %s230 = scalar_select %p227, %s228, %s229
      %p233 = pneg %p227
      %p234 = scmp.eq.s32.totalorder %s24, 1
      %p235 = por %p233, %p234
      %p236 = scmp.ne.s32.totalorder %s228, %s231
      %p237 = scmp.eq.s32.totalorder %s24, 0
      %p238 = por %p236, %p237
      %p239 = scmp.ne.s32.totalorder %s228, %s231
      %p240 = scmp.eq.s32.totalorder %s29, 1
      %p241 = por %p239, %p240
      %p242 = scmp.ne.s32.totalorder %s231, %s232
      %p243 = scmp.eq.s32.totalorder %s29, 0
      %p244 = por %p242, %p243
      %p245 = scmp.ne.s32.totalorder %s231, %s232
      %p246 = scmp.eq.s32.totalorder %s30, 1
      %p247 = por %p245, %p246
      %p249 = scmp.ne.s32.totalorder %s232, %s248
      %p250 = scmp.eq.s32.totalorder %s30, 0
      %p251 = por %p249, %p250
      %s252 = ssub.s32 %s32, %s39
      %p253 = scmp.eq.s32.totalorder %s252, 0
      %s255 = sadd.s32 %s254, 1
      %s256 = scalar_select %p253, %s254, %s255
      %p259 = pneg %p253
      %p260 = scmp.eq.s32.totalorder %s24, 1
      %p261 = por %p259, %p260
      %p262 = scmp.ne.s32.totalorder %s254, %s257
      %p263 = scmp.eq.s32.totalorder %s24, 0
      %p264 = por %p262, %p263
      %p265 = scmp.ne.s32.totalorder %s254, %s257
      %p266 = scmp.eq.s32.totalorder %s29, 1
      %p267 = por %p265, %p266
      %p268 = scmp.ne.s32.totalorder %s257, %s258
      %p269 = scmp.eq.s32.totalorder %s29, 0
      %p270 = por %p268, %p269
      %p271 = scmp.ne.s32.totalorder %s257, %s258
      %p272 = scmp.eq.s32.totalorder %s30, 1
      %p273 = por %p271, %p272
      %p275 = scmp.ne.s32.totalorder %s258, %s274
      %p276 = scmp.eq.s32.totalorder %s30, 0
      %p277 = por %p275, %p276
      %s278 = ssub.s32 %s32, %s39
      %p279 = scmp.eq.s32.totalorder %s278, 0
      %s281 = sadd.s32 %s280, 1
      %s282 = scalar_select %p279, %s280, %s281
      %p285 = pneg %p279
      %p286 = scmp.eq.s32.totalorder %s24, 1
      %p287 = por %p285, %p286
      %p288 = scmp.ne.s32.totalorder %s280, %s283
      %p289 = scmp.eq.s32.totalorder %s24, 0
      %p290 = por %p288, %p289
      %p291 = scmp.ne.s32.totalorder %s280, %s283
      %p292 = scmp.eq.s32.totalorder %s29, 1
      %p293 = por %p291, %p292
      %p294 = scmp.ne.s32.totalorder %s283, %s284
      %p295 = scmp.eq.s32.totalorder %s29, 0
      %p296 = por %p294, %p295
      %p297 = scmp.ne.s32.totalorder %s283, %s284
      %p298 = scmp.eq.s32.totalorder %s30, 1
      %p299 = por %p297, %p298
      %p301 = scmp.ne.s32.totalorder %s284, %s300
      %p302 = scmp.eq.s32.totalorder %s30, 0
      %p303 = por %p301, %p302
      %s304 = ssub.s32 %s32, %s39
      %p305 = scmp.eq.s32.totalorder %s304, 0
      %s307 = sadd.s32 %s306, 1
      %s308 = scalar_select %p305, %s306, %s307
      %p311 = pneg %p305
      %p312 = scmp.eq.s32.totalorder %s24, 1
      %p313 = por %p311, %p312
      %p314 = scmp.ne.s32.totalorder %s306, %s309
      %p315 = scmp.eq.s32.totalorder %s24, 0
      %p316 = por %p314, %p315
      %p317 = scmp.ne.s32.totalorder %s306, %s309
      %p318 = scmp.eq.s32.totalorder %s29, 1
      %p319 = por %p317, %p318
      %p320 = scmp.ne.s32.totalorder %s309, %s310
      %p321 = scmp.eq.s32.totalorder %s29, 0
      %p322 = por %p320, %p321
      %p323 = scmp.ne.s32.totalorder %s309, %s310
      %p324 = scmp.eq.s32.totalorder %s30, 1
      %p325 = por %p323, %p324
      %p327 = scmp.ne.s32.totalorder %s310, %s326
      %p328 = scmp.eq.s32.totalorder %s30, 0
      %p329 = por %p327, %p328
      %s330 = ssub.s32 %s32, %s39
      %p331 = scmp.eq.s32.totalorder %s330, 0
      %s333 = sadd.s32 %s332, 1
      %s334 = scalar_select %p331, %s332, %s333
      %p337 = pneg %p331
      %p338 = scmp.eq.s32.totalorder %s24, 1
      %p339 = por %p337, %p338
      %p340 = scmp.ne.s32.totalorder %s332, %s335
      %p341 = scmp.eq.s32.totalorder %s24, 0
      %p342 = por %p340, %p341
      %p343 = scmp.ne.s32.totalorder %s332, %s335
      %p344 = scmp.eq.s32.totalorder %s29, 1
      %p345 = por %p343, %p344
      %p346 = scmp.ne.s32.totalorder %s335, %s336
      %p347 = scmp.eq.s32.totalorder %s29, 0
      %p348 = por %p346, %p347
      %p349 = scmp.ne.s32.totalorder %s335, %s336
      %p350 = scmp.eq.s32.totalorder %s30, 1
      %p351 = por %p349, %p350
      %p353 = scmp.ne.s32.totalorder %s336, %s352
      %p354 = scmp.eq.s32.totalorder %s30, 0
      %p355 = por %p353, %p354
      %s356 = ssub.s32 %s32, %s39
      %p357 = scmp.eq.s32.totalorder %s356, 0
      %s359 = sadd.s32 %s358, 1
      %s360 = scalar_select %p357, %s358, %s359
      %p363 = pneg %p357
      %p364 = scmp.eq.s32.totalorder %s24, 1
      %p365 = por %p363, %p364
      %p366 = scmp.ne.s32.totalorder %s358, %s361
      %p367 = scmp.eq.s32.totalorder %s24, 0
      %p368 = por %p366, %p367
      %p369 = scmp.ne.s32.totalorder %s358, %s361
      %p370 = scmp.eq.s32.totalorder %s29, 1
      %p371 = por %p369, %p370
      %p372 = scmp.ne.s32.totalorder %s361, %s362
      %p373 = scmp.eq.s32.totalorder %s29, 0
      %p374 = por %p372, %p373
      %p375 = scmp.ne.s32.totalorder %s361, %s362
      %p376 = scmp.eq.s32.totalorder %s30, 1
      %p377 = por %p375, %p376
      %p379 = scmp.ne.s32.totalorder %s362, %s378
      %p380 = scmp.eq.s32.totalorder %s30, 0
      %p381 = por %p379, %p380
      %s382 = ssub.s32 %s32, %s39
      %p383 = scmp.eq.s32.totalorder %s382, 0
      %s385 = sadd.s32 %s384, 1
      %s386 = scalar_select %p383, %s384, %s385
      %p389 = pneg %p383
      %p390 = scmp.eq.s32.totalorder %s24, 1
      %p391 = por %p389, %p390
      %p392 = scmp.ne.s32.totalorder %s384, %s387
      %p393 = scmp.eq.s32.totalorder %s24, 0
      %p394 = por %p392, %p393
      %p395 = scmp.ne.s32.totalorder %s384, %s387
      %p396 = scmp.eq.s32.totalorder %s29, 1
      %p397 = por %p395, %p396
      %p398 = scmp.ne.s32.totalorder %s387, %s388
      %p399 = scmp.eq.s32.totalorder %s29, 0
      %p400 = por %p398, %p399
      %p401 = scmp.ne.s32.totalorder %s387, %s388
      %p402 = scmp.eq.s32.totalorder %s30, 1
      %p403 = por %p401, %p402
      %p405 = scmp.ne.s32.totalorder %s388, %s404
      %p406 = scmp.eq.s32.totalorder %s30, 0
      %p407 = por %p405, %p406
      %s409 = sadd.s32 %s408, 1
      %p412 = scmp.eq.s32.totalorder %s24, 1
      %p413 = scmp.ne.s32.totalorder %s408, %s410
      %p414 = scmp.eq.s32.totalorder %s24, 0
      %p415 = por %p413, %p414
      %p416 = scmp.ne.s32.totalorder %s408, %s410
      %p417 = scmp.eq.s32.totalorder %s29, 1
      %p418 = por %p416, %p417
      %p419 = scmp.ne.s32.totalorder %s410, %s411
      %p420 = scmp.eq.s32.totalorder %s29, 0
      %p421 = por %p419, %p420
      %p422 = scmp.ne.s32.totalorder %s410, %s411
      %p423 = scmp.eq.s32.totalorder %s30, 1
      %p424 = por %p422, %p423
      %p426 = scmp.ne.s32.totalorder %s411, %s425
      %p427 = scmp.eq.s32.totalorder %s30, 0
      %p428 = por %p426, %p427
      %s430 = sadd.s32 %s429, 1
      %p433 = scmp.eq.s32.totalorder %s24, 1
      %p434 = scmp.ne.s32.totalorder %s429, %s431
      %p435 = scmp.eq.s32.totalorder %s24, 0
      %p436 = por %p434, %p435
      %p437 = scmp.ne.s32.totalorder %s429, %s431
      %p438 = scmp.eq.s32.totalorder %s29, 1
      %p439 = por %p437, %p438
      %p440 = scmp.ne.s32.totalorder %s431, %s432
      %p441 = scmp.eq.s32.totalorder %s29, 0
      %p442 = por %p440, %p441
      %p443 = scmp.ne.s32.totalorder %s431, %s432
      %p444 = scmp.eq.s32.totalorder %s30, 1
      %p445 = por %p443, %p444
      %p447 = scmp.ne.s32.totalorder %s432, %s446
      %p448 = scmp.eq.s32.totalorder %s30, 0
      %p449 = por %p447, %p448
      %s450 = ssub.s32 %s31, %s43
      %p451 = scmp.eq.s32.totalorder %s450, 0
      %s453 = sadd.s32 %s452, 1
      %s454 = scalar_select %p451, %s452, %s453
      %p457 = pneg %p451
      %p458 = scmp.eq.s32.totalorder %s24, 1
      %p459 = por %p457, %p458
      %p460 = scmp.ne.s32.totalorder %s452, %s455
      %p461 = scmp.eq.s32.totalorder %s24, 0
      %p462 = por %p460, %p461
      %p463 = scmp.ne.s32.totalorder %s452, %s455
      %p464 = scmp.eq.s32.totalorder %s29, 1
      %p465 = por %p463, %p464
      %p466 = scmp.ne.s32.totalorder %s455, %s456
      %p467 = scmp.eq.s32.totalorder %s29, 0
      %p468 = por %p466, %p467
      %p469 = scmp.ne.s32.totalorder %s455, %s456
      %p470 = scmp.eq.s32.totalorder %s30, 1
      %p471 = por %p469, %p470
      %p473 = scmp.ne.s32.totalorder %s456, %s472
      %p474 = scmp.eq.s32.totalorder %s30, 0
      %p475 = por %p473, %p474
      %p476 = scmp.le.s32.totalorder 1, %s24
      %p477 = scmp.lt.s32.totalorder %s24, 3
      %p478 = pnand %p476, %p477
      %p479 = pneg %p478
      // Predicated region
      $region9: #{tpu_custom_call.1} parent=5 // pred_check
        _
      $region10: #{tpu_custom_call.1} parent=5 // pred_check_branch
        %481 = sbr.rel (%p478) target = $region12
      $region11: #{tpu_custom_call.1} parent=5 // pred_region
        %s482 = ssub.s32 %s24, 1
        // Predicated region
        $region13: #{tpu_custom_call.1} parent=11 // pred_check
          %p483 = pneg %p62
        $region14: #{tpu_custom_call.1} parent=11 // pred_check_branch
          %485 = sbr.rel (%p483) target = $region16
        $region15: #{tpu_custom_call.1} parent=11 // pred_region
          %s486 = smul.u32 2, %s33
          %s488 = ssub.s32 256, 256
          %489 = vsyncadd [#allocation7], %s488
          %s490 = smul.addr %s486, 128
          %s491 = scalar_lea.hbm %s0, %s490
          %s492 = sshll.u32 [#allocation6], 4
          %s493 = int_to_ptr.vmem [resolvable:$true] %s492
          %498 = dma.hbm_to_vmem [thread:$0]  %s491, 256, %s493, [#allocation7], 128, 128, 8
        $region16: #{tpu_custom_call.1} parent=11 // pred_fallthru
          _
        // Predicated region
        $region17: #{tpu_custom_call.1} parent=11 // pred_check
          %p499 = pneg %p88
        $region18: #{tpu_custom_call.1} parent=11 // pred_check_branch
          %501 = sbr.rel (%p499) target = $region20
        $region19: #{tpu_custom_call.1} parent=11 // pred_region
          %s502 = smul.u32 2, %s33
          %p503 = scmp.lt.s32.totalorder %s502, 1
          %s504 = scalar_select %p503, %s502, 1
          %s505 = scalar_lea.vmem %s1, %s504
          %s506 = smul.u32 2, %s33
        $region20: #{tpu_custom_call.1} parent=11 // pred_fallthru
          _
        // Predicated region
        $region21: #{tpu_custom_call.1} parent=11 // pred_check
          %p507 = pneg %p421
        $region22: #{tpu_custom_call.1} parent=11 // pred_check_branch
          %509 = sbr.rel (%p507) target = $region24
        $region23: #{tpu_custom_call.1} parent=11 // pred_region
          _
        $region24: #{tpu_custom_call.1} parent=11 // pred_fallthru
          _
        // Predicated region
        $region25: #{tpu_custom_call.1} parent=11 // pred_check
          %p510 = pneg %p442
        $region26: #{tpu_custom_call.1} parent=11 // pred_check_branch
          %512 = sbr.rel (%p510) target = $region28
        $region27: #{tpu_custom_call.1} parent=11 // pred_region
          _
        $region28: #{tpu_custom_call.1} parent=11 // pred_fallthru
          _
      $region12: #{tpu_custom_call.1} parent=5 // pred_fallthru
        _
      %p513 = scmp.lt.s32.totalorder %s24, 2
      // Predicated region
      $region29: #{tpu_custom_call.1} parent=5 // pred_check
        %p514 = pneg %p513
      $region30: #{tpu_custom_call.1} parent=5 // pred_check_branch
        %516 = sbr.rel (%p514) target = $region32
      $region31: #{tpu_custom_call.1} parent=5 // pred_region
        // Predicated region
        $region33: #{tpu_custom_call.1} parent=31 // pred_check
          %p517 = pneg %p108
        $region34: #{tpu_custom_call.1} parent=31 // pred_check_branch
          %519 = sbr.rel (%p517) target = $region36
        $region35: #{tpu_custom_call.1} parent=31 // pred_region
          %p520 = scmp.lt.s32.totalorder %s32, 1
          %s521 = scalar_select %p520, %s32, 1
          %s522 = scalar_lea.vmem %s2, %s521
        $region36: #{tpu_custom_call.1} parent=31 // pred_fallthru
          _
        // Predicated region
        $region37: #{tpu_custom_call.1} parent=31 // pred_check
          %p523 = pneg %p134
        $region38: #{tpu_custom_call.1} parent=31 // pred_check_branch
          %525 = sbr.rel (%p523) target = $region40
        $region39: #{tpu_custom_call.1} parent=31 // pred_region
          %p526 = scmp.lt.s32.totalorder %s32, 1
          %s527 = scalar_select %p526, %s32, 1
          %s528 = scalar_lea.vmem %s3, %s527
        $region40: #{tpu_custom_call.1} parent=31 // pred_fallthru
          _
        // Predicated region
        $region41: #{tpu_custom_call.1} parent=31 // pred_check
          %p529 = pneg %p160
        $region42: #{tpu_custom_call.1} parent=31 // pred_check_branch
          %531 = sbr.rel (%p529) target = $region44
        $region43: #{tpu_custom_call.1} parent=31 // pred_region
          %p532 = scmp.lt.s32.totalorder %s32, 1
          %s533 = scalar_select %p532, %s32, 1
          %s534 = smul.addr %s533, 4
          %s535 = smul.addr %s534, 8
          %s536 = scalar_lea.vmem %s4, %s535
        $region44: #{tpu_custom_call.1} parent=31 // pred_fallthru
          _
        // Predicated region
        $region45: #{tpu_custom_call.1} parent=31 // pred_check
          %p537 = pneg %p186
        $region46: #{tpu_custom_call.1} parent=31 // pred_check_branch
          %539 = sbr.rel (%p537) target = $region48
        $region47: #{tpu_custom_call.1} parent=31 // pred_region
          %p540 = scmp.lt.s32.totalorder %s32, 1
          %s541 = scalar_select %p540, %s32, 1
          %s542 = scalar_lea.vmem %s5, %s541
        $region48: #{tpu_custom_call.1} parent=31 // pred_fallthru
          _
        // Predicated region
        $region49: #{tpu_custom_call.1} parent=31 // pred_check
          %p543 = pneg %p212
        $region50: #{tpu_custom_call.1} parent=31 // pred_check_branch
          %545 = sbr.rel (%p543) target = $region52
        $region51: #{tpu_custom_call.1} parent=31 // pred_region
          %p546 = scmp.lt.s32.totalorder %s32, 1
          %s547 = scalar_select %p546, %s32, 1
          %s548 = smul.addr %s547, 4
          %s549 = smul.addr %s548, 8
          %s550 = scalar_lea.vmem %s6, %s549
        $region52: #{tpu_custom_call.1} parent=31 // pred_fallthru
          _
        // Predicated region
        $region53: #{tpu_custom_call.1} parent=31 // pred_check
          %p551 = pneg %p238
        $region54: #{tpu_custom_call.1} parent=31 // pred_check_branch
          %553 = sbr.rel (%p551) target = $region56
        $region55: #{tpu_custom_call.1} parent=31 // pred_region
          %p554 = scmp.lt.s32.totalorder %s32, 1
          %s555 = scalar_select %p554, %s32, 1
          %s556 = scalar_lea.vmem %s7, %s555
        $region56: #{tpu_custom_call.1} parent=31 // pred_fallthru
          _
        // Predicated region
        $region57: #{tpu_custom_call.1} parent=31 // pred_check
          %p557 = pneg %p264
        $region58: #{tpu_custom_call.1} parent=31 // pred_check_branch
          %559 = sbr.rel (%p557) target = $region60
        $region59: #{tpu_custom_call.1} parent=31 // pred_region
          %p560 = scmp.lt.s32.totalorder %s32, 1
          %s561 = scalar_select %p560, %s32, 1
          %s562 = scalar_lea.vmem %s8, %s561
        $region60: #{tpu_custom_call.1} parent=31 // pred_fallthru
          _
        // Predicated region
        $region61: #{tpu_custom_call.1} parent=31 // pred_check
          %p563 = pneg %p290
        $region62: #{tpu_custom_call.1} parent=31 // pred_check_branch
          %565 = sbr.rel (%p563) target = $region64
        $region63: #{tpu_custom_call.1} parent=31 // pred_region
          %p566 = scmp.lt.s32.totalorder %s32, 1
          %s567 = scalar_select %p566, %s32, 1
          %s568 = scalar_lea.vmem %s9, %s567
        $region64: #{tpu_custom_call.1} parent=31 // pred_fallthru
          _
        // Predicated region
        $region65: #{tpu_custom_call.1} parent=31 // pred_check
          %p569 = pneg %p316
        $region66: #{tpu_custom_call.1} parent=31 // pred_check_branch
          %571 = sbr.rel (%p569) target = $region68
        $region67: #{tpu_custom_call.1} parent=31 // pred_region
          %p572 = scmp.lt.s32.totalorder %s32, 1
          %s573 = scalar_select %p572, %s32, 1
          %s574 = smul.addr %s573, 4
          %s575 = smul.addr %s574, 8
          %s576 = scalar_lea.vmem %s10, %s575
        $region68: #{tpu_custom_call.1} parent=31 // pred_fallthru
          _
        // Predicated region
        $region69: #{tpu_custom_call.1} parent=31 // pred_check
          %p577 = pneg %p342
        $region70: #{tpu_custom_call.1} parent=31 // pred_check_branch
          %579 = sbr.rel (%p577) target = $region72
        $region71: #{tpu_custom_call.1} parent=31 // pred_region
          %p580 = scmp.lt.s32.totalorder %s32, 1
          %s581 = scalar_select %p580, %s32, 1
          %s582 = scalar_lea.vmem %s11, %s581
        $region72: #{tpu_custom_call.1} parent=31 // pred_fallthru
          _
        // Predicated region
        $region73: #{tpu_custom_call.1} parent=31 // pred_check
          %p583 = pneg %p368
        $region74: #{tpu_custom_call.1} parent=31 // pred_check_branch
          %585 = sbr.rel (%p583) target = $region76
        $region75: #{tpu_custom_call.1} parent=31 // pred_region
          %p586 = scmp.lt.s32.totalorder %s32, 1
          %s587 = scalar_select %p586, %s32, 1
          %s588 = smul.addr %s587, 8
          %s589 = smul.addr %s588, 8
          %s590 = scalar_lea.vmem %s12, %s589
        $region76: #{tpu_custom_call.1} parent=31 // pred_fallthru
          _
        // Predicated region
        $region77: #{tpu_custom_call.1} parent=31 // pred_check
          %p591 = pneg %p394
        $region78: #{tpu_custom_call.1} parent=31 // pred_check_branch
          %593 = sbr.rel (%p591) target = $region80
        $region79: #{tpu_custom_call.1} parent=31 // pred_region
          %p594 = scmp.lt.s32.totalorder %s32, 1
          %s595 = scalar_select %p594, %s32, 1
          %s596 = scalar_lea.vmem %s13, %s595
        $region80: #{tpu_custom_call.1} parent=31 // pred_fallthru
          _
      $region32: #{tpu_custom_call.1} parent=5 // pred_fallthru
        _
      %p597 = scmp.le.s32.totalorder 1, %s24
      %p598 = scmp.lt.s32.totalorder %s24, 3
      %p599 = pnand %p597, %p598
      %p600 = pneg %p599
      // Predicated region
      $region81: #{tpu_custom_call.1} parent=5 // pred_check
        _
      $region82: #{tpu_custom_call.1} parent=5 // pred_check_branch
        %602 = sbr.rel (%p599) target = $region84
      $region83: #{tpu_custom_call.1} parent=5 // pred_region
        %s603 = ssub.s32 %s24, 1
        // Predicated region
        $region85: #{tpu_custom_call.1} parent=83 // pred_check
          %p604 = pneg %p62
        $region86: #{tpu_custom_call.1} parent=83 // pred_check_branch
          %606 = sbr.rel (%p604) target = $region88
        $region87: #{tpu_custom_call.1} parent=83 // pred_region
          %607 = dma.done [#allocation7], 256
        $region88: #{tpu_custom_call.1} parent=83 // pred_fallthru
          _
        %p608 = pneg %p62
        %p609 = pneg %p59
        %s610 = smul.u32 2, %s33
        %p611 = scmp.lt.s32.totalorder %s610, 1
        %s612 = scalar_select %p611, %s610, 1
        %s613 = scalar_lea.vmem %s1, %s612
        %p614 = pneg %p88
        %p615 = pneg %p85
        %p616 = scmp.lt.s32.totalorder %s34, 1
        %s617 = scalar_select %p616, %s34, 1
        %s618 = scalar_lea.vmem %s2, %s617
        %p619 = pneg %p114
        %p620 = pneg %p111
        %p621 = scmp.lt.s32.totalorder %s34, 1
        %s622 = scalar_select %p621, %s34, 1
        %s623 = scalar_lea.vmem %s3, %s622
        %p624 = pneg %p140
        %p625 = pneg %p137
        %p626 = scmp.lt.s32.totalorder %s34, 1
        %s627 = scalar_select %p626, %s34, 1
        %s628 = smul.addr %s627, 4
        %s629 = smul.addr %s628, 8
        %s630 = scalar_lea.vmem %s4, %s629
        %p631 = pneg %p166
        %p632 = pneg %p163
        %p633 = scmp.lt.s32.totalorder %s34, 1
        %s634 = scalar_select %p633, %s34, 1
        %s635 = scalar_lea.vmem %s5, %s634
        %p636 = pneg %p192
        %p637 = pneg %p189
        %p638 = scmp.lt.s32.totalorder %s34, 1
        %s639 = scalar_select %p638, %s34, 1
        %s640 = smul.addr %s639, 4
        %s641 = smul.addr %s640, 8
        %s642 = scalar_lea.vmem %s6, %s641
        %p643 = pneg %p218
        %p644 = pneg %p215
        %p645 = scmp.lt.s32.totalorder %s34, 1
        %s646 = scalar_select %p645, %s34, 1
        %s647 = scalar_lea.vmem %s7, %s646
        %p648 = pneg %p244
        %p649 = pneg %p241
        %p650 = scmp.lt.s32.totalorder %s34, 1
        %s651 = scalar_select %p650, %s34, 1
        %s652 = scalar_lea.vmem %s8, %s651
        %p653 = pneg %p270
        %p654 = pneg %p267
        %p655 = scmp.lt.s32.totalorder %s34, 1
        %s656 = scalar_select %p655, %s34, 1
        %s657 = scalar_lea.vmem %s9, %s656
        %p658 = pneg %p296
        %p659 = pneg %p293
        %p660 = scmp.lt.s32.totalorder %s34, 1
        %s661 = scalar_select %p660, %s34, 1
        %s662 = smul.addr %s661, 4
        %s663 = smul.addr %s662, 8
        %s664 = scalar_lea.vmem %s10, %s663
        %p665 = pneg %p322
        %p666 = pneg %p319
        %p667 = scmp.lt.s32.totalorder %s34, 1
        %s668 = scalar_select %p667, %s34, 1
        %s669 = scalar_lea.vmem %s11, %s668
        %p670 = pneg %p348
        %p671 = pneg %p345
        %p672 = scmp.lt.s32.totalorder %s34, 1
        %s673 = scalar_select %p672, %s34, 1
        %s674 = smul.addr %s673, 8
        %s675 = smul.addr %s674, 8
        %s676 = scalar_lea.vmem %s12, %s675
        %p677 = pneg %p374
        %p678 = pneg %p371
        %p679 = scmp.lt.s32.totalorder %s34, 1
        %s680 = scalar_select %p679, %s34, 1
        %s681 = scalar_lea.vmem %s13, %s680
        %p682 = pneg %p400
        %p683 = pneg %p397
        %p684 = pneg %p421
        %p685 = pneg %p418
        %p686 = pneg %p442
        %p687 = pneg %p439
        %p688 = pneg %p468
        %p689 = pneg %p465
        %s690 = smul.u32 2, %s33
        %s691 = smul.u32 2, %s33
        %p692 = scmp.lt.s32.totalorder %s691, 1
        %s693 = scalar_select %p692, %s691, 1
        %s694 = scalar_lea.vmem %s1, %s693
        %s695 = smul.u32 2, %s33
        %p696 = scmp.lt.s32.totalorder %s34, 1
        %s697 = scalar_select %p696, %s34, 1
        %s698 = scalar_lea.vmem %s2, %s697
        %p699 = scmp.lt.s32.totalorder %s34, 1
        %s700 = scalar_select %p699, %s34, 1
        %s701 = scalar_lea.vmem %s3, %s700
        %p702 = scmp.lt.s32.totalorder %s34, 1
        %s703 = scalar_select %p702, %s34, 1
        %s704 = smul.addr %s703, 4
        %s705 = smul.addr %s704, 8
        %s706 = scalar_lea.vmem %s4, %s705
        %p707 = scmp.lt.s32.totalorder %s34, 1
        %s708 = scalar_select %p707, %s34, 1
        %s709 = scalar_lea.vmem %s5, %s708
        %p710 = scmp.lt.s32.totalorder %s34, 1
        %s711 = scalar_select %p710, %s34, 1
        %s712 = smul.addr %s711, 4
        %s713 = smul.addr %s712, 8
        %s714 = scalar_lea.vmem %s6, %s713
        %p715 = scmp.lt.s32.totalorder %s34, 1
        %s716 = scalar_select %p715, %s34, 1
        %s717 = scalar_lea.vmem %s7, %s716
        %p718 = scmp.lt.s32.totalorder %s34, 1
        %s719 = scalar_select %p718, %s34, 1
        %s720 = scalar_lea.vmem %s8, %s719
        %p721 = scmp.lt.s32.totalorder %s34, 1
        %s722 = scalar_select %p721, %s34, 1
        %s723 = scalar_lea.vmem %s9, %s722
        %p724 = scmp.lt.s32.totalorder %s34, 1
        %s725 = scalar_select %p724, %s34, 1
        %s726 = smul.addr %s725, 4
        %s727 = smul.addr %s726, 8
        %s728 = scalar_lea.vmem %s10, %s727
        %p729 = scmp.lt.s32.totalorder %s34, 1
        %s730 = scalar_select %p729, %s34, 1
        %s731 = scalar_lea.vmem %s11, %s730
        %p732 = scmp.lt.s32.totalorder %s34, 1
        %s733 = scalar_select %p732, %s34, 1
        %s734 = smul.addr %s733, 8
        %s735 = smul.addr %s734, 8
        %s736 = scalar_lea.vmem %s12, %s735
        %p737 = scmp.lt.s32.totalorder %s34, 1
        %s738 = scalar_select %p737, %s34, 1
        %s739 = scalar_lea.vmem %s13, %s738
        %s740 = smul.u32 2, %s33
        %p741 = scmp.eq.s32.totalorder %s34, 0
        // Predicated region
        $region89: #{tpu_custom_call.1} parent=83 // pred_check
          %p742 = pneg %p741
        $region90: #{tpu_custom_call.1} parent=83 // pred_check_branch
          %744 = sbr.rel (%p742) target = $region92
        $region91: #{tpu_custom_call.1} parent=83 // pred_region
          %v745 = vld [vmem:[#allocation6] sm:$0xff]
          %vm746 = vcmask 261120
          %747 = vst.msk [vmem:[#allocation2] sm:$0xff] %vm746, %v745
          %s748 = scalar_lea.vmem [#allocation6], 8
          %v749 = vld [vmem:[%s748] sm:$0xff]
          %750 = vst.msk [vmem:[#allocation2 + $0x8] sm:$0xff] %vm746, %v749
          %v751 = vld [vmem:[%s694] sm:$0x1]
          %v752 = vld [vmem:[%s694 + $0x1] sm:$0x1]
          %vm753 = vcmp.eq.f32.partialorder %v751, 0.0
          %vm754 = vcmp.eq.f32.partialorder %v752, 0.0
          %v755 = vsel %vm753, -1e+09, 0.0
          %v756 = vsel %vm754, -1e+09, 0.0
          %vm757 = vcmask 57344
          %758 = vst.msk [vmem:[#allocation5] sm:$0x1] %vm757, %v755
          %759 = vst.msk [vmem:[#allocation5 + $0x1] sm:$0x1] %vm757, %v756
        $region92: #{tpu_custom_call.1} parent=83 // pred_fallthru
          _
        %v760 = vld [vmem:[#allocation5] sm:$0x1]
        %v761 = vld [vmem:[#allocation2] sm:$0xff]
        %v762 = vld [vmem:[%s698] sm:$0x1]
        %v763 = vld [vmem:[%s701] sm:$0x1]
        %vm764 = vcmask 261120
        %v765 = vsel %vm764, %v761, 0.0
        %766 = vadd.xlane.f32.xlu0 %v765
        %v767 = vpop.xlane.xlu0 %766
        %v768 = vrcp.pop 32.0
        %v769 = vmul.f32 %v767, %v768
        %v770 = vsub.f32 %v761, %v769
        %v771 = vmul.f32 %v770, %v770
        %v772 = vsel %vm764, %v771, 0.0
        %773 = vadd.xlane.f32.xlu0 %v772
        %v774 = vpop.xlane.xlu0 %773
        %v775 = vrcp.pop 31.0
        %v776 = vmul.f32 %v774, %v775
        %v778 = vlaneseq
        %v779 = vshrl.u32 %v778, 7
        %v780 = vsub.s32 0, %v779
        %v781 = vrot.slane %v762, %v780
        %v783 = vmul.f32 %v781, %v770
        %v784 = vrsqrt.pop %v776
        %v785 = vmul.f32 %v776, %v784
        %vm786 = vcmp.eq.f32.partialorder %v776, inf
        %v787 = vsel %vm786, %v776, %v785
        %vm788 = vcmp.eq.f32.partialorder %v776, 0.0
        %v789 = vand.u32 %v776, 2147483648
        %v790 = vsel %vm788, %v789, %v787
        %v791 = vadd.f32 %v790, 1e-06
        %v792 = vrcp.pop %v791
        %v793 = vmul.f32 %v783, %v792
        %v795 = vlaneseq
        %v796 = vshrl.u32 %v795, 7
        %v797 = vsub.s32 0, %v796
        %v798 = vrot.slane %v763, %v797
        %v800 = vadd.f32 %v793, %v798
        %v801 = vld [vmem:[%s706] sm:$0xff]
        %v802 = vld [vmem:[%s706 + $0x8] sm:$0xff]
        %v803 = vld [vmem:[%s706 + $0x10] sm:$0xff]
        %v804 = vld [vmem:[%s706 + $0x18] sm:$0xff]
        %v805 = vld [vmem:[%s709] sm:$0x1]
        %v807 = vlaneseq
        %v808 = vshrl.u32 %v807, 7
        %v809 = vsub.s32 0, %v808
        %v810 = vrot.slane %v805, %v809
        %v813 = vsel %vm764, %v800, 0
        %815 = vmatprep.subr.mxu0 0.0
        %816 = vmatpush1.msra.mxu0 %v801
        %817 = vmatprep.subr.mxu0 0.0
        %818 = vmatpush1.msra.mxu0 %v802
        %819 = vmatprep.subr.mxu0 0.0
        %820 = vmatpush1.msra.mxu0 %v803
        %821 = vmatprep.subr.mxu0 0.0
        %822 = vmatpush1.msra.mxu0 %v804
        %823 = vmatprep.subr.mxu0 0.0
        %824 = vmatpush1.msra.mxu0 0.0
        %825 = vmatprep.subr.mxu0 0.0
        %826 = vmatpush1.msra.mxu0 0.0
        %827 = vmatprep.subr.mxu0 0.0
        %828 = vmatpush1.msra.mxu0 0.0
        %829 = vmatprep.subr.mxu0 0.0
        %830 = vmatpush1.msra.mxu0 0.0
        %831 = vmatprep.subr.mxu0 0.0
        %832 = vmatpush1.msra.mxu0 0.0
        %833 = vmatprep.subr.mxu0 0.0
        %834 = vmatpush1.msra.mxu0 0.0
        %835 = vmatprep.subr.mxu0 0.0
        %836 = vmatpush1.msra.mxu0 0.0
        %837 = vmatprep.subr.mxu0 0.0
        %838 = vmatpush1.msra.mxu0 0.0
        %839 = vmatprep.subr.mxu0 0.0
        %840 = vmatpush1.msra.mxu0 0.0
        %841 = vmatprep.subr.mxu0 0.0
        %842 = vmatpush1.msra.mxu0 0.0
        %843 = vmatprep.subr.mxu0 0.0
        %844 = vmatpush1.msra.mxu0 0.0
        %845 = vmatprep.subr.mxu0 0.0
        %846 = vmatpush1.msra.mxu0 0.0
        %847 = vmatprep.subr.mxu0 0.0
        %848 = vmatpush1.msra.mxu0 0.0
        %849 = vmatprep.subr.mxu0 0.0
        %850 = vmatpush1.msra.mxu0 0.0
        %851 = vmatprep.subr.mxu0 0.0
        %852 = vmatpush1.msra.mxu0 0.0
        %853 = vmatprep.subr.mxu0 0.0
        %854 = vmatpush1.msra.mxu0 0.0
        %855 = vmatprep.subr.mxu0 0.0
        %856 = vmatpush1.msra.mxu0 0.0
        %857 = vmatprep.subr.mxu0 0.0
        %858 = vmatpush1.msra.mxu0 0.0
        %859 = vmatprep.subr.mxu0 0.0
        %860 = vmatpush1.msra.mxu0 0.0
        %861 = vmatprep.subr.mxu0 0.0
        %862 = vmatpush1.msra.mxu0 0.0
        %863 = vmatprep.subr.mxu0 0.0
        %864 = vmatpush1.msra.mxu0 0.0
        %865 = vmatprep.subr.mxu0 0.0
        %866 = vmatpush1.msra.mxu0 0.0
        %867 = vmatprep.subr.mxu0 0.0
        %868 = vmatpush1.msra.mxu0 0.0
        %869 = vmatprep.subr.mxu0 0.0
        %870 = vmatpush1.msra.mxu0 0.0
        %871 = vmatprep.subr.mxu0 0.0
        %872 = vmatpush1.msra.mxu0 0.0
        %873 = vmatprep.subr.mxu0 0.0
        %874 = vmatpush1.msra.mxu0 0.0
        %875 = vmatprep.subr.mxu0 0.0
        %876 = vmatpush1.msra.mxu0 0.0
        %877 = vmatprep.subr.mxu0 0.0
        %878 = vmatpush1.msra.mxu0 0.0
        %879 = vmatprep.mubr.f32.mxu0 0.0
        %880 = vmatmul.mubr.f32.gmra.mrb[0].mxu0 %v813
        %v881 = vpop.f32.mrb[0].mxu0
        %v882 = vadd.f32 %v810, %v881
        %v883 = vpop.f32.mrb[0].mxu0
        %884 = vdwg.mxu0
        %vm885 = vcmask 785408
        %886 = vst.msk [vmem:[#allocation3] sm:$0xff] %vm885, %v882
        %v887 = vld [vmem:[#allocation3] sm:$0xff]
        %v888 = vld [vmem:[#allocation3] sm:$0xff]
        %v890 = vlaneseq
        %v891 = vshrl.u32 %v890, 7
        %v892 = vsub.s32 0, %v891
        %v893 = vrot.slane %v760, %v892
        %896 = vrot.lane.b32.xlu0 %v888, 96
        %v897 = vpop.permute.xlu0 %896
        %vm898 = vcmask 64512
        %v900 = vsel %vm898, %v887, 0
        %v902 = vsel %vm898, %v897, 0
        %904 = vmatprep.subr.mxu0 0.0
        %905 = vmatpush1.xpose.msra.mxu0 %v902
        %906 = vmatprep.subr.mxu0 0.0
        %907 = vmatpush1.xpose.msra.mxu0 0.0
        %908 = vmatprep.subr.mxu0 0.0
        %909 = vmatpush1.xpose.msra.mxu0 0.0
        %910 = vmatprep.subr.mxu0 0.0
        %911 = vmatpush1.xpose.msra.mxu0 0.0
        %912 = vmatprep.subr.mxu0 0.0
        %913 = vmatpush1.xpose.msra.mxu0 0.0
        %914 = vmatprep.subr.mxu0 0.0
        %915 = vmatpush1.xpose.msra.mxu0 0.0
        %916 = vmatprep.subr.mxu0 0.0
        %917 = vmatpush1.xpose.msra.mxu0 0.0
        %918 = vmatprep.subr.mxu0 0.0
        %919 = vmatpush1.xpose.msra.mxu0 0.0
        %920 = vmatprep.subr.mxu0 0.0
        %921 = vmatpush1.xpose.msra.mxu0 0.0
        %922 = vmatprep.subr.mxu0 0.0
        %923 = vmatpush1.xpose.msra.mxu0 0.0
        %924 = vmatprep.subr.mxu0 0.0
        %925 = vmatpush1.xpose.msra.mxu0 0.0
        %926 = vmatprep.subr.mxu0 0.0
        %927 = vmatpush1.xpose.msra.mxu0 0.0
        %928 = vmatprep.subr.mxu0 0.0
        %929 = vmatpush1.xpose.msra.mxu0 0.0
        %930 = vmatprep.subr.mxu0 0.0
        %931 = vmatpush1.xpose.msra.mxu0 0.0
        %932 = vmatprep.subr.mxu0 0.0
        %933 = vmatpush1.xpose.msra.mxu0 0.0
        %934 = vmatprep.subr.mxu0 0.0
        %935 = vmatpush1.xpose.msra.mxu0 0.0
        %936 = vmatprep.subr.mxu0 0.0
        %937 = vmatpush1.xpose.msra.mxu0 0.0
        %938 = vmatprep.subr.mxu0 0.0
        %939 = vmatpush1.xpose.msra.mxu0 0.0
        %940 = vmatprep.subr.mxu0 0.0
        %941 = vmatpush1.xpose.msra.mxu0 0.0
        %942 = vmatprep.subr.mxu0 0.0
        %943 = vmatpush1.xpose.msra.mxu0 0.0
        %944 = vmatprep.subr.mxu0 0.0
        %945 = vmatpush1.xpose.msra.mxu0 0.0
        %946 = vmatprep.subr.mxu0 0.0
        %947 = vmatpush1.xpose.msra.mxu0 0.0
        %948 = vmatprep.subr.mxu0 0.0
        %949 = vmatpush1.xpose.msra.mxu0 0.0
        %950 = vmatprep.subr.mxu0 0.0
        %951 = vmatpush1.xpose.msra.mxu0 0.0
        %952 = vmatprep.subr.mxu0 0.0
        %953 = vmatpush1.xpose.msra.mxu0 0.0
        %954 = vmatprep.subr.mxu0 0.0
        %955 = vmatpush1.xpose.msra.mxu0 0.0
        %956 = vmatprep.subr.mxu0 0.0
        %957 = vmatpush1.xpose.msra.mxu0 0.0
        %958 = vmatprep.subr.mxu0 0.0
        %959 = vmatpush1.xpose.msra.mxu0 0.0
        %960 = vmatprep.subr.mxu0 0.0
        %961 = vmatpush1.xpose.msra.mxu0 0.0
        %962 = vmatprep.subr.mxu0 0.0
        %963 = vmatpush1.xpose.msra.mxu0 0.0
        %964 = vmatprep.subr.mxu0 0.0
        %965 = vmatpush1.xpose.msra.mxu0 0.0
        %966 = vmatprep.subr.mxu0 0.0
        %967 = vmatpush1.xpose.msra.mxu0 0.0
        %968 = vmatprep.mubr.f32.mxu0 0.0
        %969 = vmatmul.mubr.f32.gmra.mrb[0].mxu0 %v900
        %v970 = vpop.f32.mrb[0].mxu0
        %v971 = vadd.f32 %v893, %v970
        %v972 = vpop.f32.mrb[0].mxu0
        %973 = vdwg.mxu0
        %v974 = vsel %vm898, %v971, -inf
        %975 = vmax.xlane.f32.xlu0 %v974
        %v976 = vpop.xlane.xlu0 %975
        %v977 = vsub.f32 %v971, %v976
        %v978 = vmul.f32 %v977, 1.442695
        %v979 = vpow.pop %v978
        %v980 = vsel %vm898, %v979, 0.0
        %981 = vadd.xlane.f32.xlu0 %v980
        %v982 = vpop.xlane.xlu0 %981
        %v983 = vrcp.pop %v982
        %v984 = vmul.f32 %v979, %v983
        %985 = vrot.lane.b32.xlu0 %v888, 64
        %v986 = vpop.permute.xlu0 %985
        %v989 = vsel %vm898, %v984, 0
        %991 = vmatprep.subr.mxu0 0.0
        %992 = vmatpush1.msra.mxu0 %v986
        %993 = vmatprep.subr.mxu0 0.0
        %994 = vmatpush1.msra.mxu0 0.0
        %995 = vmatprep.subr.mxu0 0.0
        %996 = vmatpush1.msra.mxu0 0.0
        %997 = vmatprep.subr.mxu0 0.0
        %998 = vmatpush1.msra.mxu0 0.0
        %999 = vmatprep.subr.mxu0 0.0
        %1000 = vmatpush1.msra.mxu0 0.0
        %1001 = vmatprep.subr.mxu0 0.0
        %1002 = vmatpush1.msra.mxu0 0.0
        %1003 = vmatprep.subr.mxu0 0.0
        %1004 = vmatpush1.msra.mxu0 0.0
        %1005 = vmatprep.subr.mxu0 0.0
        %1006 = vmatpush1.msra.mxu0 0.0
        %1007 = vmatprep.subr.mxu0 0.0
        %1008 = vmatpush1.msra.mxu0 0.0
        %1009 = vmatprep.subr.mxu0 0.0
        %1010 = vmatpush1.msra.mxu0 0.0
        %1011 = vmatprep.subr.mxu0 0.0
        %1012 = vmatpush1.msra.mxu0 0.0
        %1013 = vmatprep.subr.mxu0 0.0
        %1014 = vmatpush1.msra.mxu0 0.0
        %1015 = vmatprep.subr.mxu0 0.0
        %1016 = vmatpush1.msra.mxu0 0.0
        %1017 = vmatprep.subr.mxu0 0.0
        %1018 = vmatpush1.msra.mxu0 0.0
        %1019 = vmatprep.subr.mxu0 0.0
        %1020 = vmatpush1.msra.mxu0 0.0
        %1021 = vmatprep.subr.mxu0 0.0
        %1022 = vmatpush1.msra.mxu0 0.0
        %1023 = vmatprep.subr.mxu0 0.0
        %1024 = vmatpush1.msra.mxu0 0.0
        %1025 = vmatprep.subr.mxu0 0.0
        %1026 = vmatpush1.msra.mxu0 0.0
        %1027 = vmatprep.subr.mxu0 0.0
        %1028 = vmatpush1.msra.mxu0 0.0
        %1029 = vmatprep.subr.mxu0 0.0
        %1030 = vmatpush1.msra.mxu0 0.0
        %1031 = vmatprep.subr.mxu0 0.0
        %1032 = vmatpush1.msra.mxu0 0.0
        %1033 = vmatprep.subr.mxu0 0.0
        %1034 = vmatpush1.msra.mxu0 0.0
        %1035 = vmatprep.subr.mxu0 0.0
        %1036 = vmatpush1.msra.mxu0 0.0
        %1037 = vmatprep.subr.mxu0 0.0
        %1038 = vmatpush1.msra.mxu0 0.0
        %1039 = vmatprep.subr.mxu0 0.0
        %1040 = vmatpush1.msra.mxu0 0.0
        %1041 = vmatprep.subr.mxu0 0.0
        %1042 = vmatpush1.msra.mxu0 0.0
        %1043 = vmatprep.subr.mxu0 0.0
        %1044 = vmatpush1.msra.mxu0 0.0
        %1045 = vmatprep.subr.mxu0 0.0
        %1046 = vmatpush1.msra.mxu0 0.0
        %1047 = vmatprep.subr.mxu0 0.0
        %1048 = vmatpush1.msra.mxu0 0.0
        %1049 = vmatprep.subr.mxu0 0.0
        %1050 = vmatpush1.msra.mxu0 0.0
        %1051 = vmatprep.subr.mxu0 0.0
        %1052 = vmatpush1.msra.mxu0 0.0
        %1053 = vmatprep.subr.mxu0 0.0
        %1054 = vmatpush1.msra.mxu0 0.0
        %1055 = vmatprep.mubr.f32.mxu0 0.0
        %1056 = vmatmul.mubr.f32.gmra.mrb[0].mxu0 %v989
        %v1057 = vpop.f32.mrb[0].mxu0
        %v1058 = vadd.f32 0.0, %v1057
        %v1059 = vpop.f32.mrb[0].mxu0
        %1060 = vdwg.mxu0
        %1061 = vst.msk [vmem:[#allocation4] sm:$0xff] %vm898, %v1058
        %v1062 = vld [vmem:[#allocation3] sm:$0xff]
        %v1063 = vld [vmem:[#allocation3] sm:$0xff]
        %1065 = vrot.lane.b32.xlu0 %v1062, 120
        %v1066 = vpop.permute.xlu0 %1065
        %1068 = vrot.lane.b32.xlu0 %v1063, 88
        %v1069 = vpop.permute.xlu0 %1068
        %v1070 = vsel %vm898, %v1066, 0
        %v1072 = vsel %vm898, %v1069, 0
        %1074 = vmatprep.subr.mxu0 0.0
        %1075 = vmatpush1.xpose.msra.mxu0 %v1072
        %1076 = vmatprep.subr.mxu0 0.0
        %1077 = vmatpush1.xpose.msra.mxu0 0.0
        %1078 = vmatprep.subr.mxu0 0.0
        %1079 = vmatpush1.xpose.msra.mxu0 0.0
        %1080 = vmatprep.subr.mxu0 0.0
        %1081 = vmatpush1.xpose.msra.mxu0 0.0
        %1082 = vmatprep.subr.mxu0 0.0
        %1083 = vmatpush1.xpose.msra.mxu0 0.0
        %1084 = vmatprep.subr.mxu0 0.0
        %1085 = vmatpush1.xpose.msra.mxu0 0.0
        %1086 = vmatprep.subr.mxu0 0.0
        %1087 = vmatpush1.xpose.msra.mxu0 0.0
        %1088 = vmatprep.subr.mxu0 0.0
        %1089 = vmatpush1.xpose.msra.mxu0 0.0
        %1090 = vmatprep.subr.mxu0 0.0
        %1091 = vmatpush1.xpose.msra.mxu0 0.0
        %1092 = vmatprep.subr.mxu0 0.0
        %1093 = vmatpush1.xpose.msra.mxu0 0.0
        %1094 = vmatprep.subr.mxu0 0.0
        %1095 = vmatpush1.xpose.msra.mxu0 0.0
        %1096 = vmatprep.subr.mxu0 0.0
        %1097 = vmatpush1.xpose.msra.mxu0 0.0
        %1098 = vmatprep.subr.mxu0 0.0
        %1099 = vmatpush1.xpose.msra.mxu0 0.0
        %1100 = vmatprep.subr.mxu0 0.0
        %1101 = vmatpush1.xpose.msra.mxu0 0.0
        %1102 = vmatprep.subr.mxu0 0.0
        %1103 = vmatpush1.xpose.msra.mxu0 0.0
        %1104 = vmatprep.subr.mxu0 0.0
        %1105 = vmatpush1.xpose.msra.mxu0 0.0
        %1106 = vmatprep.subr.mxu0 0.0
        %1107 = vmatpush1.xpose.msra.mxu0 0.0
        %1108 = vmatprep.subr.mxu0 0.0
        %1109 = vmatpush1.xpose.msra.mxu0 0.0
        %1110 = vmatprep.subr.mxu0 0.0
        %1111 = vmatpush1.xpose.msra.mxu0 0.0
        %1112 = vmatprep.subr.mxu0 0.0
        %1113 = vmatpush1.xpose.msra.mxu0 0.0
        %1114 = vmatprep.subr.mxu0 0.0
        %1115 = vmatpush1.xpose.msra.mxu0 0.0
        %1116 = vmatprep.subr.mxu0 0.0
        %1117 = vmatpush1.xpose.msra.mxu0 0.0
        %1118 = vmatprep.subr.mxu0 0.0
        %1119 = vmatpush1.xpose.msra.mxu0 0.0
        %1120 = vmatprep.subr.mxu0 0.0
        %1121 = vmatpush1.xpose.msra.mxu0 0.0
        %1122 = vmatprep.subr.mxu0 0.0
        %1123 = vmatpush1.xpose.msra.mxu0 0.0
        %1124 = vmatprep.subr.mxu0 0.0
        %1125 = vmatpush1.xpose.msra.mxu0 0.0
        %1126 = vmatprep.subr.mxu0 0.0
        %1127 = vmatpush1.xpose.msra.mxu0 0.0
        %1128 = vmatprep.subr.mxu0 0.0
        %1129 = vmatpush1.xpose.msra.mxu0 0.0
        %1130 = vmatprep.subr.mxu0 0.0
        %1131 = vmatpush1.xpose.msra.mxu0 0.0
        %1132 = vmatprep.subr.mxu0 0.0
        %1133 = vmatpush1.xpose.msra.mxu0 0.0
        %1134 = vmatprep.subr.mxu0 0.0
        %1135 = vmatpush1.xpose.msra.mxu0 0.0
        %1136 = vmatprep.subr.mxu0 0.0
        %1137 = vmatpush1.xpose.msra.mxu0 0.0
        %1138 = vmatprep.mubr.f32.mxu0 0.0
        %1139 = vmatmul.mubr.f32.gmra.mrb[0].mxu0 %v1070
        %v1140 = vpop.f32.mrb[0].mxu0
        %v1141 = vadd.f32 %v893, %v1140
        %v1142 = vpop.f32.mrb[0].mxu0
        %1143 = vdwg.mxu0
        %v1144 = vsel %vm898, %v1141, -inf
        %1145 = vmax.xlane.f32.xlu0 %v1144
        %v1146 = vpop.xlane.xlu0 %1145
        %v1147 = vsub.f32 %v1141, %v1146
        %v1148 = vmul.f32 %v1147, 1.442695
        %v1149 = vpow.pop %v1148
        %v1150 = vsel %vm898, %v1149, 0.0
        %1151 = vadd.xlane.f32.xlu0 %v1150
        %v1152 = vpop.xlane.xlu0 %1151
        %v1153 = vrcp.pop %v1152
        %v1154 = vmul.f32 %v1149, %v1153
        %1155 = vrot.lane.b32.xlu0 %v1063, 56
        %v1156 = vpop.permute.xlu0 %1155
        %v1159 = vsel %vm898, %v1154, 0
        %1161 = vmatprep.subr.mxu0 0.0
        %1162 = vmatpush1.msra.mxu0 %v1156
        %1163 = vmatprep.subr.mxu0 0.0
        %1164 = vmatpush1.msra.mxu0 0.0
        %1165 = vmatprep.subr.mxu0 0.0
        %1166 = vmatpush1.msra.mxu0 0.0
        %1167 = vmatprep.subr.mxu0 0.0
        %1168 = vmatpush1.msra.mxu0 0.0
        %1169 = vmatprep.subr.mxu0 0.0
        %1170 = vmatpush1.msra.mxu0 0.0
        %1171 = vmatprep.subr.mxu0 0.0
        %1172 = vmatpush1.msra.mxu0 0.0
        %1173 = vmatprep.subr.mxu0 0.0
        %1174 = vmatpush1.msra.mxu0 0.0
        %1175 = vmatprep.subr.mxu0 0.0
        %1176 = vmatpush1.msra.mxu0 0.0
        %1177 = vmatprep.subr.mxu0 0.0
        %1178 = vmatpush1.msra.mxu0 0.0
        %1179 = vmatprep.subr.mxu0 0.0
        %1180 = vmatpush1.msra.mxu0 0.0
        %1181 = vmatprep.subr.mxu0 0.0
        %1182 = vmatpush1.msra.mxu0 0.0
        %1183 = vmatprep.subr.mxu0 0.0
        %1184 = vmatpush1.msra.mxu0 0.0
        %1185 = vmatprep.subr.mxu0 0.0
        %1186 = vmatpush1.msra.mxu0 0.0
        %1187 = vmatprep.subr.mxu0 0.0
        %1188 = vmatpush1.msra.mxu0 0.0
        %1189 = vmatprep.subr.mxu0 0.0
        %1190 = vmatpush1.msra.mxu0 0.0
        %1191 = vmatprep.subr.mxu0 0.0
        %1192 = vmatpush1.msra.mxu0 0.0
        %1193 = vmatprep.subr.mxu0 0.0
        %1194 = vmatpush1.msra.mxu0 0.0
        %1195 = vmatprep.subr.mxu0 0.0
        %1196 = vmatpush1.msra.mxu0 0.0
        %1197 = vmatprep.subr.mxu0 0.0
        %1198 = vmatpush1.msra.mxu0 0.0
        %1199 = vmatprep.subr.mxu0 0.0
        %1200 = vmatpush1.msra.mxu0 0.0
        %1201 = vmatprep.subr.mxu0 0.0
        %1202 = vmatpush1.msra.mxu0 0.0
        %1203 = vmatprep.subr.mxu0 0.0
        %1204 = vmatpush1.msra.mxu0 0.0
        %1205 = vmatprep.subr.mxu0 0.0
        %1206 = vmatpush1.msra.mxu0 0.0
        %1207 = vmatprep.subr.mxu0 0.0
        %1208 = vmatpush1.msra.mxu0 0.0
        %1209 = vmatprep.subr.mxu0 0.0
        %1210 = vmatpush1.msra.mxu0 0.0
        %1211 = vmatprep.subr.mxu0 0.0
        %1212 = vmatpush1.msra.mxu0 0.0
        %1213 = vmatprep.subr.mxu0 0.0
        %1214 = vmatpush1.msra.mxu0 0.0
        %1215 = vmatprep.subr.mxu0 0.0
        %1216 = vmatpush1.msra.mxu0 0.0
        %1217 = vmatprep.subr.mxu0 0.0
        %1218 = vmatpush1.msra.mxu0 0.0
        %1219 = vmatprep.subr.mxu0 0.0
        %1220 = vmatpush1.msra.mxu0 0.0
        %1221 = vmatprep.subr.mxu0 0.0
        %1222 = vmatpush1.msra.mxu0 0.0
        %1223 = vmatprep.subr.mxu0 0.0
        %1224 = vmatpush1.msra.mxu0 0.0
        %1225 = vmatprep.mubr.f32.mxu0 0.0
        %1226 = vmatmul.mubr.f32.gmra.mrb[0].mxu0 %v1159
        %v1227 = vpop.f32.mrb[0].mxu0
        %v1228 = vadd.f32 0.0, %v1227
        %v1229 = vpop.f32.mrb[0].mxu0
        %1230 = vdwg.mxu0
        %1232 = vrot.lane.b32.xlu0 %v1228, 8
        %v1233 = vpop.permute.xlu0 %1232
        %vm1235 = vcmask 130112
        %1236 = vst.msk [vmem:[#allocation4] sm:$0xff] %vm1235, %v1233
        %v1237 = vld [vmem:[#allocation3] sm:$0xff]
        %v1238 = vld [vmem:[#allocation3] sm:$0xff]
        %1240 = vrot.lane.b32.xlu0 %v1237, 112
        %v1241 = vpop.permute.xlu0 %1240
        %1243 = vrot.lane.b32.xlu0 %v1238, 80
        %v1244 = vpop.permute.xlu0 %1243
        %v1245 = vsel %vm898, %v1241, 0
        %v1247 = vsel %vm898, %v1244, 0
        %1249 = vmatprep.subr.mxu0 0.0
        %1250 = vmatpush1.xpose.msra.mxu0 %v1247
        %1251 = vmatprep.subr.mxu0 0.0
        %1252 = vmatpush1.xpose.msra.mxu0 0.0
        %1253 = vmatprep.subr.mxu0 0.0
        %1254 = vmatpush1.xpose.msra.mxu0 0.0
        %1255 = vmatprep.subr.mxu0 0.0
        %1256 = vmatpush1.xpose.msra.mxu0 0.0
        %1257 = vmatprep.subr.mxu0 0.0
        %1258 = vmatpush1.xpose.msra.mxu0 0.0
        %1259 = vmatprep.subr.mxu0 0.0
        %1260 = vmatpush1.xpose.msra.mxu0 0.0
        %1261 = vmatprep.subr.mxu0 0.0
        %1262 = vmatpush1.xpose.msra.mxu0 0.0
        %1263 = vmatprep.subr.mxu0 0.0
        %1264 = vmatpush1.xpose.msra.mxu0 0.0
        %1265 = vmatprep.subr.mxu0 0.0
        %1266 = vmatpush1.xpose.msra.mxu0 0.0
        %1267 = vmatprep.subr.mxu0 0.0
        %1268 = vmatpush1.xpose.msra.mxu0 0.0
        %1269 = vmatprep.subr.mxu0 0.0
        %1270 = vmatpush1.xpose.msra.mxu0 0.0
        %1271 = vmatprep.subr.mxu0 0.0
        %1272 = vmatpush1.xpose.msra.mxu0 0.0
        %1273 = vmatprep.subr.mxu0 0.0
        %1274 = vmatpush1.xpose.msra.mxu0 0.0
        %1275 = vmatprep.subr.mxu0 0.0
        %1276 = vmatpush1.xpose.msra.mxu0 0.0
        %1277 = vmatprep.subr.mxu0 0.0
        %1278 = vmatpush1.xpose.msra.mxu0 0.0
        %1279 = vmatprep.subr.mxu0 0.0
        %1280 = vmatpush1.xpose.msra.mxu0 0.0
        %1281 = vmatprep.subr.mxu0 0.0
        %1282 = vmatpush1.xpose.msra.mxu0 0.0
        %1283 = vmatprep.subr.mxu0 0.0
        %1284 = vmatpush1.xpose.msra.mxu0 0.0
        %1285 = vmatprep.subr.mxu0 0.0
        %1286 = vmatpush1.xpose.msra.mxu0 0.0
        %1287 = vmatprep.subr.mxu0 0.0
        %1288 = vmatpush1.xpose.msra.mxu0 0.0
        %1289 = vmatprep.subr.mxu0 0.0
        %1290 = vmatpush1.xpose.msra.mxu0 0.0
        %1291 = vmatprep.subr.mxu0 0.0
        %1292 = vmatpush1.xpose.msra.mxu0 0.0
        %1293 = vmatprep.subr.mxu0 0.0
        %1294 = vmatpush1.xpose.msra.mxu0 0.0
        %1295 = vmatprep.subr.mxu0 0.0
        %1296 = vmatpush1.xpose.msra.mxu0 0.0
        %1297 = vmatprep.subr.mxu0 0.0
        %1298 = vmatpush1.xpose.msra.mxu0 0.0
        %1299 = vmatprep.subr.mxu0 0.0
        %1300 = vmatpush1.xpose.msra.mxu0 0.0
        %1301 = vmatprep.subr.mxu0 0.0
        %1302 = vmatpush1.xpose.msra.mxu0 0.0
        %1303 = vmatprep.subr.mxu0 0.0
        %1304 = vmatpush1.xpose.msra.mxu0 0.0
        %1305 = vmatprep.subr.mxu0 0.0
        %1306 = vmatpush1.xpose.msra.mxu0 0.0
        %1307 = vmatprep.subr.mxu0 0.0
        %1308 = vmatpush1.xpose.msra.mxu0 0.0
        %1309 = vmatprep.subr.mxu0 0.0
        %1310 = vmatpush1.xpose.msra.mxu0 0.0
        %1311 = vmatprep.subr.mxu0 0.0
        %1312 = vmatpush1.xpose.msra.mxu0 0.0
        %1313 = vmatprep.mubr.f32.mxu0 0.0
        %1314 = vmatmul.mubr.f32.gmra.mrb[0].mxu0 %v1245
        %v1315 = vpop.f32.mrb[0].mxu0
        %v1316 = vadd.f32 %v893, %v1315
        %v1317 = vpop.f32.mrb[0].mxu0
        %1318 = vdwg.mxu0
        %v1319 = vsel %vm898, %v1316, -inf
        %1320 = vmax.xlane.f32.xlu0 %v1319
        %v1321 = vpop.xlane.xlu0 %1320
        %v1322 = vsub.f32 %v1316, %v1321
        %v1323 = vmul.f32 %v1322, 1.442695
        %v1324 = vpow.pop %v1323
        %v1325 = vsel %vm898, %v1324, 0.0
        %1326 = vadd.xlane.f32.xlu0 %v1325
        %v1327 = vpop.xlane.xlu0 %1326
        %v1328 = vrcp.pop %v1327
        %v1329 = vmul.f32 %v1324, %v1328
        %1330 = vrot.lane.b32.xlu0 %v1238, 48
        %v1331 = vpop.permute.xlu0 %1330
        %v1334 = vsel %vm898, %v1329, 0
        %1336 = vmatprep.subr.mxu0 0.0
        %1337 = vmatpush1.msra.mxu0 %v1331
        %1338 = vmatprep.subr.mxu0 0.0
        %1339 = vmatpush1.msra.mxu0 0.0
        %1340 = vmatprep.subr.mxu0 0.0
        %1341 = vmatpush1.msra.mxu0 0.0
        %1342 = vmatprep.subr.mxu0 0.0
        %1343 = vmatpush1.msra.mxu0 0.0
        %1344 = vmatprep.subr.mxu0 0.0
        %1345 = vmatpush1.msra.mxu0 0.0
        %1346 = vmatprep.subr.mxu0 0.0
        %1347 = vmatpush1.msra.mxu0 0.0
        %1348 = vmatprep.subr.mxu0 0.0
        %1349 = vmatpush1.msra.mxu0 0.0
        %1350 = vmatprep.subr.mxu0 0.0
        %1351 = vmatpush1.msra.mxu0 0.0
        %1352 = vmatprep.subr.mxu0 0.0
        %1353 = vmatpush1.msra.mxu0 0.0
        %1354 = vmatprep.subr.mxu0 0.0
        %1355 = vmatpush1.msra.mxu0 0.0
        %1356 = vmatprep.subr.mxu0 0.0
        %1357 = vmatpush1.msra.mxu0 0.0
        %1358 = vmatprep.subr.mxu0 0.0
        %1359 = vmatpush1.msra.mxu0 0.0
        %1360 = vmatprep.subr.mxu0 0.0
        %1361 = vmatpush1.msra.mxu0 0.0
        %1362 = vmatprep.subr.mxu0 0.0
        %1363 = vmatpush1.msra.mxu0 0.0
        %1364 = vmatprep.subr.mxu0 0.0
        %1365 = vmatpush1.msra.mxu0 0.0
        %1366 = vmatprep.subr.mxu0 0.0
        %1367 = vmatpush1.msra.mxu0 0.0
        %1368 = vmatprep.subr.mxu0 0.0
        %1369 = vmatpush1.msra.mxu0 0.0
        %1370 = vmatprep.subr.mxu0 0.0
        %1371 = vmatpush1.msra.mxu0 0.0
        %1372 = vmatprep.subr.mxu0 0.0
        %1373 = vmatpush1.msra.mxu0 0.0
        %1374 = vmatprep.subr.mxu0 0.0
        %1375 = vmatpush1.msra.mxu0 0.0
        %1376 = vmatprep.subr.mxu0 0.0
        %1377 = vmatpush1.msra.mxu0 0.0
        %1378 = vmatprep.subr.mxu0 0.0
        %1379 = vmatpush1.msra.mxu0 0.0
        %1380 = vmatprep.subr.mxu0 0.0
        %1381 = vmatpush1.msra.mxu0 0.0
        %1382 = vmatprep.subr.mxu0 0.0
        %1383 = vmatpush1.msra.mxu0 0.0
        %1384 = vmatprep.subr.mxu0 0.0
        %1385 = vmatpush1.msra.mxu0 0.0
        %1386 = vmatprep.subr.mxu0 0.0
        %1387 = vmatpush1.msra.mxu0 0.0
        %1388 = vmatprep.subr.mxu0 0.0
        %1389 = vmatpush1.msra.mxu0 0.0
        %1390 = vmatprep.subr.mxu0 0.0
        %1391 = vmatpush1.msra.mxu0 0.0
        %1392 = vmatprep.subr.mxu0 0.0
        %1393 = vmatpush1.msra.mxu0 0.0
        %1394 = vmatprep.subr.mxu0 0.0
        %1395 = vmatpush1.msra.mxu0 0.0
        %1396 = vmatprep.subr.mxu0 0.0
        %1397 = vmatpush1.msra.mxu0 0.0
        %1398 = vmatprep.subr.mxu0 0.0
        %1399 = vmatpush1.msra.mxu0 0.0
        %1400 = vmatprep.mubr.f32.mxu0 0.0
        %1401 = vmatmul.mubr.f32.gmra.mrb[0].mxu0 %v1334
        %v1402 = vpop.f32.mrb[0].mxu0
        %v1403 = vadd.f32 0.0, %v1402
        %v1404 = vpop.f32.mrb[0].mxu0
        %1405 = vdwg.mxu0
        %1407 = vrot.lane.b32.xlu0 %v1403, 16
        %v1408 = vpop.permute.xlu0 %1407
        %vm1410 = vcmask 195712
        %1411 = vst.msk [vmem:[#allocation4] sm:$0xff] %vm1410, %v1408
        %v1412 = vld [vmem:[#allocation3] sm:$0xff]
        %v1413 = vld [vmem:[#allocation3] sm:$0xff]
        %1415 = vrot.lane.b32.xlu0 %v1412, 104
        %v1416 = vpop.permute.xlu0 %1415
        %1418 = vrot.lane.b32.xlu0 %v1413, 72
        %v1419 = vpop.permute.xlu0 %1418
        %v1420 = vsel %vm898, %v1416, 0
        %v1422 = vsel %vm898, %v1419, 0
        %1424 = vmatprep.subr.mxu0 0.0
        %1425 = vmatpush1.xpose.msra.mxu0 %v1422
        %1426 = vmatprep.subr.mxu0 0.0
        %1427 = vmatpush1.xpose.msra.mxu0 0.0
        %1428 = vmatprep.subr.mxu0 0.0
        %1429 = vmatpush1.xpose.msra.mxu0 0.0
        %1430 = vmatprep.subr.mxu0 0.0
        %1431 = vmatpush1.xpose.msra.mxu0 0.0
        %1432 = vmatprep.subr.mxu0 0.0
        %1433 = vmatpush1.xpose.msra.mxu0 0.0
        %1434 = vmatprep.subr.mxu0 0.0
        %1435 = vmatpush1.xpose.msra.mxu0 0.0
        %1436 = vmatprep.subr.mxu0 0.0
        %1437 = vmatpush1.xpose.msra.mxu0 0.0
        %1438 = vmatprep.subr.mxu0 0.0
        %1439 = vmatpush1.xpose.msra.mxu0 0.0
        %1440 = vmatprep.subr.mxu0 0.0
        %1441 = vmatpush1.xpose.msra.mxu0 0.0
        %1442 = vmatprep.subr.mxu0 0.0
        %1443 = vmatpush1.xpose.msra.mxu0 0.0
        %1444 = vmatprep.subr.mxu0 0.0
        %1445 = vmatpush1.xpose.msra.mxu0 0.0
        %1446 = vmatprep.subr.mxu0 0.0
        %1447 = vmatpush1.xpose.msra.mxu0 0.0
        %1448 = vmatprep.subr.mxu0 0.0
        %1449 = vmatpush1.xpose.msra.mxu0 0.0
        %1450 = vmatprep.subr.mxu0 0.0
        %1451 = vmatpush1.xpose.msra.mxu0 0.0
        %1452 = vmatprep.subr.mxu0 0.0
        %1453 = vmatpush1.xpose.msra.mxu0 0.0
        %1454 = vmatprep.subr.mxu0 0.0
        %1455 = vmatpush1.xpose.msra.mxu0 0.0
        %1456 = vmatprep.subr.mxu0 0.0
        %1457 = vmatpush1.xpose.msra.mxu0 0.0
        %1458 = vmatprep.subr.mxu0 0.0
        %1459 = vmatpush1.xpose.msra.mxu0 0.0
        %1460 = vmatprep.subr.mxu0 0.0
        %1461 = vmatpush1.xpose.msra.mxu0 0.0
        %1462 = vmatprep.subr.mxu0 0.0
        %1463 = vmatpush1.xpose.msra.mxu0 0.0
        %1464 = vmatprep.subr.mxu0 0.0
        %1465 = vmatpush1.xpose.msra.mxu0 0.0
        %1466 = vmatprep.subr.mxu0 0.0
        %1467 = vmatpush1.xpose.msra.mxu0 0.0
        %1468 = vmatprep.subr.mxu0 0.0
        %1469 = vmatpush1.xpose.msra.mxu0 0.0
        %1470 = vmatprep.subr.mxu0 0.0
        %1471 = vmatpush1.xpose.msra.mxu0 0.0
        %1472 = vmatprep.subr.mxu0 0.0
        %1473 = vmatpush1.xpose.msra.mxu0 0.0
        %1474 = vmatprep.subr.mxu0 0.0
        %1475 = vmatpush1.xpose.msra.mxu0 0.0
        %1476 = vmatprep.subr.mxu0 0.0
        %1477 = vmatpush1.xpose.msra.mxu0 0.0
        %1478 = vmatprep.subr.mxu0 0.0
        %1479 = vmatpush1.xpose.msra.mxu0 0.0
        %1480 = vmatprep.subr.mxu0 0.0
        %1481 = vmatpush1.xpose.msra.mxu0 0.0
        %1482 = vmatprep.subr.mxu0 0.0
        %1483 = vmatpush1.xpose.msra.mxu0 0.0
        %1484 = vmatprep.subr.mxu0 0.0
        %1485 = vmatpush1.xpose.msra.mxu0 0.0
        %1486 = vmatprep.subr.mxu0 0.0
        %1487 = vmatpush1.xpose.msra.mxu0 0.0
        %1488 = vmatprep.mubr.f32.mxu0 0.0
        %1489 = vmatmul.mubr.f32.gmra.mrb[0].mxu0 %v1420
        %v1490 = vpop.f32.mrb[0].mxu0
        %v1491 = vadd.f32 %v893, %v1490
        %v1492 = vpop.f32.mrb[0].mxu0
        %1493 = vdwg.mxu0
        %v1494 = vsel %vm898, %v1491, -inf
        %1495 = vmax.xlane.f32.xlu0 %v1494
        %v1496 = vpop.xlane.xlu0 %1495
        %v1497 = vsub.f32 %v1491, %v1496
        %v1498 = vmul.f32 %v1497, 1.442695
        %v1499 = vpow.pop %v1498
        %v1500 = vsel %vm898, %v1499, 0.0
        %1501 = vadd.xlane.f32.xlu0 %v1500
        %v1502 = vpop.xlane.xlu0 %1501
        %v1503 = vrcp.pop %v1502
        %v1504 = vmul.f32 %v1499, %v1503
        %1505 = vrot.lane.b32.xlu0 %v1413, 40
        %v1506 = vpop.permute.xlu0 %1505
        %v1509 = vsel %vm898, %v1504, 0
        %1511 = vmatprep.subr.mxu0 0.0
        %1512 = vmatpush1.msra.mxu0 %v1506
        %1513 = vmatprep.subr.mxu0 0.0
        %1514 = vmatpush1.msra.mxu0 0.0
        %1515 = vmatprep.subr.mxu0 0.0
        %1516 = vmatpush1.msra.mxu0 0.0
        %1517 = vmatprep.subr.mxu0 0.0
        %1518 = vmatpush1.msra.mxu0 0.0
        %1519 = vmatprep.subr.mxu0 0.0
        %1520 = vmatpush1.msra.mxu0 0.0
        %1521 = vmatprep.subr.mxu0 0.0
        %1522 = vmatpush1.msra.mxu0 0.0
        %1523 = vmatprep.subr.mxu0 0.0
        %1524 = vmatpush1.msra.mxu0 0.0
        %1525 = vmatprep.subr.mxu0 0.0
        %1526 = vmatpush1.msra.mxu0 0.0
        %1527 = vmatprep.subr.mxu0 0.0
        %1528 = vmatpush1.msra.mxu0 0.0
        %1529 = vmatprep.subr.mxu0 0.0
        %1530 = vmatpush1.msra.mxu0 0.0
        %1531 = vmatprep.subr.mxu0 0.0
        %1532 = vmatpush1.msra.mxu0 0.0
        %1533 = vmatprep.subr.mxu0 0.0
        %1534 = vmatpush1.msra.mxu0 0.0
        %1535 = vmatprep.subr.mxu0 0.0
        %1536 = vmatpush1.msra.mxu0 0.0
        %1537 = vmatprep.subr.mxu0 0.0
        %1538 = vmatpush1.msra.mxu0 0.0
        %1539 = vmatprep.subr.mxu0 0.0
        %1540 = vmatpush1.msra.mxu0 0.0
        %1541 = vmatprep.subr.mxu0 0.0
        %1542 = vmatpush1.msra.mxu0 0.0
        %1543 = vmatprep.subr.mxu0 0.0
        %1544 = vmatpush1.msra.mxu0 0.0
        %1545 = vmatprep.subr.mxu0 0.0
        %1546 = vmatpush1.msra.mxu0 0.0
        %1547 = vmatprep.subr.mxu0 0.0
        %1548 = vmatpush1.msra.mxu0 0.0
        %1549 = vmatprep.subr.mxu0 0.0
        %1550 = vmatpush1.msra.mxu0 0.0
        %1551 = vmatprep.subr.mxu0 0.0
        %1552 = vmatpush1.msra.mxu0 0.0
        %1553 = vmatprep.subr.mxu0 0.0
        %1554 = vmatpush1.msra.mxu0 0.0
        %1555 = vmatprep.subr.mxu0 0.0
        %1556 = vmatpush1.msra.mxu0 0.0
        %1557 = vmatprep.subr.mxu0 0.0
        %1558 = vmatpush1.msra.mxu0 0.0
        %1559 = vmatprep.subr.mxu0 0.0
        %1560 = vmatpush1.msra.mxu0 0.0
        %1561 = vmatprep.subr.mxu0 0.0
        %1562 = vmatpush1.msra.mxu0 0.0
        %1563 = vmatprep.subr.mxu0 0.0
        %1564 = vmatpush1.msra.mxu0 0.0
        %1565 = vmatprep.subr.mxu0 0.0
        %1566 = vmatpush1.msra.mxu0 0.0
        %1567 = vmatprep.subr.mxu0 0.0
        %1568 = vmatpush1.msra.mxu0 0.0
        %1569 = vmatprep.subr.mxu0 0.0
        %1570 = vmatpush1.msra.mxu0 0.0
        %1571 = vmatprep.subr.mxu0 0.0
        %1572 = vmatpush1.msra.mxu0 0.0
        %1573 = vmatprep.subr.mxu0 0.0
        %1574 = vmatpush1.msra.mxu0 0.0
        %1575 = vmatprep.mubr.f32.mxu0 0.0
        %1576 = vmatmul.mubr.f32.gmra.mrb[0].mxu0 %v1509
        %v1577 = vpop.f32.mrb[0].mxu0
        %v1578 = vadd.f32 0.0, %v1577
        %v1579 = vpop.f32.mrb[0].mxu0
        %1580 = vdwg.mxu0
        %1582 = vrot.lane.b32.xlu0 %v1578, 24
        %v1583 = vpop.permute.xlu0 %1582
        %vm1585 = vcmask 261312
        %1586 = vst.msk [vmem:[#allocation4] sm:$0xff] %vm1585, %v1583
        %v1587 = vld [vmem:[#allocation4] sm:$0xff]
        %v1588 = vld [vmem:[%s714] sm:$0xff]
        %v1589 = vld [vmem:[%s714 + $0x8] sm:$0xff]
        %v1590 = vld [vmem:[%s714 + $0x10] sm:$0xff]
        %v1591 = vld [vmem:[%s714 + $0x18] sm:$0xff]
        %v1592 = vld [vmem:[%s717] sm:$0x1]
        %v1594 = vlaneseq
        %v1595 = vshrl.u32 %v1594, 7
        %v1596 = vsub.s32 0, %v1595
        %v1597 = vrot.slane %v1592, %v1596
        %v1600 = vsel %vm764, %v1587, 0
        %1602 = vmatprep.subr.mxu0 0.0
        %1603 = vmatpush1.msra.mxu0 %v1588
        %1604 = vmatprep.subr.mxu0 0.0
        %1605 = vmatpush1.msra.mxu0 %v1589
        %1606 = vmatprep.subr.mxu0 0.0
        %1607 = vmatpush1.msra.mxu0 %v1590
        %1608 = vmatprep.subr.mxu0 0.0
        %1609 = vmatpush1.msra.mxu0 %v1591
        %1610 = vmatprep.subr.mxu0 0.0
        %1611 = vmatpush1.msra.mxu0 0.0
        %1612 = vmatprep.subr.mxu0 0.0
        %1613 = vmatpush1.msra.mxu0 0.0
        %1614 = vmatprep.subr.mxu0 0.0
        %1615 = vmatpush1.msra.mxu0 0.0
        %1616 = vmatprep.subr.mxu0 0.0
        %1617 = vmatpush1.msra.mxu0 0.0
        %1618 = vmatprep.subr.mxu0 0.0
        %1619 = vmatpush1.msra.mxu0 0.0
        %1620 = vmatprep.subr.mxu0 0.0
        %1621 = vmatpush1.msra.mxu0 0.0
        %1622 = vmatprep.subr.mxu0 0.0
        %1623 = vmatpush1.msra.mxu0 0.0
        %1624 = vmatprep.subr.mxu0 0.0
        %1625 = vmatpush1.msra.mxu0 0.0
        %1626 = vmatprep.subr.mxu0 0.0
        %1627 = vmatpush1.msra.mxu0 0.0
        %1628 = vmatprep.subr.mxu0 0.0
        %1629 = vmatpush1.msra.mxu0 0.0
        %1630 = vmatprep.subr.mxu0 0.0
        %1631 = vmatpush1.msra.mxu0 0.0
        %1632 = vmatprep.subr.mxu0 0.0
        %1633 = vmatpush1.msra.mxu0 0.0
        %1634 = vmatprep.subr.mxu0 0.0
        %1635 = vmatpush1.msra.mxu0 0.0
        %1636 = vmatprep.subr.mxu0 0.0
        %1637 = vmatpush1.msra.mxu0 0.0
        %1638 = vmatprep.subr.mxu0 0.0
        %1639 = vmatpush1.msra.mxu0 0.0
        %1640 = vmatprep.subr.mxu0 0.0
        %1641 = vmatpush1.msra.mxu0 0.0
        %1642 = vmatprep.subr.mxu0 0.0
        %1643 = vmatpush1.msra.mxu0 0.0
        %1644 = vmatprep.subr.mxu0 0.0
        %1645 = vmatpush1.msra.mxu0 0.0
        %1646 = vmatprep.subr.mxu0 0.0
        %1647 = vmatpush1.msra.mxu0 0.0
        %1648 = vmatprep.subr.mxu0 0.0
        %1649 = vmatpush1.msra.mxu0 0.0
        %1650 = vmatprep.subr.mxu0 0.0
        %1651 = vmatpush1.msra.mxu0 0.0
        %1652 = vmatprep.subr.mxu0 0.0
        %1653 = vmatpush1.msra.mxu0 0.0
        %1654 = vmatprep.subr.mxu0 0.0
        %1655 = vmatpush1.msra.mxu0 0.0
        %1656 = vmatprep.subr.mxu0 0.0
        %1657 = vmatpush1.msra.mxu0 0.0
        %1658 = vmatprep.subr.mxu0 0.0
        %1659 = vmatpush1.msra.mxu0 0.0
        %1660 = vmatprep.subr.mxu0 0.0
        %1661 = vmatpush1.msra.mxu0 0.0
        %1662 = vmatprep.subr.mxu0 0.0
        %1663 = vmatpush1.msra.mxu0 0.0
        %1664 = vmatprep.subr.mxu0 0.0
        %1665 = vmatpush1.msra.mxu0 0.0
        %1666 = vmatprep.mubr.f32.mxu0 0.0
        %1667 = vmatmul.mubr.f32.gmra.mrb[0].mxu0 %v1600
        %v1668 = vpop.f32.mrb[0].mxu0
        %v1669 = vadd.f32 %v1597, %v1668
        %v1670 = vpop.f32.mrb[0].mxu0
        %1671 = vdwg.mxu0
        %v1672 = vld [vmem:[#allocation2] sm:$0xff]
        %v1673 = vadd.f32 %v1672, %v1669
        %1674 = vst.msk [vmem:[#allocation2] sm:$0xff] %vm764, %v1673
        %v1675 = vld [vmem:[#allocation2] sm:$0xff]
        %v1676 = vld [vmem:[%s720] sm:$0x1]
        %v1677 = vld [vmem:[%s723] sm:$0x1]
        %v1678 = vsel %vm764, %v1675, 0.0
        %1679 = vadd.xlane.f32.xlu0 %v1678
        %v1680 = vpop.xlane.xlu0 %1679
        %v1681 = vmul.f32 %v1680, %v768
        %v1682 = vsub.f32 %v1675, %v1681
        %v1683 = vmul.f32 %v1682, %v1682
        %v1684 = vsel %vm764, %v1683, 0.0
        %1685 = vadd.xlane.f32.xlu0 %v1684
        %v1686 = vpop.xlane.xlu0 %1685
        %v1687 = vmul.f32 %v1686, %v775
        %v1689 = vlaneseq
        %v1690 = vshrl.u32 %v1689, 7
        %v1691 = vsub.s32 0, %v1690
        %v1692 = vrot.slane %v1676, %v1691
        %v1694 = vmul.f32 %v1692, %v1682
        %v1695 = vrsqrt.pop %v1687
        %v1696 = vmul.f32 %v1687, %v1695
        %vm1697 = vcmp.eq.f32.partialorder %v1687, inf
        %v1698 = vsel %vm1697, %v1687, %v1696
        %vm1699 = vcmp.eq.f32.partialorder %v1687, 0.0
        %v1700 = vand.u32 %v1687, 2147483648
        %v1701 = vsel %vm1699, %v1700, %v1698
        %v1702 = vadd.f32 %v1701, 1e-06
        %v1703 = vrcp.pop %v1702
        %v1704 = vmul.f32 %v1694, %v1703
        %v1706 = vlaneseq
        %v1707 = vshrl.u32 %v1706, 7
        %v1708 = vsub.s32 0, %v1707
        %v1709 = vrot.slane %v1677, %v1708
        %v1711 = vadd.f32 %v1704, %v1709
        %v1712 = vld [vmem:[%s728] sm:$0xff]
        %v1713 = vld [vmem:[%s728 + $0x8] sm:$0xff]
        %v1714 = vld [vmem:[%s728 + $0x10] sm:$0xff]
        %v1715 = vld [vmem:[%s728 + $0x18] sm:$0xff]
        %v1716 = vld [vmem:[%s731] sm:$0x1]
        %v1718 = vlaneseq
        %v1719 = vshrl.u32 %v1718, 7
        %v1720 = vsub.s32 0, %v1719
        %v1721 = vrot.slane %v1716, %v1720
        %v1724 = vsel %vm764, %v1711, 0
        %1726 = vmatprep.subr.mxu0 0.0
        %1727 = vmatpush1.msra.mxu0 %v1712
        %1728 = vmatprep.subr.mxu0 0.0
        %1729 = vmatpush1.msra.mxu0 %v1713
        %1730 = vmatprep.subr.mxu0 0.0
        %1731 = vmatpush1.msra.mxu0 %v1714
        %1732 = vmatprep.subr.mxu0 0.0
        %1733 = vmatpush1.msra.mxu0 %v1715
        %1734 = vmatprep.subr.mxu0 0.0
        %1735 = vmatpush1.msra.mxu0 0.0
        %1736 = vmatprep.subr.mxu0 0.0
        %1737 = vmatpush1.msra.mxu0 0.0
        %1738 = vmatprep.subr.mxu0 0.0
        %1739 = vmatpush1.msra.mxu0 0.0
        %1740 = vmatprep.subr.mxu0 0.0
        %1741 = vmatpush1.msra.mxu0 0.0
        %1742 = vmatprep.subr.mxu0 0.0
        %1743 = vmatpush1.msra.mxu0 0.0
        %1744 = vmatprep.subr.mxu0 0.0
        %1745 = vmatpush1.msra.mxu0 0.0
        %1746 = vmatprep.subr.mxu0 0.0
        %1747 = vmatpush1.msra.mxu0 0.0
        %1748 = vmatprep.subr.mxu0 0.0
        %1749 = vmatpush1.msra.mxu0 0.0
        %1750 = vmatprep.subr.mxu0 0.0
        %1751 = vmatpush1.msra.mxu0 0.0
        %1752 = vmatprep.subr.mxu0 0.0
        %1753 = vmatpush1.msra.mxu0 0.0
        %1754 = vmatprep.subr.mxu0 0.0
        %1755 = vmatpush1.msra.mxu0 0.0
        %1756 = vmatprep.subr.mxu0 0.0
        %1757 = vmatpush1.msra.mxu0 0.0
        %1758 = vmatprep.subr.mxu0 0.0
        %1759 = vmatpush1.msra.mxu0 0.0
        %1760 = vmatprep.subr.mxu0 0.0
        %1761 = vmatpush1.msra.mxu0 0.0
        %1762 = vmatprep.subr.mxu0 0.0
        %1763 = vmatpush1.msra.mxu0 0.0
        %1764 = vmatprep.subr.mxu0 0.0
        %1765 = vmatpush1.msra.mxu0 0.0
        %1766 = vmatprep.subr.mxu0 0.0
        %1767 = vmatpush1.msra.mxu0 0.0
        %1768 = vmatprep.subr.mxu0 0.0
        %1769 = vmatpush1.msra.mxu0 0.0
        %1770 = vmatprep.subr.mxu0 0.0
        %1771 = vmatpush1.msra.mxu0 0.0
        %1772 = vmatprep.subr.mxu0 0.0
        %1773 = vmatpush1.msra.mxu0 0.0
        %1774 = vmatprep.subr.mxu0 0.0
        %1775 = vmatpush1.msra.mxu0 0.0
        %1776 = vmatprep.subr.mxu0 0.0
        %1777 = vmatpush1.msra.mxu0 0.0
        %1778 = vmatprep.subr.mxu0 0.0
        %1779 = vmatpush1.msra.mxu0 0.0
        %1780 = vmatprep.subr.mxu0 0.0
        %1781 = vmatpush1.msra.mxu0 0.0
        %1782 = vmatprep.subr.mxu0 0.0
        %1783 = vmatpush1.msra.mxu0 0.0
        %1784 = vmatprep.subr.mxu0 0.0
        %1785 = vmatpush1.msra.mxu0 0.0
        %1786 = vmatprep.subr.mxu0 0.0
        %1787 = vmatpush1.msra.mxu0 0.0
        %1788 = vmatprep.subr.mxu0 0.0
        %1789 = vmatpush1.msra.mxu0 0.0
        %1790 = vmatprep.mubr.f32.mxu0 0.0
        %1791 = vmatmul.mubr.f32.gmra.mrb[0].mxu0 %v1724
        %v1792 = vpop.f32.mrb[0].mxu0
        %v1793 = vadd.f32 %v1721, %v1792
        %v1794 = vpop.f32.mrb[0].mxu0
        %1795 = vdwg.mxu0
        %v1796 = vmax.f32 %v1793, 0.0
        %v1797 = vld [vmem:[%s736] sm:$0xff]
        %v1798 = vld [vmem:[%s736 + $0x8] sm:$0xff]
        %v1799 = vld [vmem:[%s736 + $0x10] sm:$0xff]
        %v1800 = vld [vmem:[%s736 + $0x18] sm:$0xff]
        %v1801 = vld [vmem:[%s736 + $0x20] sm:$0xff]
        %v1802 = vld [vmem:[%s736 + $0x28] sm:$0xff]
        %v1803 = vld [vmem:[%s736 + $0x30] sm:$0xff]
        %v1804 = vld [vmem:[%s736 + $0x38] sm:$0xff]
        %vm1805 = vcmask 523264
        %v1807 = vsel %vm1805, %v1796, 0
        %1809 = vmatprep.subr.mxu0 0.0
        %1810 = vmatpush1.msra.mxu0 %v1797
        %1811 = vmatprep.subr.mxu0 0.0
        %1812 = vmatpush1.msra.mxu0 %v1798
        %1813 = vmatprep.subr.mxu0 0.0
        %1814 = vmatpush1.msra.mxu0 %v1799
        %1815 = vmatprep.subr.mxu0 0.0
        %1816 = vmatpush1.msra.mxu0 %v1800
        %1817 = vmatprep.subr.mxu0 0.0
        %1818 = vmatpush1.msra.mxu0 %v1801
        %1819 = vmatprep.subr.mxu0 0.0
        %1820 = vmatpush1.msra.mxu0 %v1802
        %1821 = vmatprep.subr.mxu0 0.0
        %1822 = vmatpush1.msra.mxu0 %v1803
        %1823 = vmatprep.subr.mxu0 0.0
        %1824 = vmatpush1.msra.mxu0 %v1804
        %1825 = vmatprep.subr.mxu0 0.0
        %1826 = vmatpush1.msra.mxu0 0.0
        %1827 = vmatprep.subr.mxu0 0.0
        %1828 = vmatpush1.msra.mxu0 0.0
        %1829 = vmatprep.subr.mxu0 0.0
        %1830 = vmatpush1.msra.mxu0 0.0
        %1831 = vmatprep.subr.mxu0 0.0
        %1832 = vmatpush1.msra.mxu0 0.0
        %1833 = vmatprep.subr.mxu0 0.0
        %1834 = vmatpush1.msra.mxu0 0.0
        %1835 = vmatprep.subr.mxu0 0.0
        %1836 = vmatpush1.msra.mxu0 0.0
        %1837 = vmatprep.subr.mxu0 0.0
        %1838 = vmatpush1.msra.mxu0 0.0
        %1839 = vmatprep.subr.mxu0 0.0
        %1840 = vmatpush1.msra.mxu0 0.0
        %1841 = vmatprep.subr.mxu0 0.0
        %1842 = vmatpush1.msra.mxu0 0.0
        %1843 = vmatprep.subr.mxu0 0.0
        %1844 = vmatpush1.msra.mxu0 0.0
        %1845 = vmatprep.subr.mxu0 0.0
        %1846 = vmatpush1.msra.mxu0 0.0
        %1847 = vmatprep.subr.mxu0 0.0
        %1848 = vmatpush1.msra.mxu0 0.0
        %1849 = vmatprep.subr.mxu0 0.0
        %1850 = vmatpush1.msra.mxu0 0.0
        %1851 = vmatprep.subr.mxu0 0.0
        %1852 = vmatpush1.msra.mxu0 0.0
        %1853 = vmatprep.subr.mxu0 0.0
        %1854 = vmatpush1.msra.mxu0 0.0
        %1855 = vmatprep.subr.mxu0 0.0
        %1856 = vmatpush1.msra.mxu0 0.0
        %1857 = vmatprep.subr.mxu0 0.0
        %1858 = vmatpush1.msra.mxu0 0.0
        %1859 = vmatprep.subr.mxu0 0.0
        %1860 = vmatpush1.msra.mxu0 0.0
        %1861 = vmatprep.subr.mxu0 0.0
        %1862 = vmatpush1.msra.mxu0 0.0
        %1863 = vmatprep.subr.mxu0 0.0
        %1864 = vmatpush1.msra.mxu0 0.0
        %1865 = vmatprep.subr.mxu0 0.0
        %1866 = vmatpush1.msra.mxu0 0.0
        %1867 = vmatprep.subr.mxu0 0.0
        %1868 = vmatpush1.msra.mxu0 0.0
        %1869 = vmatprep.subr.mxu0 0.0
        %1870 = vmatpush1.msra.mxu0 0.0
        %1871 = vmatprep.subr.mxu0 0.0
        %1872 = vmatpush1.msra.mxu0 0.0
        %1873 = vmatprep.mubr.f32.mxu0 0.0
        %1874 = vmatmul.mubr.f32.gmra.mrb[0].mxu0 %v1807
        %v1875 = vpop.f32.mrb[0].mxu0
        %v1876 = vadd.f32 0.0, %v1875
        %v1877 = vpop.f32.mrb[0].mxu0
        %1878 = vdwg.mxu0
        %v1879 = vadd.f32 %v1675, %v1876
        %v1880 = vld [vmem:[%s739] sm:$0x1]
        %v1882 = vlaneseq
        %v1883 = vshrl.u32 %v1882, 7
        %v1884 = vsub.s32 0, %v1883
        %v1885 = vrot.slane %v1880, %v1884
        %v1887 = vadd.f32 %v1879, %v1885
        %1888 = vst.msk [vmem:[#allocation2] sm:$0xff] %vm764, %v1887
        %p1889 = scmp.eq.s32.totalorder %s34, 1
        // Predicated region
        $region93: #{tpu_custom_call.1} parent=83 // pred_check
          %p1890 = pneg %p1889
        $region94: #{tpu_custom_call.1} parent=83 // pred_check_branch
          %1892 = sbr.rel (%p1890) target = $region96
        $region95: #{tpu_custom_call.1} parent=83 // pred_region
          %v1893 = vld [vmem:[%s14] sm:$0x1]
          %v1894 = vld [vmem:[%s15] sm:$0x1]
          %v1895 = vsel %vm764, %v1887, 0.0
          %1896 = vadd.xlane.f32.xlu0 %v1895
          %v1897 = vpop.xlane.xlu0 %1896
          %v1898 = vmul.f32 %v1897, %v768
          %v1899 = vsub.f32 %v1887, %v1898
          %v1900 = vmul.f32 %v1899, %v1899
          %v1901 = vsel %vm764, %v1900, 0.0
          %1902 = vadd.xlane.f32.xlu0 %v1901
          %v1903 = vpop.xlane.xlu0 %1902
          %v1904 = vmul.f32 %v1903, %v775
          %v1906 = vlaneseq
          %v1907 = vshrl.u32 %v1906, 7
          %v1908 = vsub.s32 0, %v1907
          %v1909 = vrot.slane %v1893, %v1908
          %v1911 = vmul.f32 %v1909, %v1899
          %v1912 = vrsqrt.pop %v1904
          %v1913 = vmul.f32 %v1904, %v1912
          %vm1914 = vcmp.eq.f32.partialorder %v1904, inf
          %v1915 = vsel %vm1914, %v1904, %v1913
          %vm1916 = vcmp.eq.f32.partialorder %v1904, 0.0
          %v1917 = vand.u32 %v1904, 2147483648
          %v1918 = vsel %vm1916, %v1917, %v1915
          %v1919 = vadd.f32 %v1918, 1e-06
          %v1920 = vrcp.pop %v1919
          %v1921 = vmul.f32 %v1911, %v1920
          %v1923 = vlaneseq
          %v1924 = vshrl.u32 %v1923, 7
          %v1925 = vsub.s32 0, %v1924
          %v1926 = vrot.slane %v1894, %v1925
          %v1928 = vadd.f32 %v1921, %v1926
          %1929 = vst.msk [vmem:[#allocation9] sm:$0xff] %vm764, %v1928
        $region96: #{tpu_custom_call.1} parent=83 // pred_fallthru
          _
        %s1930 = scalar_lea.vmem [#allocation5], 1
        %v1931 = vld [vmem:[%s1930] sm:$0x1]
        %s1932 = sadd.s32 0, 8
        %s1933 = scalar_lea.vmem [#allocation2], %s1932
        %v1934 = vld [vmem:[%s1933] sm:$0xff]
        %v1935 = vld [vmem:[%s698] sm:$0x1]
        %v1936 = vld [vmem:[%s701] sm:$0x1]
        %v1937 = vsel %vm764, %v1934, 0.0
        %1938 = vadd.xlane.f32.xlu0 %v1937
        %v1939 = vpop.xlane.xlu0 %1938
        %v1940 = vmul.f32 %v1939, %v768
        %v1941 = vsub.f32 %v1934, %v1940
        %v1942 = vmul.f32 %v1941, %v1941
        %v1943 = vsel %vm764, %v1942, 0.0
        %1944 = vadd.xlane.f32.xlu0 %v1943
        %v1945 = vpop.xlane.xlu0 %1944
        %v1946 = vmul.f32 %v1945, %v775
        %v1948 = vlaneseq
        %v1949 = vshrl.u32 %v1948, 7
        %v1950 = vsub.s32 0, %v1949
        %v1951 = vrot.slane %v1935, %v1950
        %v1953 = vmul.f32 %v1951, %v1941
        %v1954 = vrsqrt.pop %v1946
        %v1955 = vmul.f32 %v1946, %v1954
        %vm1956 = vcmp.eq.f32.partialorder %v1946, inf
        %v1957 = vsel %vm1956, %v1946, %v1955
        %vm1958 = vcmp.eq.f32.partialorder %v1946, 0.0
        %v1959 = vand.u32 %v1946, 2147483648
        %v1960 = vsel %vm1958, %v1959, %v1957
        %v1961 = vadd.f32 %v1960, 1e-06
        %v1962 = vrcp.pop %v1961
        %v1963 = vmul.f32 %v1953, %v1962
        %v1965 = vlaneseq
        %v1966 = vshrl.u32 %v1965, 7
        %v1967 = vsub.s32 0, %v1966
        %v1968 = vrot.slane %v1936, %v1967
        %v1970 = vadd.f32 %v1963, %v1968
        %v1971 = vld [vmem:[%s706] sm:$0xff]
        %v1972 = vld [vmem:[%s706 + $0x8] sm:$0xff]
        %v1973 = vld [vmem:[%s706 + $0x10] sm:$0xff]
        %v1974 = vld [vmem:[%s706 + $0x18] sm:$0xff]
        %v1975 = vld [vmem:[%s709] sm:$0x1]
        %v1977 = vlaneseq
        %v1978 = vshrl.u32 %v1977, 7
        %v1979 = vsub.s32 0, %v1978
        %v1980 = vrot.slane %v1975, %v1979
        %v1983 = vsel %vm764, %v1970, 0
        %1985 = vmatprep.subr.mxu0 0.0
        %1986 = vmatpush1.msra.mxu0 %v1971
        %1987 = vmatprep.subr.mxu0 0.0
        %1988 = vmatpush1.msra.mxu0 %v1972
        %1989 = vmatprep.subr.mxu0 0.0
        %1990 = vmatpush1.msra.mxu0 %v1973
        %1991 = vmatprep.subr.mxu0 0.0
        %1992 = vmatpush1.msra.mxu0 %v1974
        %1993 = vmatprep.subr.mxu0 0.0
        %1994 = vmatpush1.msra.mxu0 0.0
        %1995 = vmatprep.subr.mxu0 0.0
        %1996 = vmatpush1.msra.mxu0 0.0
        %1997 = vmatprep.subr.mxu0 0.0
        %1998 = vmatpush1.msra.mxu0 0.0
        %1999 = vmatprep.subr.mxu0 0.0
        %2000 = vmatpush1.msra.mxu0 0.0
        %2001 = vmatprep.subr.mxu0 0.0
        %2002 = vmatpush1.msra.mxu0 0.0
        %2003 = vmatprep.subr.mxu0 0.0
        %2004 = vmatpush1.msra.mxu0 0.0
        %2005 = vmatprep.subr.mxu0 0.0
        %2006 = vmatpush1.msra.mxu0 0.0
        %2007 = vmatprep.subr.mxu0 0.0
        %2008 = vmatpush1.msra.mxu0 0.0
        %2009 = vmatprep.subr.mxu0 0.0
        %2010 = vmatpush1.msra.mxu0 0.0
        %2011 = vmatprep.subr.mxu0 0.0
        %2012 = vmatpush1.msra.mxu0 0.0
        %2013 = vmatprep.subr.mxu0 0.0
        %2014 = vmatpush1.msra.mxu0 0.0
        %2015 = vmatprep.subr.mxu0 0.0
        %2016 = vmatpush1.msra.mxu0 0.0
        %2017 = vmatprep.subr.mxu0 0.0
        %2018 = vmatpush1.msra.mxu0 0.0
        %2019 = vmatprep.subr.mxu0 0.0
        %2020 = vmatpush1.msra.mxu0 0.0
        %2021 = vmatprep.subr.mxu0 0.0
        %2022 = vmatpush1.msra.mxu0 0.0
        %2023 = vmatprep.subr.mxu0 0.0
        %2024 = vmatpush1.msra.mxu0 0.0
        %2025 = vmatprep.subr.mxu0 0.0
        %2026 = vmatpush1.msra.mxu0 0.0
        %2027 = vmatprep.subr.mxu0 0.0
        %2028 = vmatpush1.msra.mxu0 0.0
        %2029 = vmatprep.subr.mxu0 0.0
        %2030 = vmatpush1.msra.mxu0 0.0
        %2031 = vmatprep.subr.mxu0 0.0
        %2032 = vmatpush1.msra.mxu0 0.0
        %2033 = vmatprep.subr.mxu0 0.0
        %2034 = vmatpush1.msra.mxu0 0.0
        %2035 = vmatprep.subr.mxu0 0.0
        %2036 = vmatpush1.msra.mxu0 0.0
        %2037 = vmatprep.subr.mxu0 0.0
        %2038 = vmatpush1.msra.mxu0 0.0
        %2039 = vmatprep.subr.mxu0 0.0
        %2040 = vmatpush1.msra.mxu0 0.0
        %2041 = vmatprep.subr.mxu0 0.0
        %2042 = vmatpush1.msra.mxu0 0.0
        %2043 = vmatprep.subr.mxu0 0.0
        %2044 = vmatpush1.msra.mxu0 0.0
        %2045 = vmatprep.subr.mxu0 0.0
        %2046 = vmatpush1.msra.mxu0 0.0
        %2047 = vmatprep.subr.mxu0 0.0
        %2048 = vmatpush1.msra.mxu0 0.0
        %2049 = vmatprep.mubr.f32.mxu0 0.0
        %2050 = vmatmul.mubr.f32.gmra.mrb[0].mxu0 %v1983
        %v2051 = vpop.f32.mrb[0].mxu0
        %v2052 = vadd.f32 %v1980, %v2051
        %v2053 = vpop.f32.mrb[0].mxu0
        %2054 = vdwg.mxu0
        %2055 = vst.msk [vmem:[#allocation3] sm:$0xff] %vm885, %v2052
        %v2056 = vld [vmem:[#allocation3] sm:$0xff]
        %v2057 = vld [vmem:[#allocation3] sm:$0xff]
        %v2059 = vlaneseq
        %v2060 = vshrl.u32 %v2059, 7
        %v2061 = vsub.s32 0, %v2060
        %v2062 = vrot.slane %v1931, %v2061
        %2065 = vrot.lane.b32.xlu0 %v2057, 96
        %v2066 = vpop.permute.xlu0 %2065
        %v2068 = vsel %vm898, %v2056, 0
        %v2070 = vsel %vm898, %v2066, 0
        %2072 = vmatprep.subr.mxu0 0.0
        %2073 = vmatpush1.xpose.msra.mxu0 %v2070
        %2074 = vmatprep.subr.mxu0 0.0
        %2075 = vmatpush1.xpose.msra.mxu0 0.0
        %2076 = vmatprep.subr.mxu0 0.0
        %2077 = vmatpush1.xpose.msra.mxu0 0.0
        %2078 = vmatprep.subr.mxu0 0.0
        %2079 = vmatpush1.xpose.msra.mxu0 0.0
        %2080 = vmatprep.subr.mxu0 0.0
        %2081 = vmatpush1.xpose.msra.mxu0 0.0
        %2082 = vmatprep.subr.mxu0 0.0
        %2083 = vmatpush1.xpose.msra.mxu0 0.0
        %2084 = vmatprep.subr.mxu0 0.0
        %2085 = vmatpush1.xpose.msra.mxu0 0.0
        %2086 = vmatprep.subr.mxu0 0.0
        %2087 = vmatpush1.xpose.msra.mxu0 0.0
        %2088 = vmatprep.subr.mxu0 0.0
        %2089 = vmatpush1.xpose.msra.mxu0 0.0
        %2090 = vmatprep.subr.mxu0 0.0
        %2091 = vmatpush1.xpose.msra.mxu0 0.0
        %2092 = vmatprep.subr.mxu0 0.0
        %2093 = vmatpush1.xpose.msra.mxu0 0.0
        %2094 = vmatprep.subr.mxu0 0.0
        %2095 = vmatpush1.xpose.msra.mxu0 0.0
        %2096 = vmatprep.subr.mxu0 0.0
        %2097 = vmatpush1.xpose.msra.mxu0 0.0
        %2098 = vmatprep.subr.mxu0 0.0
        %2099 = vmatpush1.xpose.msra.mxu0 0.0
        %2100 = vmatprep.subr.mxu0 0.0
        %2101 = vmatpush1.xpose.msra.mxu0 0.0
        %2102 = vmatprep.subr.mxu0 0.0
        %2103 = vmatpush1.xpose.msra.mxu0 0.0
        %2104 = vmatprep.subr.mxu0 0.0
        %2105 = vmatpush1.xpose.msra.mxu0 0.0
        %2106 = vmatprep.subr.mxu0 0.0
        %2107 = vmatpush1.xpose.msra.mxu0 0.0
        %2108 = vmatprep.subr.mxu0 0.0
        %2109 = vmatpush1.xpose.msra.mxu0 0.0
        %2110 = vmatprep.subr.mxu0 0.0
        %2111 = vmatpush1.xpose.msra.mxu0 0.0
        %2112 = vmatprep.subr.mxu0 0.0
        %2113 = vmatpush1.xpose.msra.mxu0 0.0
        %2114 = vmatprep.subr.mxu0 0.0
        %2115 = vmatpush1.xpose.msra.mxu0 0.0
        %2116 = vmatprep.subr.mxu0 0.0
        %2117 = vmatpush1.xpose.msra.mxu0 0.0
        %2118 = vmatprep.subr.mxu0 0.0
        %2119 = vmatpush1.xpose.msra.mxu0 0.0
        %2120 = vmatprep.subr.mxu0 0.0
        %2121 = vmatpush1.xpose.msra.mxu0 0.0
        %2122 = vmatprep.subr.mxu0 0.0
        %2123 = vmatpush1.xpose.msra.mxu0 0.0
        %2124 = vmatprep.subr.mxu0 0.0
        %2125 = vmatpush1.xpose.msra.mxu0 0.0
        %2126 = vmatprep.subr.mxu0 0.0
        %2127 = vmatpush1.xpose.msra.mxu0 0.0
        %2128 = vmatprep.subr.mxu0 0.0
        %2129 = vmatpush1.xpose.msra.mxu0 0.0
        %2130 = vmatprep.subr.mxu0 0.0
        %2131 = vmatpush1.xpose.msra.mxu0 0.0
        %2132 = vmatprep.subr.mxu0 0.0
        %2133 = vmatpush1.xpose.msra.mxu0 0.0
        %2134 = vmatprep.subr.mxu0 0.0
        %2135 = vmatpush1.xpose.msra.mxu0 0.0
        %2136 = vmatprep.mubr.f32.mxu0 0.0
        %2137 = vmatmul.mubr.f32.gmra.mrb[0].mxu0 %v2068
        %v2138 = vpop.f32.mrb[0].mxu0
        %v2139 = vadd.f32 %v2062, %v2138
        %v2140 = vpop.f32.mrb[0].mxu0
        %2141 = vdwg.mxu0
        %v2142 = vsel %vm898, %v2139, -inf
        %2143 = vmax.xlane.f32.xlu0 %v2142
        %v2144 = vpop.xlane.xlu0 %2143
        %v2145 = vsub.f32 %v2139, %v2144
        %v2146 = vmul.f32 %v2145, 1.442695
        %v2147 = vpow.pop %v2146
        %v2148 = vsel %vm898, %v2147, 0.0
        %2149 = vadd.xlane.f32.xlu0 %v2148
        %v2150 = vpop.xlane.xlu0 %2149
        %v2151 = vrcp.pop %v2150
        %v2152 = vmul.f32 %v2147, %v2151
        %2153 = vrot.lane.b32.xlu0 %v2057, 64
        %v2154 = vpop.permute.xlu0 %2153
        %v2157 = vsel %vm898, %v2152, 0
        %2159 = vmatprep.subr.mxu0 0.0
        %2160 = vmatpush1.msra.mxu0 %v2154
        %2161 = vmatprep.subr.mxu0 0.0
        %2162 = vmatpush1.msra.mxu0 0.0
        %2163 = vmatprep.subr.mxu0 0.0
        %2164 = vmatpush1.msra.mxu0 0.0
        %2165 = vmatprep.subr.mxu0 0.0
        %2166 = vmatpush1.msra.mxu0 0.0
        %2167 = vmatprep.subr.mxu0 0.0
        %2168 = vmatpush1.msra.mxu0 0.0
        %2169 = vmatprep.subr.mxu0 0.0
        %2170 = vmatpush1.msra.mxu0 0.0
        %2171 = vmatprep.subr.mxu0 0.0
        %2172 = vmatpush1.msra.mxu0 0.0
        %2173 = vmatprep.subr.mxu0 0.0
        %2174 = vmatpush1.msra.mxu0 0.0
        %2175 = vmatprep.subr.mxu0 0.0
        %2176 = vmatpush1.msra.mxu0 0.0
        %2177 = vmatprep.subr.mxu0 0.0
        %2178 = vmatpush1.msra.mxu0 0.0
        %2179 = vmatprep.subr.mxu0 0.0
        %2180 = vmatpush1.msra.mxu0 0.0
        %2181 = vmatprep.subr.mxu0 0.0
        %2182 = vmatpush1.msra.mxu0 0.0
        %2183 = vmatprep.subr.mxu0 0.0
        %2184 = vmatpush1.msra.mxu0 0.0
        %2185 = vmatprep.subr.mxu0 0.0
        %2186 = vmatpush1.msra.mxu0 0.0
        %2187 = vmatprep.subr.mxu0 0.0
        %2188 = vmatpush1.msra.mxu0 0.0
        %2189 = vmatprep.subr.mxu0 0.0
        %2190 = vmatpush1.msra.mxu0 0.0
        %2191 = vmatprep.subr.mxu0 0.0
        %2192 = vmatpush1.msra.mxu0 0.0
        %2193 = vmatprep.subr.mxu0 0.0
        %2194 = vmatpush1.msra.mxu0 0.0
        %2195 = vmatprep.subr.mxu0 0.0
        %2196 = vmatpush1.msra.mxu0 0.0
        %2197 = vmatprep.subr.mxu0 0.0
        %2198 = vmatpush1.msra.mxu0 0.0
        %2199 = vmatprep.subr.mxu0 0.0
        %2200 = vmatpush1.msra.mxu0 0.0
        %2201 = vmatprep.subr.mxu0 0.0
        %2202 = vmatpush1.msra.mxu0 0.0
        %2203 = vmatprep.subr.mxu0 0.0
        %2204 = vmatpush1.msra.mxu0 0.0
        %2205 = vmatprep.subr.mxu0 0.0
        %2206 = vmatpush1.msra.mxu0 0.0
        %2207 = vmatprep.subr.mxu0 0.0
        %2208 = vmatpush1.msra.mxu0 0.0
        %2209 = vmatprep.subr.mxu0 0.0
        %2210 = vmatpush1.msra.mxu0 0.0
        %2211 = vmatprep.subr.mxu0 0.0
        %2212 = vmatpush1.msra.mxu0 0.0
        %2213 = vmatprep.subr.mxu0 0.0
        %2214 = vmatpush1.msra.mxu0 0.0
        %2215 = vmatprep.subr.mxu0 0.0
        %2216 = vmatpush1.msra.mxu0 0.0
        %2217 = vmatprep.subr.mxu0 0.0
        %2218 = vmatpush1.msra.mxu0 0.0
        %2219 = vmatprep.subr.mxu0 0.0
        %2220 = vmatpush1.msra.mxu0 0.0
        %2221 = vmatprep.subr.mxu0 0.0
        %2222 = vmatpush1.msra.mxu0 0.0
        %2223 = vmatprep.mubr.f32.mxu0 0.0
        %2224 = vmatmul.mubr.f32.gmra.mrb[0].mxu0 %v2157
        %v2225 = vpop.f32.mrb[0].mxu0
        %v2226 = vadd.f32 0.0, %v2225
        %v2227 = vpop.f32.mrb[0].mxu0
        %2228 = vdwg.mxu0
        %2229 = vst.msk [vmem:[#allocation4] sm:$0xff] %vm898, %v2226
        %v2230 = vld [vmem:[#allocation3] sm:$0xff]
        %v2231 = vld [vmem:[#allocation3] sm:$0xff]
        %2233 = vrot.lane.b32.xlu0 %v2230, 120
        %v2234 = vpop.permute.xlu0 %2233
        %2236 = vrot.lane.b32.xlu0 %v2231, 88
        %v2237 = vpop.permute.xlu0 %2236
        %v2238 = vsel %vm898, %v2234, 0
        %v2240 = vsel %vm898, %v2237, 0
        %2242 = vmatprep.subr.mxu0 0.0
        %2243 = vmatpush1.xpose.msra.mxu0 %v2240
        %2244 = vmatprep.subr.mxu0 0.0
        %2245 = vmatpush1.xpose.msra.mxu0 0.0
        %2246 = vmatprep.subr.mxu0 0.0
        %2247 = vmatpush1.xpose.msra.mxu0 0.0
        %2248 = vmatprep.subr.mxu0 0.0
        %2249 = vmatpush1.xpose.msra.mxu0 0.0
        %2250 = vmatprep.subr.mxu0 0.0
        %2251 = vmatpush1.xpose.msra.mxu0 0.0
        %2252 = vmatprep.subr.mxu0 0.0
        %2253 = vmatpush1.xpose.msra.mxu0 0.0
        %2254 = vmatprep.subr.mxu0 0.0
        %2255 = vmatpush1.xpose.msra.mxu0 0.0
        %2256 = vmatprep.subr.mxu0 0.0
        %2257 = vmatpush1.xpose.msra.mxu0 0.0
        %2258 = vmatprep.subr.mxu0 0.0
        %2259 = vmatpush1.xpose.msra.mxu0 0.0
        %2260 = vmatprep.subr.mxu0 0.0
        %2261 = vmatpush1.xpose.msra.mxu0 0.0
        %2262 = vmatprep.subr.mxu0 0.0
        %2263 = vmatpush1.xpose.msra.mxu0 0.0
        %2264 = vmatprep.subr.mxu0 0.0
        %2265 = vmatpush1.xpose.msra.mxu0 0.0
        %2266 = vmatprep.subr.mxu0 0.0
        %2267 = vmatpush1.xpose.msra.mxu0 0.0
        %2268 = vmatprep.subr.mxu0 0.0
        %2269 = vmatpush1.xpose.msra.mxu0 0.0
        %2270 = vmatprep.subr.mxu0 0.0
        %2271 = vmatpush1.xpose.msra.mxu0 0.0
        %2272 = vmatprep.subr.mxu0 0.0
        %2273 = vmatpush1.xpose.msra.mxu0 0.0
        %2274 = vmatprep.subr.mxu0 0.0
        %2275 = vmatpush1.xpose.msra.mxu0 0.0
        %2276 = vmatprep.subr.mxu0 0.0
        %2277 = vmatpush1.xpose.msra.mxu0 0.0
        %2278 = vmatprep.subr.mxu0 0.0
        %2279 = vmatpush1.xpose.msra.mxu0 0.0
        %2280 = vmatprep.subr.mxu0 0.0
        %2281 = vmatpush1.xpose.msra.mxu0 0.0
        %2282 = vmatprep.subr.mxu0 0.0
        %2283 = vmatpush1.xpose.msra.mxu0 0.0
        %2284 = vmatprep.subr.mxu0 0.0
        %2285 = vmatpush1.xpose.msra.mxu0 0.0
        %2286 = vmatprep.subr.mxu0 0.0
        %2287 = vmatpush1.xpose.msra.mxu0 0.0
        %2288 = vmatprep.subr.mxu0 0.0
        %2289 = vmatpush1.xpose.msra.mxu0 0.0
        %2290 = vmatprep.subr.mxu0 0.0
        %2291 = vmatpush1.xpose.msra.mxu0 0.0
        %2292 = vmatprep.subr.mxu0 0.0
        %2293 = vmatpush1.xpose.msra.mxu0 0.0
        %2294 = vmatprep.subr.mxu0 0.0
        %2295 = vmatpush1.xpose.msra.mxu0 0.0
        %2296 = vmatprep.subr.mxu0 0.0
        %2297 = vmatpush1.xpose.msra.mxu0 0.0
        %2298 = vmatprep.subr.mxu0 0.0
        %2299 = vmatpush1.xpose.msra.mxu0 0.0
        %2300 = vmatprep.subr.mxu0 0.0
        %2301 = vmatpush1.xpose.msra.mxu0 0.0
        %2302 = vmatprep.subr.mxu0 0.0
        %2303 = vmatpush1.xpose.msra.mxu0 0.0
        %2304 = vmatprep.subr.mxu0 0.0
        %2305 = vmatpush1.xpose.msra.mxu0 0.0
        %2306 = vmatprep.mubr.f32.mxu0 0.0
        %2307 = vmatmul.mubr.f32.gmra.mrb[0].mxu0 %v2238
        %v2308 = vpop.f32.mrb[0].mxu0
        %v2309 = vadd.f32 %v2062, %v2308
        %v2310 = vpop.f32.mrb[0].mxu0
        %2311 = vdwg.mxu0
        %v2312 = vsel %vm898, %v2309, -inf
        %2313 = vmax.xlane.f32.xlu0 %v2312
        %v2314 = vpop.xlane.xlu0 %2313
        %v2315 = vsub.f32 %v2309, %v2314
        %v2316 = vmul.f32 %v2315, 1.442695
        %v2317 = vpow.pop %v2316
        %v2318 = vsel %vm898, %v2317, 0.0
        %2319 = vadd.xlane.f32.xlu0 %v2318
        %v2320 = vpop.xlane.xlu0 %2319
        %v2321 = vrcp.pop %v2320
        %v2322 = vmul.f32 %v2317, %v2321
        %2323 = vrot.lane.b32.xlu0 %v2231, 56
        %v2324 = vpop.permute.xlu0 %2323
        %v2327 = vsel %vm898, %v2322, 0
        %2329 = vmatprep.subr.mxu0 0.0
        %2330 = vmatpush1.msra.mxu0 %v2324
        %2331 = vmatprep.subr.mxu0 0.0
        %2332 = vmatpush1.msra.mxu0 0.0
        %2333 = vmatprep.subr.mxu0 0.0
        %2334 = vmatpush1.msra.mxu0 0.0
        %2335 = vmatprep.subr.mxu0 0.0
        %2336 = vmatpush1.msra.mxu0 0.0
        %2337 = vmatprep.subr.mxu0 0.0
        %2338 = vmatpush1.msra.mxu0 0.0
        %2339 = vmatprep.subr.mxu0 0.0
        %2340 = vmatpush1.msra.mxu0 0.0
        %2341 = vmatprep.subr.mxu0 0.0
        %2342 = vmatpush1.msra.mxu0 0.0
        %2343 = vmatprep.subr.mxu0 0.0
        %2344 = vmatpush1.msra.mxu0 0.0
        %2345 = vmatprep.subr.mxu0 0.0
        %2346 = vmatpush1.msra.mxu0 0.0
        %2347 = vmatprep.subr.mxu0 0.0
        %2348 = vmatpush1.msra.mxu0 0.0
        %2349 = vmatprep.subr.mxu0 0.0
        %2350 = vmatpush1.msra.mxu0 0.0
        %2351 = vmatprep.subr.mxu0 0.0
        %2352 = vmatpush1.msra.mxu0 0.0
        %2353 = vmatprep.subr.mxu0 0.0
        %2354 = vmatpush1.msra.mxu0 0.0
        %2355 = vmatprep.subr.mxu0 0.0
        %2356 = vmatpush1.msra.mxu0 0.0
        %2357 = vmatprep.subr.mxu0 0.0
        %2358 = vmatpush1.msra.mxu0 0.0
        %2359 = vmatprep.subr.mxu0 0.0
        %2360 = vmatpush1.msra.mxu0 0.0
        %2361 = vmatprep.subr.mxu0 0.0
        %2362 = vmatpush1.msra.mxu0 0.0
        %2363 = vmatprep.subr.mxu0 0.0
        %2364 = vmatpush1.msra.mxu0 0.0
        %2365 = vmatprep.subr.mxu0 0.0
        %2366 = vmatpush1.msra.mxu0 0.0
        %2367 = vmatprep.subr.mxu0 0.0
        %2368 = vmatpush1.msra.mxu0 0.0
        %2369 = vmatprep.subr.mxu0 0.0
        %2370 = vmatpush1.msra.mxu0 0.0
        %2371 = vmatprep.subr.mxu0 0.0
        %2372 = vmatpush1.msra.mxu0 0.0
        %2373 = vmatprep.subr.mxu0 0.0
        %2374 = vmatpush1.msra.mxu0 0.0
        %2375 = vmatprep.subr.mxu0 0.0
        %2376 = vmatpush1.msra.mxu0 0.0
        %2377 = vmatprep.subr.mxu0 0.0
        %2378 = vmatpush1.msra.mxu0 0.0
        %2379 = vmatprep.subr.mxu0 0.0
        %2380 = vmatpush1.msra.mxu0 0.0
        %2381 = vmatprep.subr.mxu0 0.0
        %2382 = vmatpush1.msra.mxu0 0.0
        %2383 = vmatprep.subr.mxu0 0.0
        %2384 = vmatpush1.msra.mxu0 0.0
        %2385 = vmatprep.subr.mxu0 0.0
        %2386 = vmatpush1.msra.mxu0 0.0
        %2387 = vmatprep.subr.mxu0 0.0
        %2388 = vmatpush1.msra.mxu0 0.0
        %2389 = vmatprep.subr.mxu0 0.0
        %2390 = vmatpush1.msra.mxu0 0.0
        %2391 = vmatprep.subr.mxu0 0.0
        %2392 = vmatpush1.msra.mxu0 0.0
        %2393 = vmatprep.mubr.f32.mxu0 0.0
        %2394 = vmatmul.mubr.f32.gmra.mrb[0].mxu0 %v2327
        %v2395 = vpop.f32.mrb[0].mxu0
        %v2396 = vadd.f32 0.0, %v2395
        %v2397 = vpop.f32.mrb[0].mxu0
        %2398 = vdwg.mxu0
        %2400 = vrot.lane.b32.xlu0 %v2396, 8
        %v2401 = vpop.permute.xlu0 %2400
        %2403 = vst.msk [vmem:[#allocation4] sm:$0xff] %vm1235, %v2401
        %v2404 = vld [vmem:[#allocation3] sm:$0xff]
        %v2405 = vld [vmem:[#allocation3] sm:$0xff]
        %2407 = vrot.lane.b32.xlu0 %v2404, 112
        %v2408 = vpop.permute.xlu0 %2407
        %2410 = vrot.lane.b32.xlu0 %v2405, 80
        %v2411 = vpop.permute.xlu0 %2410
        %v2412 = vsel %vm898, %v2408, 0
        %v2414 = vsel %vm898, %v2411, 0
        %2416 = vmatprep.subr.mxu0 0.0
        %2417 = vmatpush1.xpose.msra.mxu0 %v2414
        %2418 = vmatprep.subr.mxu0 0.0
        %2419 = vmatpush1.xpose.msra.mxu0 0.0
        %2420 = vmatprep.subr.mxu0 0.0
        %2421 = vmatpush1.xpose.msra.mxu0 0.0
        %2422 = vmatprep.subr.mxu0 0.0
        %2423 = vmatpush1.xpose.msra.mxu0 0.0
        %2424 = vmatprep.subr.mxu0 0.0
        %2425 = vmatpush1.xpose.msra.mxu0 0.0
        %2426 = vmatprep.subr.mxu0 0.0
        %2427 = vmatpush1.xpose.msra.mxu0 0.0
        %2428 = vmatprep.subr.mxu0 0.0
        %2429 = vmatpush1.xpose.msra.mxu0 0.0
        %2430 = vmatprep.subr.mxu0 0.0
        %2431 = vmatpush1.xpose.msra.mxu0 0.0
        %2432 = vmatprep.subr.mxu0 0.0
        %2433 = vmatpush1.xpose.msra.mxu0 0.0
        %2434 = vmatprep.subr.mxu0 0.0
        %2435 = vmatpush1.xpose.msra.mxu0 0.0
        %2436 = vmatprep.subr.mxu0 0.0
        %2437 = vmatpush1.xpose.msra.mxu0 0.0
        %2438 = vmatprep.subr.mxu0 0.0
        %2439 = vmatpush1.xpose.msra.mxu0 0.0
        %2440 = vmatprep.subr.mxu0 0.0
        %2441 = vmatpush1.xpose.msra.mxu0 0.0
        %2442 = vmatprep.subr.mxu0 0.0
        %2443 = vmatpush1.xpose.msra.mxu0 0.0
        %2444 = vmatprep.subr.mxu0 0.0
        %2445 = vmatpush1.xpose.msra.mxu0 0.0
        %2446 = vmatprep.subr.mxu0 0.0
        %2447 = vmatpush1.xpose.msra.mxu0 0.0
        %2448 = vmatprep.subr.mxu0 0.0
        %2449 = vmatpush1.xpose.msra.mxu0 0.0
        %2450 = vmatprep.subr.mxu0 0.0
        %2451 = vmatpush1.xpose.msra.mxu0 0.0
        %2452 = vmatprep.subr.mxu0 0.0
        %2453 = vmatpush1.xpose.msra.mxu0 0.0
        %2454 = vmatprep.subr.mxu0 0.0
        %2455 = vmatpush1.xpose.msra.mxu0 0.0
        %2456 = vmatprep.subr.mxu0 0.0
        %2457 = vmatpush1.xpose.msra.mxu0 0.0
        %2458 = vmatprep.subr.mxu0 0.0
        %2459 = vmatpush1.xpose.msra.mxu0 0.0
        %2460 = vmatprep.subr.mxu0 0.0
        %2461 = vmatpush1.xpose.msra.mxu0 0.0
        %2462 = vmatprep.subr.mxu0 0.0
        %2463 = vmatpush1.xpose.msra.mxu0 0.0
        %2464 = vmatprep.subr.mxu0 0.0
        %2465 = vmatpush1.xpose.msra.mxu0 0.0
        %2466 = vmatprep.subr.mxu0 0.0
        %2467 = vmatpush1.xpose.msra.mxu0 0.0
        %2468 = vmatprep.subr.mxu0 0.0
        %2469 = vmatpush1.xpose.msra.mxu0 0.0
        %2470 = vmatprep.subr.mxu0 0.0
        %2471 = vmatpush1.xpose.msra.mxu0 0.0
        %2472 = vmatprep.subr.mxu0 0.0
        %2473 = vmatpush1.xpose.msra.mxu0 0.0
        %2474 = vmatprep.subr.mxu0 0.0
        %2475 = vmatpush1.xpose.msra.mxu0 0.0
        %2476 = vmatprep.subr.mxu0 0.0
        %2477 = vmatpush1.xpose.msra.mxu0 0.0
        %2478 = vmatprep.subr.mxu0 0.0
        %2479 = vmatpush1.xpose.msra.mxu0 0.0
        %2480 = vmatprep.mubr.f32.mxu0 0.0
        %2481 = vmatmul.mubr.f32.gmra.mrb[0].mxu0 %v2412
        %v2482 = vpop.f32.mrb[0].mxu0
        %v2483 = vadd.f32 %v2062, %v2482
        %v2484 = vpop.f32.mrb[0].mxu0
        %2485 = vdwg.mxu0
        %v2486 = vsel %vm898, %v2483, -inf
        %2487 = vmax.xlane.f32.xlu0 %v2486
        %v2488 = vpop.xlane.xlu0 %2487
        %v2489 = vsub.f32 %v2483, %v2488
        %v2490 = vmul.f32 %v2489, 1.442695
        %v2491 = vpow.pop %v2490
        %v2492 = vsel %vm898, %v2491, 0.0
        %2493 = vadd.xlane.f32.xlu0 %v2492
        %v2494 = vpop.xlane.xlu0 %2493
        %v2495 = vrcp.pop %v2494
        %v2496 = vmul.f32 %v2491, %v2495
        %2497 = vrot.lane.b32.xlu0 %v2405, 48
        %v2498 = vpop.permute.xlu0 %2497
        %v2501 = vsel %vm898, %v2496, 0
        %2503 = vmatprep.subr.mxu0 0.0
        %2504 = vmatpush1.msra.mxu0 %v2498
        %2505 = vmatprep.subr.mxu0 0.0
        %2506 = vmatpush1.msra.mxu0 0.0
        %2507 = vmatprep.subr.mxu0 0.0
        %2508 = vmatpush1.msra.mxu0 0.0
        %2509 = vmatprep.subr.mxu0 0.0
        %2510 = vmatpush1.msra.mxu0 0.0
        %2511 = vmatprep.subr.mxu0 0.0
        %2512 = vmatpush1.msra.mxu0 0.0
        %2513 = vmatprep.subr.mxu0 0.0
        %2514 = vmatpush1.msra.mxu0 0.0
        %2515 = vmatprep.subr.mxu0 0.0
        %2516 = vmatpush1.msra.mxu0 0.0
        %2517 = vmatprep.subr.mxu0 0.0
        %2518 = vmatpush1.msra.mxu0 0.0
        %2519 = vmatprep.subr.mxu0 0.0
        %2520 = vmatpush1.msra.mxu0 0.0
        %2521 = vmatprep.subr.mxu0 0.0
        %2522 = vmatpush1.msra.mxu0 0.0
        %2523 = vmatprep.subr.mxu0 0.0
        %2524 = vmatpush1.msra.mxu0 0.0
        %2525 = vmatprep.subr.mxu0 0.0
        %2526 = vmatpush1.msra.mxu0 0.0
        %2527 = vmatprep.subr.mxu0 0.0
        %2528 = vmatpush1.msra.mxu0 0.0
        %2529 = vmatprep.subr.mxu0 0.0
        %2530 = vmatpush1.msra.mxu0 0.0
        %2531 = vmatprep.subr.mxu0 0.0
        %2532 = vmatpush1.msra.mxu0 0.0
        %2533 = vmatprep.subr.mxu0 0.0
        %2534 = vmatpush1.msra.mxu0 0.0
        %2535 = vmatprep.subr.mxu0 0.0
        %2536 = vmatpush1.msra.mxu0 0.0
        %2537 = vmatprep.subr.mxu0 0.0
        %2538 = vmatpush1.msra.mxu0 0.0
        %2539 = vmatprep.subr.mxu0 0.0
        %2540 = vmatpush1.msra.mxu0 0.0
        %2541 = vmatprep.subr.mxu0 0.0
        %2542 = vmatpush1.msra.mxu0 0.0
        %2543 = vmatprep.subr.mxu0 0.0
        %2544 = vmatpush1.msra.mxu0 0.0
        %2545 = vmatprep.subr.mxu0 0.0
        %2546 = vmatpush1.msra.mxu0 0.0
        %2547 = vmatprep.subr.mxu0 0.0
        %2548 = vmatpush1.msra.mxu0 0.0
        %2549 = vmatprep.subr.mxu0 0.0
        %2550 = vmatpush1.msra.mxu0 0.0
        %2551 = vmatprep.subr.mxu0 0.0
        %2552 = vmatpush1.msra.mxu0 0.0
        %2553 = vmatprep.subr.mxu0 0.0
        %2554 = vmatpush1.msra.mxu0 0.0
        %2555 = vmatprep.subr.mxu0 0.0
        %2556 = vmatpush1.msra.mxu0 0.0
        %2557 = vmatprep.subr.mxu0 0.0
        %2558 = vmatpush1.msra.mxu0 0.0
        %2559 = vmatprep.subr.mxu0 0.0
        %2560 = vmatpush1.msra.mxu0 0.0
        %2561 = vmatprep.subr.mxu0 0.0
        %2562 = vmatpush1.msra.mxu0 0.0
        %2563 = vmatprep.subr.mxu0 0.0
        %2564 = vmatpush1.msra.mxu0 0.0
        %2565 = vmatprep.subr.mxu0 0.0
        %2566 = vmatpush1.msra.mxu0 0.0
        %2567 = vmatprep.mubr.f32.mxu0 0.0
        %2568 = vmatmul.mubr.f32.gmra.mrb[0].mxu0 %v2501
        %v2569 = vpop.f32.mrb[0].mxu0
        %v2570 = vadd.f32 0.0, %v2569
        %v2571 = vpop.f32.mrb[0].mxu0
        %2572 = vdwg.mxu0
        %2574 = vrot.lane.b32.xlu0 %v2570, 16
        %v2575 = vpop.permute.xlu0 %2574
        %2577 = vst.msk [vmem:[#allocation4] sm:$0xff] %vm1410, %v2575
        %v2578 = vld [vmem:[#allocation3] sm:$0xff]
        %v2579 = vld [vmem:[#allocation3] sm:$0xff]
        %2581 = vrot.lane.b32.xlu0 %v2578, 104
        %v2582 = vpop.permute.xlu0 %2581
        %2584 = vrot.lane.b32.xlu0 %v2579, 72
        %v2585 = vpop.permute.xlu0 %2584
        %v2586 = vsel %vm898, %v2582, 0
        %v2588 = vsel %vm898, %v2585, 0
        %2590 = vmatprep.subr.mxu0 0.0
        %2591 = vmatpush1.xpose.msra.mxu0 %v2588
        %2592 = vmatprep.subr.mxu0 0.0
        %2593 = vmatpush1.xpose.msra.mxu0 0.0
        %2594 = vmatprep.subr.mxu0 0.0
        %2595 = vmatpush1.xpose.msra.mxu0 0.0
        %2596 = vmatprep.subr.mxu0 0.0
        %2597 = vmatpush1.xpose.msra.mxu0 0.0
        %2598 = vmatprep.subr.mxu0 0.0
        %2599 = vmatpush1.xpose.msra.mxu0 0.0
        %2600 = vmatprep.subr.mxu0 0.0
        %2601 = vmatpush1.xpose.msra.mxu0 0.0
        %2602 = vmatprep.subr.mxu0 0.0
        %2603 = vmatpush1.xpose.msra.mxu0 0.0
        %2604 = vmatprep.subr.mxu0 0.0
        %2605 = vmatpush1.xpose.msra.mxu0 0.0
        %2606 = vmatprep.subr.mxu0 0.0
        %2607 = vmatpush1.xpose.msra.mxu0 0.0
        %2608 = vmatprep.subr.mxu0 0.0
        %2609 = vmatpush1.xpose.msra.mxu0 0.0
        %2610 = vmatprep.subr.mxu0 0.0
        %2611 = vmatpush1.xpose.msra.mxu0 0.0
        %2612 = vmatprep.subr.mxu0 0.0
        %2613 = vmatpush1.xpose.msra.mxu0 0.0
        %2614 = vmatprep.subr.mxu0 0.0
        %2615 = vmatpush1.xpose.msra.mxu0 0.0
        %2616 = vmatprep.subr.mxu0 0.0
        %2617 = vmatpush1.xpose.msra.mxu0 0.0
        %2618 = vmatprep.subr.mxu0 0.0
        %2619 = vmatpush1.xpose.msra.mxu0 0.0
        %2620 = vmatprep.subr.mxu0 0.0
        %2621 = vmatpush1.xpose.msra.mxu0 0.0
        %2622 = vmatprep.subr.mxu0 0.0
        %2623 = vmatpush1.xpose.msra.mxu0 0.0
        %2624 = vmatprep.subr.mxu0 0.0
        %2625 = vmatpush1.xpose.msra.mxu0 0.0
        %2626 = vmatprep.subr.mxu0 0.0
        %2627 = vmatpush1.xpose.msra.mxu0 0.0
        %2628 = vmatprep.subr.mxu0 0.0
        %2629 = vmatpush1.xpose.msra.mxu0 0.0
        %2630 = vmatprep.subr.mxu0 0.0
        %2631 = vmatpush1.xpose.msra.mxu0 0.0
        %2632 = vmatprep.subr.mxu0 0.0
        %2633 = vmatpush1.xpose.msra.mxu0 0.0
        %2634 = vmatprep.subr.mxu0 0.0
        %2635 = vmatpush1.xpose.msra.mxu0 0.0
        %2636 = vmatprep.subr.mxu0 0.0
        %2637 = vmatpush1.xpose.msra.mxu0 0.0
        %2638 = vmatprep.subr.mxu0 0.0
        %2639 = vmatpush1.xpose.msra.mxu0 0.0
        %2640 = vmatprep.subr.mxu0 0.0
        %2641 = vmatpush1.xpose.msra.mxu0 0.0
        %2642 = vmatprep.subr.mxu0 0.0
        %2643 = vmatpush1.xpose.msra.mxu0 0.0
        %2644 = vmatprep.subr.mxu0 0.0
        %2645 = vmatpush1.xpose.msra.mxu0 0.0
        %2646 = vmatprep.subr.mxu0 0.0
        %2647 = vmatpush1.xpose.msra.mxu0 0.0
        %2648 = vmatprep.subr.mxu0 0.0
        %2649 = vmatpush1.xpose.msra.mxu0 0.0
        %2650 = vmatprep.subr.mxu0 0.0
        %2651 = vmatpush1.xpose.msra.mxu0 0.0
        %2652 = vmatprep.subr.mxu0 0.0
        %2653 = vmatpush1.xpose.msra.mxu0 0.0
        %2654 = vmatprep.mubr.f32.mxu0 0.0
        %2655 = vmatmul.mubr.f32.gmra.mrb[0].mxu0 %v2586
        %v2656 = vpop.f32.mrb[0].mxu0
        %v2657 = vadd.f32 %v2062, %v2656
        %v2658 = vpop.f32.mrb[0].mxu0
        %2659 = vdwg.mxu0
        %v2660 = vsel %vm898, %v2657, -inf
        %2661 = vmax.xlane.f32.xlu0 %v2660
        %v2662 = vpop.xlane.xlu0 %2661
        %v2663 = vsub.f32 %v2657, %v2662
        %v2664 = vmul.f32 %v2663, 1.442695
        %v2665 = vpow.pop %v2664
        %v2666 = vsel %vm898, %v2665, 0.0
        %2667 = vadd.xlane.f32.xlu0 %v2666
        %v2668 = vpop.xlane.xlu0 %2667
        %v2669 = vrcp.pop %v2668
        %v2670 = vmul.f32 %v2665, %v2669
        %2671 = vrot.lane.b32.xlu0 %v2579, 40
        %v2672 = vpop.permute.xlu0 %2671
        %v2675 = vsel %vm898, %v2670, 0
        %2677 = vmatprep.subr.mxu0 0.0
        %2678 = vmatpush1.msra.mxu0 %v2672
        %2679 = vmatprep.subr.mxu0 0.0
        %2680 = vmatpush1.msra.mxu0 0.0
        %2681 = vmatprep.subr.mxu0 0.0
        %2682 = vmatpush1.msra.mxu0 0.0
        %2683 = vmatprep.subr.mxu0 0.0
        %2684 = vmatpush1.msra.mxu0 0.0
        %2685 = vmatprep.subr.mxu0 0.0
        %2686 = vmatpush1.msra.mxu0 0.0
        %2687 = vmatprep.subr.mxu0 0.0
        %2688 = vmatpush1.msra.mxu0 0.0
        %2689 = vmatprep.subr.mxu0 0.0
        %2690 = vmatpush1.msra.mxu0 0.0
        %2691 = vmatprep.subr.mxu0 0.0
        %2692 = vmatpush1.msra.mxu0 0.0
        %2693 = vmatprep.subr.mxu0 0.0
        %2694 = vmatpush1.msra.mxu0 0.0
        %2695 = vmatprep.subr.mxu0 0.0
        %2696 = vmatpush1.msra.mxu0 0.0
        %2697 = vmatprep.subr.mxu0 0.0
        %2698 = vmatpush1.msra.mxu0 0.0
        %2699 = vmatprep.subr.mxu0 0.0
        %2700 = vmatpush1.msra.mxu0 0.0
        %2701 = vmatprep.subr.mxu0 0.0
        %2702 = vmatpush1.msra.mxu0 0.0
        %2703 = vmatprep.subr.mxu0 0.0
        %2704 = vmatpush1.msra.mxu0 0.0
        %2705 = vmatprep.subr.mxu0 0.0
        %2706 = vmatpush1.msra.mxu0 0.0
        %2707 = vmatprep.subr.mxu0 0.0
        %2708 = vmatpush1.msra.mxu0 0.0
        %2709 = vmatprep.subr.mxu0 0.0
        %2710 = vmatpush1.msra.mxu0 0.0
        %2711 = vmatprep.subr.mxu0 0.0
        %2712 = vmatpush1.msra.mxu0 0.0
        %2713 = vmatprep.subr.mxu0 0.0
        %2714 = vmatpush1.msra.mxu0 0.0
        %2715 = vmatprep.subr.mxu0 0.0
        %2716 = vmatpush1.msra.mxu0 0.0
        %2717 = vmatprep.subr.mxu0 0.0
        %2718 = vmatpush1.msra.mxu0 0.0
        %2719 = vmatprep.subr.mxu0 0.0
        %2720 = vmatpush1.msra.mxu0 0.0
        %2721 = vmatprep.subr.mxu0 0.0
        %2722 = vmatpush1.msra.mxu0 0.0
        %2723 = vmatprep.subr.mxu0 0.0
        %2724 = vmatpush1.msra.mxu0 0.0
        %2725 = vmatprep.subr.mxu0 0.0
        %2726 = vmatpush1.msra.mxu0 0.0
        %2727 = vmatprep.subr.mxu0 0.0
        %2728 = vmatpush1.msra.mxu0 0.0
        %2729 = vmatprep.subr.mxu0 0.0
        %2730 = vmatpush1.msra.mxu0 0.0
        %2731 = vmatprep.subr.mxu0 0.0
        %2732 = vmatpush1.msra.mxu0 0.0
        %2733 = vmatprep.subr.mxu0 0.0
        %2734 = vmatpush1.msra.mxu0 0.0
        %2735 = vmatprep.subr.mxu0 0.0
        %2736 = vmatpush1.msra.mxu0 0.0
        %2737 = vmatprep.subr.mxu0 0.0
        %2738 = vmatpush1.msra.mxu0 0.0
        %2739 = vmatprep.subr.mxu0 0.0
        %2740 = vmatpush1.msra.mxu0 0.0
        %2741 = vmatprep.mubr.f32.mxu0 0.0
        %2742 = vmatmul.mubr.f32.gmra.mrb[0].mxu0 %v2675
        %v2743 = vpop.f32.mrb[0].mxu0
        %v2744 = vadd.f32 0.0, %v2743
        %v2745 = vpop.f32.mrb[0].mxu0
        %2746 = vdwg.mxu0
        %2748 = vrot.lane.b32.xlu0 %v2744, 24
        %v2749 = vpop.permute.xlu0 %2748
        %2751 = vst.msk [vmem:[#allocation4] sm:$0xff] %vm1585, %v2749
        %v2752 = vld [vmem:[#allocation4] sm:$0xff]
        %v2753 = vld [vmem:[%s714] sm:$0xff]
        %v2754 = vld [vmem:[%s714 + $0x8] sm:$0xff]
        %v2755 = vld [vmem:[%s714 + $0x10] sm:$0xff]
        %v2756 = vld [vmem:[%s714 + $0x18] sm:$0xff]
        %v2757 = vld [vmem:[%s717] sm:$0x1]
        %v2759 = vlaneseq
        %v2760 = vshrl.u32 %v2759, 7
        %v2761 = vsub.s32 0, %v2760
        %v2762 = vrot.slane %v2757, %v2761
        %v2765 = vsel %vm764, %v2752, 0
        %2767 = vmatprep.subr.mxu0 0.0
        %2768 = vmatpush1.msra.mxu0 %v2753
        %2769 = vmatprep.subr.mxu0 0.0
        %2770 = vmatpush1.msra.mxu0 %v2754
        %2771 = vmatprep.subr.mxu0 0.0
        %2772 = vmatpush1.msra.mxu0 %v2755
        %2773 = vmatprep.subr.mxu0 0.0
        %2774 = vmatpush1.msra.mxu0 %v2756
        %2775 = vmatprep.subr.mxu0 0.0
        %2776 = vmatpush1.msra.mxu0 0.0
        %2777 = vmatprep.subr.mxu0 0.0
        %2778 = vmatpush1.msra.mxu0 0.0
        %2779 = vmatprep.subr.mxu0 0.0
        %2780 = vmatpush1.msra.mxu0 0.0
        %2781 = vmatprep.subr.mxu0 0.0
        %2782 = vmatpush1.msra.mxu0 0.0
        %2783 = vmatprep.subr.mxu0 0.0
        %2784 = vmatpush1.msra.mxu0 0.0
        %2785 = vmatprep.subr.mxu0 0.0
        %2786 = vmatpush1.msra.mxu0 0.0
        %2787 = vmatprep.subr.mxu0 0.0
        %2788 = vmatpush1.msra.mxu0 0.0
        %2789 = vmatprep.subr.mxu0 0.0
        %2790 = vmatpush1.msra.mxu0 0.0
        %2791 = vmatprep.subr.mxu0 0.0
        %2792 = vmatpush1.msra.mxu0 0.0
        %2793 = vmatprep.subr.mxu0 0.0
        %2794 = vmatpush1.msra.mxu0 0.0
        %2795 = vmatprep.subr.mxu0 0.0
        %2796 = vmatpush1.msra.mxu0 0.0
        %2797 = vmatprep.subr.mxu0 0.0
        %2798 = vmatpush1.msra.mxu0 0.0
        %2799 = vmatprep.subr.mxu0 0.0
        %2800 = vmatpush1.msra.mxu0 0.0
        %2801 = vmatprep.subr.mxu0 0.0
        %2802 = vmatpush1.msra.mxu0 0.0
        %2803 = vmatprep.subr.mxu0 0.0
        %2804 = vmatpush1.msra.mxu0 0.0
        %2805 = vmatprep.subr.mxu0 0.0
        %2806 = vmatpush1.msra.mxu0 0.0
        %2807 = vmatprep.subr.mxu0 0.0
        %2808 = vmatpush1.msra.mxu0 0.0
        %2809 = vmatprep.subr.mxu0 0.0
        %2810 = vmatpush1.msra.mxu0 0.0
        %2811 = vmatprep.subr.mxu0 0.0
        %2812 = vmatpush1.msra.mxu0 0.0
        %2813 = vmatprep.subr.mxu0 0.0
        %2814 = vmatpush1.msra.mxu0 0.0
        %2815 = vmatprep.subr.mxu0 0.0
        %2816 = vmatpush1.msra.mxu0 0.0
        %2817 = vmatprep.subr.mxu0 0.0
        %2818 = vmatpush1.msra.mxu0 0.0
        %2819 = vmatprep.subr.mxu0 0.0
        %2820 = vmatpush1.msra.mxu0 0.0
        %2821 = vmatprep.subr.mxu0 0.0
        %2822 = vmatpush1.msra.mxu0 0.0
        %2823 = vmatprep.subr.mxu0 0.0
        %2824 = vmatpush1.msra.mxu0 0.0
        %2825 = vmatprep.subr.mxu0 0.0
        %2826 = vmatpush1.msra.mxu0 0.0
        %2827 = vmatprep.subr.mxu0 0.0
        %2828 = vmatpush1.msra.mxu0 0.0
        %2829 = vmatprep.subr.mxu0 0.0
        %2830 = vmatpush1.msra.mxu0 0.0
        %2831 = vmatprep.mubr.f32.mxu0 0.0
        %2832 = vmatmul.mubr.f32.gmra.mrb[0].mxu0 %v2765
        %v2833 = vpop.f32.mrb[0].mxu0
        %v2834 = vadd.f32 %v2762, %v2833
        %v2835 = vpop.f32.mrb[0].mxu0
        %2836 = vdwg.mxu0
        %v2837 = vld [vmem:[%s1933] sm:$0xff]
        %v2838 = vadd.f32 %v2837, %v2834
        %2839 = vst.msk [vmem:[%s1933] sm:$0xff] %vm764, %v2838
        %v2840 = vld [vmem:[%s1933] sm:$0xff]
        %v2841 = vld [vmem:[%s720] sm:$0x1]
        %v2842 = vld [vmem:[%s723] sm:$0x1]
        %v2843 = vsel %vm764, %v2840, 0.0
        %2844 = vadd.xlane.f32.xlu0 %v2843
        %v2845 = vpop.xlane.xlu0 %2844
        %v2846 = vmul.f32 %v2845, %v768
        %v2847 = vsub.f32 %v2840, %v2846
        %v2848 = vmul.f32 %v2847, %v2847
        %v2849 = vsel %vm764, %v2848, 0.0
        %2850 = vadd.xlane.f32.xlu0 %v2849
        %v2851 = vpop.xlane.xlu0 %2850
        %v2852 = vmul.f32 %v2851, %v775
        %v2854 = vlaneseq
        %v2855 = vshrl.u32 %v2854, 7
        %v2856 = vsub.s32 0, %v2855
        %v2857 = vrot.slane %v2841, %v2856
        %v2859 = vmul.f32 %v2857, %v2847
        %v2860 = vrsqrt.pop %v2852
        %v2861 = vmul.f32 %v2852, %v2860
        %vm2862 = vcmp.eq.f32.partialorder %v2852, inf
        %v2863 = vsel %vm2862, %v2852, %v2861
        %vm2864 = vcmp.eq.f32.partialorder %v2852, 0.0
        %v2865 = vand.u32 %v2852, 2147483648
        %v2866 = vsel %vm2864, %v2865, %v2863
        %v2867 = vadd.f32 %v2866, 1e-06
        %v2868 = vrcp.pop %v2867
        %v2869 = vmul.f32 %v2859, %v2868
        %v2871 = vlaneseq
        %v2872 = vshrl.u32 %v2871, 7
        %v2873 = vsub.s32 0, %v2872
        %v2874 = vrot.slane %v2842, %v2873
        %v2876 = vadd.f32 %v2869, %v2874
        %v2877 = vld [vmem:[%s728] sm:$0xff]
        %v2878 = vld [vmem:[%s728 + $0x8] sm:$0xff]
        %v2879 = vld [vmem:[%s728 + $0x10] sm:$0xff]
        %v2880 = vld [vmem:[%s728 + $0x18] sm:$0xff]
        %v2881 = vld [vmem:[%s731] sm:$0x1]
        %v2883 = vlaneseq
        %v2884 = vshrl.u32 %v2883, 7
        %v2885 = vsub.s32 0, %v2884
        %v2886 = vrot.slane %v2881, %v2885
        %v2889 = vsel %vm764, %v2876, 0
        %2891 = vmatprep.subr.mxu0 0.0
        %2892 = vmatpush1.msra.mxu0 %v2877
        %2893 = vmatprep.subr.mxu0 0.0
        %2894 = vmatpush1.msra.mxu0 %v2878
        %2895 = vmatprep.subr.mxu0 0.0
        %2896 = vmatpush1.msra.mxu0 %v2879
        %2897 = vmatprep.subr.mxu0 0.0
        %2898 = vmatpush1.msra.mxu0 %v2880
        %2899 = vmatprep.subr.mxu0 0.0
        %2900 = vmatpush1.msra.mxu0 0.0
        %2901 = vmatprep.subr.mxu0 0.0
        %2902 = vmatpush1.msra.mxu0 0.0
        %2903 = vmatprep.subr.mxu0 0.0
        %2904 = vmatpush1.msra.mxu0 0.0
        %2905 = vmatprep.subr.mxu0 0.0
        %2906 = vmatpush1.msra.mxu0 0.0
        %2907 = vmatprep.subr.mxu0 0.0
        %2908 = vmatpush1.msra.mxu0 0.0
        %2909 = vmatprep.subr.mxu0 0.0
        %2910 = vmatpush1.msra.mxu0 0.0
        %2911 = vmatprep.subr.mxu0 0.0
        %2912 = vmatpush1.msra.mxu0 0.0
        %2913 = vmatprep.subr.mxu0 0.0
        %2914 = vmatpush1.msra.mxu0 0.0
        %2915 = vmatprep.subr.mxu0 0.0
        %2916 = vmatpush1.msra.mxu0 0.0
        %2917 = vmatprep.subr.mxu0 0.0
        %2918 = vmatpush1.msra.mxu0 0.0
        %2919 = vmatprep.subr.mxu0 0.0
        %2920 = vmatpush1.msra.mxu0 0.0
        %2921 = vmatprep.subr.mxu0 0.0
        %2922 = vmatpush1.msra.mxu0 0.0
        %2923 = vmatprep.subr.mxu0 0.0
        %2924 = vmatpush1.msra.mxu0 0.0
        %2925 = vmatprep.subr.mxu0 0.0
        %2926 = vmatpush1.msra.mxu0 0.0
        %2927 = vmatprep.subr.mxu0 0.0
        %2928 = vmatpush1.msra.mxu0 0.0
        %2929 = vmatprep.subr.mxu0 0.0
        %2930 = vmatpush1.msra.mxu0 0.0
        %2931 = vmatprep.subr.mxu0 0.0
        %2932 = vmatpush1.msra.mxu0 0.0
        %2933 = vmatprep.subr.mxu0 0.0
        %2934 = vmatpush1.msra.mxu0 0.0
        %2935 = vmatprep.subr.mxu0 0.0
        %2936 = vmatpush1.msra.mxu0 0.0
        %2937 = vmatprep.subr.mxu0 0.0
        %2938 = vmatpush1.msra.mxu0 0.0
        %2939 = vmatprep.subr.mxu0 0.0
        %2940 = vmatpush1.msra.mxu0 0.0
        %2941 = vmatprep.subr.mxu0 0.0
        %2942 = vmatpush1.msra.mxu0 0.0
        %2943 = vmatprep.subr.mxu0 0.0
        %2944 = vmatpush1.msra.mxu0 0.0
        %2945 = vmatprep.subr.mxu0 0.0
        %2946 = vmatpush1.msra.mxu0 0.0
        %2947 = vmatprep.subr.mxu0 0.0
        %2948 = vmatpush1.msra.mxu0 0.0
        %2949 = vmatprep.subr.mxu0 0.0
        %2950 = vmatpush1.msra.mxu0 0.0
        %2951 = vmatprep.subr.mxu0 0.0
        %2952 = vmatpush1.msra.mxu0 0.0
        %2953 = vmatprep.subr.mxu0 0.0
        %2954 = vmatpush1.msra.mxu0 0.0
        %2955 = vmatprep.mubr.f32.mxu0 0.0
        %2956 = vmatmul.mubr.f32.gmra.mrb[0].mxu0 %v2889
        %v2957 = vpop.f32.mrb[0].mxu0
        %v2958 = vadd.f32 %v2886, %v2957
        %v2959 = vpop.f32.mrb[0].mxu0
        %2960 = vdwg.mxu0
        %v2961 = vmax.f32 %v2958, 0.0
        %v2962 = vld [vmem:[%s736] sm:$0xff]
        %v2963 = vld [vmem:[%s736 + $0x8] sm:$0xff]
        %v2964 = vld [vmem:[%s736 + $0x10] sm:$0xff]
        %v2965 = vld [vmem:[%s736 + $0x18] sm:$0xff]
        %v2966 = vld [vmem:[%s736 + $0x20] sm:$0xff]
        %v2967 = vld [vmem:[%s736 + $0x28] sm:$0xff]
        %v2968 = vld [vmem:[%s736 + $0x30] sm:$0xff]
        %v2969 = vld [vmem:[%s736 + $0x38] sm:$0xff]
        %v2971 = vsel %vm1805, %v2961, 0
        %2973 = vmatprep.subr.mxu0 0.0
        %2974 = vmatpush1.msra.mxu0 %v2962
        %2975 = vmatprep.subr.mxu0 0.0
        %2976 = vmatpush1.msra.mxu0 %v2963
        %2977 = vmatprep.subr.mxu0 0.0
        %2978 = vmatpush1.msra.mxu0 %v2964
        %2979 = vmatprep.subr.mxu0 0.0
        %2980 = vmatpush1.msra.mxu0 %v2965
        %2981 = vmatprep.subr.mxu0 0.0
        %2982 = vmatpush1.msra.mxu0 %v2966
        %2983 = vmatprep.subr.mxu0 0.0
        %2984 = vmatpush1.msra.mxu0 %v2967
        %2985 = vmatprep.subr.mxu0 0.0
        %2986 = vmatpush1.msra.mxu0 %v2968
        %2987 = vmatprep.subr.mxu0 0.0
        %2988 = vmatpush1.msra.mxu0 %v2969
        %2989 = vmatprep.subr.mxu0 0.0
        %2990 = vmatpush1.msra.mxu0 0.0
        %2991 = vmatprep.subr.mxu0 0.0
        %2992 = vmatpush1.msra.mxu0 0.0
        %2993 = vmatprep.subr.mxu0 0.0
        %2994 = vmatpush1.msra.mxu0 0.0
        %2995 = vmatprep.subr.mxu0 0.0
        %2996 = vmatpush1.msra.mxu0 0.0
        %2997 = vmatprep.subr.mxu0 0.0
        %2998 = vmatpush1.msra.mxu0 0.0
        %2999 = vmatprep.subr.mxu0 0.0
        %3000 = vmatpush1.msra.mxu0 0.0
        %3001 = vmatprep.subr.mxu0 0.0
        %3002 = vmatpush1.msra.mxu0 0.0
        %3003 = vmatprep.subr.mxu0 0.0
        %3004 = vmatpush1.msra.mxu0 0.0
        %3005 = vmatprep.subr.mxu0 0.0
        %3006 = vmatpush1.msra.mxu0 0.0
        %3007 = vmatprep.subr.mxu0 0.0
        %3008 = vmatpush1.msra.mxu0 0.0
        %3009 = vmatprep.subr.mxu0 0.0
        %3010 = vmatpush1.msra.mxu0 0.0
        %3011 = vmatprep.subr.mxu0 0.0
        %3012 = vmatpush1.msra.mxu0 0.0
        %3013 = vmatprep.subr.mxu0 0.0
        %3014 = vmatpush1.msra.mxu0 0.0
        %3015 = vmatprep.subr.mxu0 0.0
        %3016 = vmatpush1.msra.mxu0 0.0
        %3017 = vmatprep.subr.mxu0 0.0
        %3018 = vmatpush1.msra.mxu0 0.0
        %3019 = vmatprep.subr.mxu0 0.0
        %3020 = vmatpush1.msra.mxu0 0.0
        %3021 = vmatprep.subr.mxu0 0.0
        %3022 = vmatpush1.msra.mxu0 0.0
        %3023 = vmatprep.subr.mxu0 0.0
        %3024 = vmatpush1.msra.mxu0 0.0
        %3025 = vmatprep.subr.mxu0 0.0
        %3026 = vmatpush1.msra.mxu0 0.0
        %3027 = vmatprep.subr.mxu0 0.0
        %3028 = vmatpush1.msra.mxu0 0.0
        %3029 = vmatprep.subr.mxu0 0.0
        %3030 = vmatpush1.msra.mxu0 0.0
        %3031 = vmatprep.subr.mxu0 0.0
        %3032 = vmatpush1.msra.mxu0 0.0
        %3033 = vmatprep.subr.mxu0 0.0
        %3034 = vmatpush1.msra.mxu0 0.0
        %3035 = vmatprep.subr.mxu0 0.0
        %3036 = vmatpush1.msra.mxu0 0.0
        %3037 = vmatprep.mubr.f32.mxu0 0.0
        %3038 = vmatmul.mubr.f32.gmra.mrb[0].mxu0 %v2971
        %v3039 = vpop.f32.mrb[0].mxu0
        %v3040 = vadd.f32 0.0, %v3039
        %v3041 = vpop.f32.mrb[0].mxu0
        %3042 = vdwg.mxu0
        %v3043 = vadd.f32 %v2840, %v3040
        %v3044 = vld [vmem:[%s739] sm:$0x1]
        %v3046 = vlaneseq
        %v3047 = vshrl.u32 %v3046, 7
        %v3048 = vsub.s32 0, %v3047
        %v3049 = vrot.slane %v3044, %v3048
        %v3051 = vadd.f32 %v3043, %v3049
        %3052 = vst.msk [vmem:[%s1933] sm:$0xff] %vm764, %v3051
        // Predicated region
        $region97: #{tpu_custom_call.1} parent=83 // pred_check
          %p3053 = pneg %p1889
        $region98: #{tpu_custom_call.1} parent=83 // pred_check_branch
          %3055 = sbr.rel (%p3053) target = $region100
        $region99: #{tpu_custom_call.1} parent=83 // pred_region
          %v3056 = vld [vmem:[%s14] sm:$0x1]
          %v3057 = vld [vmem:[%s15] sm:$0x1]
          %v3058 = vsel %vm764, %v3051, 0.0
          %3059 = vadd.xlane.f32.xlu0 %v3058
          %v3060 = vpop.xlane.xlu0 %3059
          %v3061 = vmul.f32 %v3060, %v768
          %v3062 = vsub.f32 %v3051, %v3061
          %v3063 = vmul.f32 %v3062, %v3062
          %v3064 = vsel %vm764, %v3063, 0.0
          %3065 = vadd.xlane.f32.xlu0 %v3064
          %v3066 = vpop.xlane.xlu0 %3065
          %v3067 = vmul.f32 %v3066, %v775
          %v3069 = vlaneseq
          %v3070 = vshrl.u32 %v3069, 7
          %v3071 = vsub.s32 0, %v3070
          %v3072 = vrot.slane %v3056, %v3071
          %v3074 = vmul.f32 %v3072, %v3062
          %v3075 = vrsqrt.pop %v3067
          %v3076 = vmul.f32 %v3067, %v3075
          %vm3077 = vcmp.eq.f32.partialorder %v3067, inf
          %v3078 = vsel %vm3077, %v3067, %v3076
          %vm3079 = vcmp.eq.f32.partialorder %v3067, 0.0
          %v3080 = vand.u32 %v3067, 2147483648
          %v3081 = vsel %vm3079, %v3080, %v3078
          %v3082 = vadd.f32 %v3081, 1e-06
          %v3083 = vrcp.pop %v3082
          %v3084 = vmul.f32 %v3074, %v3083
          %v3086 = vlaneseq
          %v3087 = vshrl.u32 %v3086, 7
          %v3088 = vsub.s32 0, %v3087
          %v3089 = vrot.slane %v3057, %v3088
          %v3091 = vadd.f32 %v3084, %v3089
          %s3092 = scalar_lea.vmem [#allocation9], %s1932
          %3093 = vst.msk [vmem:[%s3092] sm:$0xff] %vm764, %v3091
        $region100: #{tpu_custom_call.1} parent=83 // pred_fallthru
          _
        // Predicated region
        $region101: #{tpu_custom_call.1} parent=83 // pred_check
          %p3094 = pneg %p465
        $region102: #{tpu_custom_call.1} parent=83 // pred_check_branch
          %3096 = sbr.rel (%p3094) target = $region104
        $region103: #{tpu_custom_call.1} parent=83 // pred_region
          %s3097 = smul.u32 2, %s33
          %s3099 = ssub.s32 256, 256
          %3100 = vsyncadd [#allocation8], %s3099
          %s3101 = smul.addr %s3097, 128
          %s3102 = scalar_lea.hbm %s16, %s3101
          %s3103 = sshll.u32 [#allocation9], 4
          %s3104 = int_to_ptr.vmem [resolvable:$true] %s3103
          %3109 = dma.vmem_to_hbm [thread:$0]  %s3104, 256, %s3102, [#allocation8], 128, 128, 8
        $region104: #{tpu_custom_call.1} parent=83 // pred_fallthru
          _
        // Predicated region
        $region105: #{tpu_custom_call.1} parent=83 // pred_check
          %p3110 = pneg %p465
        $region106: #{tpu_custom_call.1} parent=83 // pred_check_branch
          %3112 = sbr.rel (%p3110) target = $region108
        $region107: #{tpu_custom_call.1} parent=83 // pred_region
          %3113 = dma.done [#allocation8], 256
        $region108: #{tpu_custom_call.1} parent=83 // pred_fallthru
          _
      $region84: #{tpu_custom_call.1} parent=5 // pred_fallthru
        _
      %p3114 = scmp.le.s32.totalorder 2, %s24
      // Predicated region
      $region109: #{tpu_custom_call.1} parent=5 // pred_check
        %p3115 = pneg %p3114
      $region110: #{tpu_custom_call.1} parent=5 // pred_check_branch
        %3117 = sbr.rel (%p3115) target = $region112
      $region111: #{tpu_custom_call.1} parent=5 // pred_region
        %s3118 = ssub.s32 %s24, 2
      $region112: #{tpu_custom_call.1} parent=5 // pred_fallthru
        _
    $region6: #{tpu_custom_call.1} parent=1 // loop_footer
      %s28 = sadd.s32 1, %s24
    $region7: #{tpu_custom_call.1} parent=1 // loop_footer_branch
      %23 = sbr.rel target = $region3
    $region8: #{tpu_custom_call.1} parent=1 // loop_exit
      _
    %3119 = vsyncpa [#allocation7], 1
    %s3120 = scalar_lea.sflag [#allocation7], 1
    %3121 = vsyncpa %s3120, 1
    %3122 = vsyncpa [#allocation8], 1
    %s3123 = scalar_lea.sflag [#allocation8], 1
    %3124 = vsyncpa %s3123, 1

</llo_original>
